<compile_context>
chip_gen: v7x
topology: tpu7x:2x2x1
jax: 0.10.0
libtpu: 0.0.40
codegen_flags: <defaults>
</compile_context>

<pallas_src>
import jax
import jax.numpy as jnp
from jax.experimental import pallas as pl
from jax.experimental.pallas import tpu as pltpu

BETA = 0.95
THRESHOLD = 1.0
N_STEPS = 30          # n_net_inner_steps
NUM_INPUTS = 100      # sig_length
NUM_HIDDEN = 100      # num_hidden
NUM_OUTPUTS = 100     # fc2 output size (assumed == num_hidden)
F_PAD = 128           # pad feature/lane dims 100 -> 128 (full vreg lane width)
B_PAD = 8             # pad batch/sublane dim to a full (8,128) tile


def snn_kernel(x_ref, w1_ref, b1_ref, w2_ref, b2_ref,
               spk_out_ref, mem_out_ref,
               spk1_hist, cur2_hist):
    # ---- fc1 (time-invariant: single matmul, hoisted out of the loop) ----
    cur1 = jnp.dot(x_ref[...], w1_ref[...],
                   preferred_element_type=jnp.float32) + b1_ref[...]

    # ---- Phase 1: lif1 recurrence (pure VPU, serial over time) ----------
    # mem1 lives in vregs; spk1 per step is written to VMEM scratch as a
    # dense full (8,128) tile (rows t*8 .. t*8+7 of spk1_hist).
    mem1 = jnp.zeros((B_PAD, F_PAD), jnp.float32)
    for t in range(N_STEPS):
        reset1 = (mem1 - THRESHOLD > 0.0).astype(jnp.float32)
        mem1 = BETA * mem1 + cur1 - reset1 * THRESHOLD
        spk1 = (mem1 - THRESHOLD > 0.0).astype(jnp.float32)
        spk1_hist[t * B_PAD:(t + 1) * B_PAD, :] = spk1

    # ---- Phase 2: fc2 batched over ALL timesteps: one MXU matmul ---------
    # (N_STEPS*B_PAD, F_PAD) x (F_PAD, F_PAD) = (240,128) x (128,128)
    cur2_hist[...] = jnp.dot(spk1_hist[...], w2_ref[...],
                             preferred_element_type=jnp.float32) + b2_ref[...]

    # ---- Phase 3: lif2 recurrence over precomputed cur2 rows -------------
    # Per-step output stores are full (8,128) tiles (dense, unmasked).
    mem2 = jnp.zeros((B_PAD, F_PAD), jnp.float32)
    for t in range(N_STEPS):
        cur2 = cur2_hist[t * B_PAD:(t + 1) * B_PAD, :]
        reset2 = (mem2 - THRESHOLD > 0.0).astype(jnp.float32)
        mem2 = BETA * mem2 + cur2 - reset2 * THRESHOLD
        spk2 = (mem2 - THRESHOLD > 0.0).astype(jnp.float32)
        spk_out_ref[t, :, :] = spk2
        mem_out_ref[t, :, :] = mem2


def _pad2(a, rows, cols):
    return jnp.pad(a, ((0, rows - a.shape[0]), (0, cols - a.shape[1])))


def pad_params(w1, b1, w2, b2):
    """Pad weights/biases 100 -> 128 once (call at init; hoisted per review).

    w1, w2 are expected in (in, out) layout, i.e. `torch_linear.weight.T`.
    """
    w1_p = _pad2(w1, F_PAD, F_PAD)
    w2_p = _pad2(w2, F_PAD, F_PAD)
    b1_p = jnp.pad(b1, (0, F_PAD - NUM_HIDDEN)).reshape(1, F_PAD)
    b2_p = jnp.pad(b2, (0, F_PAD - NUM_OUTPUTS)).reshape(1, F_PAD)
    return w1_p, b1_p, w2_p, b2_p


def net_forward_padded(x_p, w1_p, b1_p, w2_p, b2_p):
    """Padded-shape entry point: x_p [B_PAD, F_PAD] -> two [N_STEPS, B_PAD, F_PAD]."""
    grid_spec = pltpu.PrefetchScalarGridSpec(
        num_scalar_prefetch=0,
        grid=(1,),  # single invocation; the serial time loop runs in-kernel
        in_specs=[
            pl.BlockSpec((B_PAD, F_PAD), lambda i: (0, 0)),
            pl.BlockSpec((F_PAD, F_PAD), lambda i: (0, 0)),
            pl.BlockSpec((1, F_PAD), lambda i: (0, 0)),
            pl.BlockSpec((F_PAD, F_PAD), lambda i: (0, 0)),
            pl.BlockSpec((1, F_PAD), lambda i: (0, 0)),
        ],
        out_specs=[
            pl.BlockSpec((N_STEPS, B_PAD, F_PAD), lambda i: (0, 0, 0)),
            pl.BlockSpec((N_STEPS, B_PAD, F_PAD), lambda i: (0, 0, 0)),
        ],
        scratch_shapes=[
            pltpu.VMEM((N_STEPS * B_PAD, F_PAD), jnp.float32),  # spk1 history
            pltpu.VMEM((N_STEPS * B_PAD, F_PAD), jnp.float32),  # cur2 (all steps)
        ],
    )

    return pl.pallas_call(
        snn_kernel,
        out_shape=(
            jax.ShapeDtypeStruct((N_STEPS, B_PAD, F_PAD), jnp.float32),
            jax.ShapeDtypeStruct((N_STEPS, B_PAD, F_PAD), jnp.float32),
        ),
        grid_spec=grid_spec,
        compiler_params=pltpu.CompilerParams(
            dimension_semantics=("arbitrary",),
        ),
    )(x_p, w1_p, b1_p, w2_p, b2_p)


@jax.jit
def net_forward(x, w1, b1, w2, b2):
    """Convenience wrapper: x [B, NUM_INPUTS] -> (spk_out, mem_out) [N_STEPS, B, NUM_OUTPUTS].

    Production callers with fixed weights should call pad_params() once and
    net_forward_padded() directly to skip per-call pad/slice ops.
    """
    B = x.shape[0]
    assert B <= B_PAD, "batch > 8 needs batch tiling (not required for this module)"
    w1_p, b1_p, w2_p, b2_p = pad_params(w1, b1, w2, b2)
    x_p = jnp.pad(x, ((0, B_PAD - B), (0, F_PAD - NUM_INPUTS)))
    spk_out, mem_out = net_forward_padded(x_p, w1_p, b1_p, w2_p, b2_p)
    return spk_out[:, :B, :NUM_OUTPUTS], mem_out[:, :B, :NUM_OUTPUTS]


def net_forward_ref(x, w1, b1, w2, b2):
    """Pure-JAX reference for correctness checking."""
    B = x.shape[0]

    def step(carry, _):
        mem1, mem2 = carry
        cur1 = x @ w1 + b1
        reset1 = (mem1 - THRESHOLD > 0.0).astype(jnp.float32)
        mem1 = BETA * mem1 + cur1 - reset1 * THRESHOLD
        spk1 = (mem1 - THRESHOLD > 0.0).astype(jnp.float32)
        cur2 = spk1 @ w2 + b2
        reset2 = (mem2 - THRESHOLD > 0.0).astype(jnp.float32)
        mem2 = BETA * mem2 + cur2 - reset2 * THRESHOLD
        spk2 = (mem2 - THRESHOLD > 0.0).astype(jnp.float32)
        return (mem1, mem2), (spk2, mem2)

    init = (jnp.zeros((B, NUM_HIDDEN), jnp.float32),
            jnp.zeros((B, NUM_OUTPUTS), jnp.float32))
    _, (spk_out, mem_out) = jax.lax.scan(step, init, None, length=N_STEPS)
    return spk_out, mem_out


if __name__ == "__main__":
    key = jax.random.PRNGKey(0)
    k_x, k_w1, k_b1, k_w2, k_b2 = jax.random.split(key, 5)

    B = 2
    # Deterministic parameter init mimicking nn.Linear defaults
    # (U(-1/sqrt(fan_in), +1/sqrt(fan_in))), generated directly in (in, out) layout.
    lim1 = 1.0 / jnp.sqrt(jnp.float32(NUM_INPUTS))
    lim2 = 1.0 / jnp.sqrt(jnp.float32(NUM_HIDDEN))
    w1 = jax.random.uniform(k_w1, (NUM_INPUTS, NUM_HIDDEN), jnp.float32, -lim1, lim1)
    b1 = jax.random.uniform(k_b1, (NUM_HIDDEN,), jnp.float32, -lim1, lim1)
    w2 = jax.random.uniform(k_w2, (NUM_HIDDEN, NUM_OUTPUTS), jnp.float32, -lim2, lim2)
    b2 = jax.random.uniform(k_b2, (NUM_OUTPUTS,), jnp.float32, -lim2, lim2)
    x = jax.random.uniform(k_x, (B, NUM_INPUTS), jnp.float32)

    spk_out, mem_out = net_forward(x, w1, b1, w2, b2)
    jax.block_until_ready((spk_out, mem_out))

    spk_ref, mem_ref = net_forward_ref(x, w1, b1, w2, b2)
    assert spk_out.shape == (N_STEPS, B, NUM_OUTPUTS)
    assert mem_out.shape == (N_STEPS, B, NUM_OUTPUTS)
    # mem: tolerance check; spikes: exact match away from the threshold (the
    # binary signal can legitimately flip when mem sits within f32 eps of thr).
    assert jnp.allclose(mem_out, mem_ref, atol=1e-4)
    away_from_thr = jnp.abs(mem_ref - THRESHOLD) > 1e-3
    assert bool(jnp.all(jnp.where(away_from_thr, spk_out == spk_ref, True)))

    print("KERNEL_OK")
</pallas_src>

<mosaic_0001>
module attributes {stable_mosaic.version = 11 : i64} {
  func.func @snn_kernel(%arg0: i32, %arg1: memref<8x128xf32, #tpu.memory_space<vmem>>, %arg2: memref<128x128xf32, #tpu.memory_space<vmem>>, %arg3: memref<1x128xf32, #tpu.memory_space<vmem>>, %arg4: memref<128x128xf32, #tpu.memory_space<vmem>>, %arg5: memref<1x128xf32, #tpu.memory_space<vmem>>, %arg6: memref<30x8x128xf32, #tpu.memory_space<vmem>>, %arg7: memref<30x8x128xf32, #tpu.memory_space<vmem>>, %arg8: memref<240x128xf32, #tpu.memory_space<vmem>>, %arg9: memref<240x128xf32, #tpu.memory_space<vmem>>) attributes {dimension_semantics = [#tpu.dimension_semantics<arbitrary>], iteration_bounds = array<i64: 1>, scalar_prefetch = 0 : i64, scratch_operands = 2 : i64, tpu.core_type = #tpu.core_type<tc>, window_params = [{pipeline_mode = #tpu.pipeline_mode<synchronous>, transform_indices = @transform_0, window_bounds = array<i64: 8, 128>}, {pipeline_mode = #tpu.pipeline_mode<synchronous>, transform_indices = @transform_1, window_bounds = array<i64: 128, 128>}, {pipeline_mode = #tpu.pipeline_mode<synchronous>, transform_indices = @transform_2, window_bounds = array<i64: 1, 128>}, {pipeline_mode = #tpu.pipeline_mode<synchronous>, transform_indices = @transform_3, window_bounds = array<i64: 128, 128>}, {pipeline_mode = #tpu.pipeline_mode<synchronous>, transform_indices = @transform_4, window_bounds = array<i64: 1, 128>}, {pipeline_mode = #tpu.pipeline_mode<synchronous>, transform_indices = @transform_5, window_bounds = array<i64: 30, 8, 128>}, {pipeline_mode = #tpu.pipeline_mode<synchronous>, transform_indices = @transform_6, window_bounds = array<i64: 30, 8, 128>}]} {
    %c0 = arith.constant 0 : index
    %c0_0 = arith.constant 0 : index
    %0 = vector.load %arg1[%c0, %c0_0] : memref<8x128xf32, #tpu.memory_space<vmem>>, vector<8x128xf32>
    %c0_1 = arith.constant 0 : index
    %c0_2 = arith.constant 0 : index
    %1 = vector.load %arg2[%c0_1, %c0_2] : memref<128x128xf32, #tpu.memory_space<vmem>>, vector<128x128xf32>
    %cst = arith.constant dense<0.000000e+00> : vector<8x128xf32>
    %2 = tpu.matmul %0, %1, %cst {dimension_numbers = #tpu.dot_dimension_numbers<[1], [0], [0], [1], [0, 0, 1, 1], [], []>} : vector<8x128xf32>, vector<128x128xf32>, vector<8x128xf32> -> vector<8x128xf32>
    %c0_3 = arith.constant 0 : index
    %c0_4 = arith.constant 0 : index
    %3 = vector.load %arg3[%c0_3, %c0_4] : memref<1x128xf32, #tpu.memory_space<vmem>>, vector<1x128xf32>
    %4 = vector.broadcast %3 : vector<1x128xf32> to vector<8x128xf32>
    %5 = arith.addf %2, %4 : vector<8x128xf32>
    %cst_5 = arith.constant 0.000000e+00 : f32
    %6 = vector.broadcast %cst_5 : f32 to vector<8x128xf32>
    %cst_6 = arith.constant 1.000000e+00 : f32
    %7 = vector.broadcast %cst_6 : f32 to vector<8x128xf32>
    %8 = arith.subf %6, %7 : vector<8x128xf32>
    %cst_7 = arith.constant 0.000000e+00 : f32
    %9 = vector.broadcast %cst_7 : f32 to vector<8x128xf32>
    %10 = arith.cmpf ogt, %8, %9 : vector<8x128xf32>
    %11 = arith.extui %10 : vector<8x128xi1> to vector<8x128xi32>
    %12 = arith.sitofp %11 : vector<8x128xi32> to vector<8x128xf32>
    %cst_8 = arith.constant 0.949999988 : f32
    %13 = vector.broadcast %cst_8 : f32 to vector<8x128xf32>
    %14 = arith.mulf %13, %6 : vector<8x128xf32>
    %15 = arith.addf %14, %5 : vector<8x128xf32>
    %cst_9 = arith.constant 1.000000e+00 : f32
    %16 = vector.broadcast %cst_9 : f32 to vector<8x128xf32>
    %17 = arith.mulf %12, %16 : vector<8x128xf32>
    %18 = arith.subf %15, %17 : vector<8x128xf32>
    %cst_10 = arith.constant 1.000000e+00 : f32
    %19 = vector.broadcast %cst_10 : f32 to vector<8x128xf32>
    %20 = arith.subf %18, %19 : vector<8x128xf32>
    %cst_11 = arith.constant 0.000000e+00 : f32
    %21 = vector.broadcast %cst_11 : f32 to vector<8x128xf32>
    %22 = arith.cmpf ogt, %20, %21 : vector<8x128xf32>
    %23 = arith.extui %22 : vector<8x128xi1> to vector<8x128xi32>
    %24 = arith.sitofp %23 : vector<8x128xi32> to vector<8x128xf32>
    %c0_12 = arith.constant 0 : index
    %c0_13 = arith.constant 0 : index
    %25 = vector.load %arg8[%c0_12, %c0_13] : memref<240x128xf32, #tpu.memory_space<vmem>>, vector<8x128xf32>
    tpu.vector_store %arg8[%c0_12, %c0_13], %24 {strides = array<i32>} : memref<240x128xf32, #tpu.memory_space<vmem>>, vector<8x128xf32>,
    %cst_14 = arith.constant 1.000000e+00 : f32
    %26 = vector.broadcast %cst_14 : f32 to vector<8x128xf32>
    %27 = arith.subf %18, %26 : vector<8x128xf32>
    %cst_15 = arith.constant 0.000000e+00 : f32
    %28 = vector.broadcast %cst_15 : f32 to vector<8x128xf32>
    %29 = arith.cmpf ogt, %27, %28 : vector<8x128xf32>
    %30 = arith.extui %29 : vector<8x128xi1> to vector<8x128xi32>
    %31 = arith.sitofp %30 : vector<8x128xi32> to vector<8x128xf32>
    %cst_16 = arith.constant 0.949999988 : f32
    %32 = vector.broadcast %cst_16 : f32 to vector<8x128xf32>
    %33 = arith.mulf %32, %18 : vector<8x128xf32>
    %34 = arith.addf %33, %5 : vector<8x128xf32>
    %cst_17 = arith.constant 1.000000e+00 : f32
    %35 = vector.broadcast %cst_17 : f32 to vector<8x128xf32>
    %36 = arith.mulf %31, %35 : vector<8x128xf32>
    %37 = arith.subf %34, %36 : vector<8x128xf32>
    %cst_18 = arith.constant 1.000000e+00 : f32
    %38 = vector.broadcast %cst_18 : f32 to vector<8x128xf32>
    %39 = arith.subf %37, %38 : vector<8x128xf32>
    %cst_19 = arith.constant 0.000000e+00 : f32
    %40 = vector.broadcast %cst_19 : f32 to vector<8x128xf32>
    %41 = arith.cmpf ogt, %39, %40 : vector<8x128xf32>
    %42 = arith.extui %41 : vector<8x128xi1> to vector<8x128xi32>
    %43 = arith.sitofp %42 : vector<8x128xi32> to vector<8x128xf32>
    %c8 = arith.constant 8 : index
    %c0_20 = arith.constant 0 : index
    %44 = vector.load %arg8[%c8, %c0_20] : memref<240x128xf32, #tpu.memory_space<vmem>>, vector<8x128xf32>
    tpu.vector_store %arg8[%c8, %c0_20], %43 {strides = array<i32>} : memref<240x128xf32, #tpu.memory_space<vmem>>, vector<8x128xf32>,
    %cst_21 = arith.constant 1.000000e+00 : f32
    %45 = vector.broadcast %cst_21 : f32 to vector<8x128xf32>
    %46 = arith.subf %37, %45 : vector<8x128xf32>
    %cst_22 = arith.constant 0.000000e+00 : f32
    %47 = vector.broadcast %cst_22 : f32 to vector<8x128xf32>
    %48 = arith.cmpf ogt, %46, %47 : vector<8x128xf32>
    %49 = arith.extui %48 : vector<8x128xi1> to vector<8x128xi32>
    %50 = arith.sitofp %49 : vector<8x128xi32> to vector<8x128xf32>
    %cst_23 = arith.constant 0.949999988 : f32
    %51 = vector.broadcast %cst_23 : f32 to vector<8x128xf32>
    %52 = arith.mulf %51, %37 : vector<8x128xf32>
    %53 = arith.addf %52, %5 : vector<8x128xf32>
    %cst_24 = arith.constant 1.000000e+00 : f32
    %54 = vector.broadcast %cst_24 : f32 to vector<8x128xf32>
    %55 = arith.mulf %50, %54 : vector<8x128xf32>
    %56 = arith.subf %53, %55 : vector<8x128xf32>
    %cst_25 = arith.constant 1.000000e+00 : f32
    %57 = vector.broadcast %cst_25 : f32 to vector<8x128xf32>
    %58 = arith.subf %56, %57 : vector<8x128xf32>
    %cst_26 = arith.constant 0.000000e+00 : f32
    %59 = vector.broadcast %cst_26 : f32 to vector<8x128xf32>
    %60 = arith.cmpf ogt, %58, %59 : vector<8x128xf32>
    %61 = arith.extui %60 : vector<8x128xi1> to vector<8x128xi32>
    %62 = arith.sitofp %61 : vector<8x128xi32> to vector<8x128xf32>
    %c16 = arith.constant 16 : index
    %c0_27 = arith.constant 0 : index
    %63 = vector.load %arg8[%c16, %c0_27] : memref<240x128xf32, #tpu.memory_space<vmem>>, vector<8x128xf32>
    tpu.vector_store %arg8[%c16, %c0_27], %62 {strides = array<i32>} : memref<240x128xf32, #tpu.memory_space<vmem>>, vector<8x128xf32>,
    %cst_28 = arith.constant 1.000000e+00 : f32
    %64 = vector.broadcast %cst_28 : f32 to vector<8x128xf32>
    %65 = arith.subf %56, %64 : vector<8x128xf32>
    %cst_29 = arith.constant 0.000000e+00 : f32
    %66 = vector.broadcast %cst_29 : f32 to vector<8x128xf32>
    %67 = arith.cmpf ogt, %65, %66 : vector<8x128xf32>
    %68 = arith.extui %67 : vector<8x128xi1> to vector<8x128xi32>
    %69 = arith.sitofp %68 : vector<8x128xi32> to vector<8x128xf32>
    %cst_30 = arith.constant 0.949999988 : f32
    %70 = vector.broadcast %cst_30 : f32 to vector<8x128xf32>
    %71 = arith.mulf %70, %56 : vector<8x128xf32>
    %72 = arith.addf %71, %5 : vector<8x128xf32>
    %cst_31 = arith.constant 1.000000e+00 : f32
    %73 = vector.broadcast %cst_31 : f32 to vector<8x128xf32>
    %74 = arith.mulf %69, %73 : vector<8x128xf32>
    %75 = arith.subf %72, %74 : vector<8x128xf32>
    %cst_32 = arith.constant 1.000000e+00 : f32
    %76 = vector.broadcast %cst_32 : f32 to vector<8x128xf32>
    %77 = arith.subf %75, %76 : vector<8x128xf32>
    %cst_33 = arith.constant 0.000000e+00 : f32
    %78 = vector.broadcast %cst_33 : f32 to vector<8x128xf32>
    %79 = arith.cmpf ogt, %77, %78 : vector<8x128xf32>
    %80 = arith.extui %79 : vector<8x128xi1> to vector<8x128xi32>
    %81 = arith.sitofp %80 : vector<8x128xi32> to vector<8x128xf32>
    %c24 = arith.constant 24 : index
    %c0_34 = arith.constant 0 : index
    %82 = vector.load %arg8[%c24, %c0_34] : memref<240x128xf32, #tpu.memory_space<vmem>>, vector<8x128xf32>
    tpu.vector_store %arg8[%c24, %c0_34], %81 {strides = array<i32>} : memref<240x128xf32, #tpu.memory_space<vmem>>, vector<8x128xf32>,
    %cst_35 = arith.constant 1.000000e+00 : f32
    %83 = vector.broadcast %cst_35 : f32 to vector<8x128xf32>
    %84 = arith.subf %75, %83 : vector<8x128xf32>
    %cst_36 = arith.constant 0.000000e+00 : f32
    %85 = vector.broadcast %cst_36 : f32 to vector<8x128xf32>
    %86 = arith.cmpf ogt, %84, %85 : vector<8x128xf32>
    %87 = arith.extui %86 : vector<8x128xi1> to vector<8x128xi32>
    %88 = arith.sitofp %87 : vector<8x128xi32> to vector<8x128xf32>
    %cst_37 = arith.constant 0.949999988 : f32
    %89 = vector.broadcast %cst_37 : f32 to vector<8x128xf32>
    %90 = arith.mulf %89, %75 : vector<8x128xf32>
    %91 = arith.addf %90, %5 : vector<8x128xf32>
    %cst_38 = arith.constant 1.000000e+00 : f32
    %92 = vector.broadcast %cst_38 : f32 to vector<8x128xf32>
    %93 = arith.mulf %88, %92 : vector<8x128xf32>
    %94 = arith.subf %91, %93 : vector<8x128xf32>
    %cst_39 = arith.constant 1.000000e+00 : f32
    %95 = vector.broadcast %cst_39 : f32 to vector<8x128xf32>
    %96 = arith.subf %94, %95 : vector<8x128xf32>
    %cst_40 = arith.constant 0.000000e+00 : f32
    %97 = vector.broadcast %cst_40 : f32 to vector<8x128xf32>
    %98 = arith.cmpf ogt, %96, %97 : vector<8x128xf32>
    %99 = arith.extui %98 : vector<8x128xi1> to vector<8x128xi32>
    %100 = arith.sitofp %99 : vector<8x128xi32> to vector<8x128xf32>
    %c32 = arith.constant 32 : index
    %c0_41 = arith.constant 0 : index
    %101 = vector.load %arg8[%c32, %c0_41] : memref<240x128xf32, #tpu.memory_space<vmem>>, vector<8x128xf32>
    tpu.vector_store %arg8[%c32, %c0_41], %100 {strides = array<i32>} : memref<240x128xf32, #tpu.memory_space<vmem>>, vector<8x128xf32>,
    %cst_42 = arith.constant 1.000000e+00 : f32
    %102 = vector.broadcast %cst_42 : f32 to vector<8x128xf32>
    %103 = arith.subf %94, %102 : vector<8x128xf32>
    %cst_43 = arith.constant 0.000000e+00 : f32
    %104 = vector.broadcast %cst_43 : f32 to vector<8x128xf32>
    %105 = arith.cmpf ogt, %103, %104 : vector<8x128xf32>
    %106 = arith.extui %105 : vector<8x128xi1> to vector<8x128xi32>
    %107 = arith.sitofp %106 : vector<8x128xi32> to vector<8x128xf32>
    %cst_44 = arith.constant 0.949999988 : f32
    %108 = vector.broadcast %cst_44 : f32 to vector<8x128xf32>
    %109 = arith.mulf %108, %94 : vector<8x128xf32>
    %110 = arith.addf %109, %5 : vector<8x128xf32>
    %cst_45 = arith.constant 1.000000e+00 : f32
    %111 = vector.broadcast %cst_45 : f32 to vector<8x128xf32>
    %112 = arith.mulf %107, %111 : vector<8x128xf32>
    %113 = arith.subf %110, %112 : vector<8x128xf32>
    %cst_46 = arith.constant 1.000000e+00 : f32
    %114 = vector.broadcast %cst_46 : f32 to vector<8x128xf32>
    %115 = arith.subf %113, %114 : vector<8x128xf32>
    %cst_47 = arith.constant 0.000000e+00 : f32
    %116 = vector.broadcast %cst_47 : f32 to vector<8x128xf32>
    %117 = arith.cmpf ogt, %115, %116 : vector<8x128xf32>
    %118 = arith.extui %117 : vector<8x128xi1> to vector<8x128xi32>
    %119 = arith.sitofp %118 : vector<8x128xi32> to vector<8x128xf32>
    %c40 = arith.constant 40 : index
    %c0_48 = arith.constant 0 : index
    %120 = vector.load %arg8[%c40, %c0_48] : memref<240x128xf32, #tpu.memory_space<vmem>>, vector<8x128xf32>
    tpu.vector_store %arg8[%c40, %c0_48], %119 {strides = array<i32>} : memref<240x128xf32, #tpu.memory_space<vmem>>, vector<8x128xf32>,
    %cst_49 = arith.constant 1.000000e+00 : f32
    %121 = vector.broadcast %cst_49 : f32 to vector<8x128xf32>
    %122 = arith.subf %113, %121 : vector<8x128xf32>
    %cst_50 = arith.constant 0.000000e+00 : f32
    %123 = vector.broadcast %cst_50 : f32 to vector<8x128xf32>
    %124 = arith.cmpf ogt, %122, %123 : vector<8x128xf32>
    %125 = arith.extui %124 : vector<8x128xi1> to vector<8x128xi32>
    %126 = arith.sitofp %125 : vector<8x128xi32> to vector<8x128xf32>
    %cst_51 = arith.constant 0.949999988 : f32
    %127 = vector.broadcast %cst_51 : f32 to vector<8x128xf32>
    %128 = arith.mulf %127, %113 : vector<8x128xf32>
    %129 = arith.addf %128, %5 : vector<8x128xf32>
    %cst_52 = arith.constant 1.000000e+00 : f32
    %130 = vector.broadcast %cst_52 : f32 to vector<8x128xf32>
    %131 = arith.mulf %126, %130 : vector<8x128xf32>
    %132 = arith.subf %129, %131 : vector<8x128xf32>
    %cst_53 = arith.constant 1.000000e+00 : f32
    %133 = vector.broadcast %cst_53 : f32 to vector<8x128xf32>
    %134 = arith.subf %132, %133 : vector<8x128xf32>
    %cst_54 = arith.constant 0.000000e+00 : f32
    %135 = vector.broadcast %cst_54 : f32 to vector<8x128xf32>
    %136 = arith.cmpf ogt, %134, %135 : vector<8x128xf32>
    %137 = arith.extui %136 : vector<8x128xi1> to vector<8x128xi32>
    %138 = arith.sitofp %137 : vector<8x128xi32> to vector<8x128xf32>
    %c48 = arith.constant 48 : index
    %c0_55 = arith.constant 0 : index
    %139 = vector.load %arg8[%c48, %c0_55] : memref<240x128xf32, #tpu.memory_space<vmem>>, vector<8x128xf32>
    tpu.vector_store %arg8[%c48, %c0_55], %138 {strides = array<i32>} : memref<240x128xf32, #tpu.memory_space<vmem>>, vector<8x128xf32>,
    %cst_56 = arith.constant 1.000000e+00 : f32
    %140 = vector.broadcast %cst_56 : f32 to vector<8x128xf32>
    %141 = arith.subf %132, %140 : vector<8x128xf32>
    %cst_57 = arith.constant 0.000000e+00 : f32
    %142 = vector.broadcast %cst_57 : f32 to vector<8x128xf32>
    %143 = arith.cmpf ogt, %141, %142 : vector<8x128xf32>
    %144 = arith.extui %143 : vector<8x128xi1> to vector<8x128xi32>
    %145 = arith.sitofp %144 : vector<8x128xi32> to vector<8x128xf32>
    %cst_58 = arith.constant 0.949999988 : f32
    %146 = vector.broadcast %cst_58 : f32 to vector<8x128xf32>
    %147 = arith.mulf %146, %132 : vector<8x128xf32>
    %148 = arith.addf %147, %5 : vector<8x128xf32>
    %cst_59 = arith.constant 1.000000e+00 : f32
    %149 = vector.broadcast %cst_59 : f32 to vector<8x128xf32>
    %150 = arith.mulf %145, %149 : vector<8x128xf32>
    %151 = arith.subf %148, %150 : vector<8x128xf32>
    %cst_60 = arith.constant 1.000000e+00 : f32
    %152 = vector.broadcast %cst_60 : f32 to vector<8x128xf32>
    %153 = arith.subf %151, %152 : vector<8x128xf32>
    %cst_61 = arith.constant 0.000000e+00 : f32
    %154 = vector.broadcast %cst_61 : f32 to vector<8x128xf32>
    %155 = arith.cmpf ogt, %153, %154 : vector<8x128xf32>
    %156 = arith.extui %155 : vector<8x128xi1> to vector<8x128xi32>
    %157 = arith.sitofp %156 : vector<8x128xi32> to vector<8x128xf32>
    %c56 = arith.constant 56 : index
    %c0_62 = arith.constant 0 : index
    %158 = vector.load %arg8[%c56, %c0_62] : memref<240x128xf32, #tpu.memory_space<vmem>>, vector<8x128xf32>
    tpu.vector_store %arg8[%c56, %c0_62], %157 {strides = array<i32>} : memref<240x128xf32, #tpu.memory_space<vmem>>, vector<8x128xf32>,
    %cst_63 = arith.constant 1.000000e+00 : f32
    %159 = vector.broadcast %cst_63 : f32 to vector<8x128xf32>
    %160 = arith.subf %151, %159 : vector<8x128xf32>
    %cst_64 = arith.constant 0.000000e+00 : f32
    %161 = vector.broadcast %cst_64 : f32 to vector<8x128xf32>
    %162 = arith.cmpf ogt, %160, %161 : vector<8x128xf32>
    %163 = arith.extui %162 : vector<8x128xi1> to vector<8x128xi32>
    %164 = arith.sitofp %163 : vector<8x128xi32> to vector<8x128xf32>
    %cst_65 = arith.constant 0.949999988 : f32
    %165 = vector.broadcast %cst_65 : f32 to vector<8x128xf32>
    %166 = arith.mulf %165, %151 : vector<8x128xf32>
    %167 = arith.addf %166, %5 : vector<8x128xf32>
    %cst_66 = arith.constant 1.000000e+00 : f32
    %168 = vector.broadcast %cst_66 : f32 to vector<8x128xf32>
    %169 = arith.mulf %164, %168 : vector<8x128xf32>
    %170 = arith.subf %167, %169 : vector<8x128xf32>
    %cst_67 = arith.constant 1.000000e+00 : f32
    %171 = vector.broadcast %cst_67 : f32 to vector<8x128xf32>
    %172 = arith.subf %170, %171 : vector<8x128xf32>
    %cst_68 = arith.constant 0.000000e+00 : f32
    %173 = vector.broadcast %cst_68 : f32 to vector<8x128xf32>
    %174 = arith.cmpf ogt, %172, %173 : vector<8x128xf32>
    %175 = arith.extui %174 : vector<8x128xi1> to vector<8x128xi32>
    %176 = arith.sitofp %175 : vector<8x128xi32> to vector<8x128xf32>
    %c64 = arith.constant 64 : index
    %c0_69 = arith.constant 0 : index
    %177 = vector.load %arg8[%c64, %c0_69] : memref<240x128xf32, #tpu.memory_space<vmem>>, vector<8x128xf32>
    tpu.vector_store %arg8[%c64, %c0_69], %176 {strides = array<i32>} : memref<240x128xf32, #tpu.memory_space<vmem>>, vector<8x128xf32>,
    %cst_70 = arith.constant 1.000000e+00 : f32
    %178 = vector.broadcast %cst_70 : f32 to vector<8x128xf32>
    %179 = arith.subf %170, %178 : vector<8x128xf32>
    %cst_71 = arith.constant 0.000000e+00 : f32
    %180 = vector.broadcast %cst_71 : f32 to vector<8x128xf32>
    %181 = arith.cmpf ogt, %179, %180 : vector<8x128xf32>
    %182 = arith.extui %181 : vector<8x128xi1> to vector<8x128xi32>
    %183 = arith.sitofp %182 : vector<8x128xi32> to vector<8x128xf32>
    %cst_72 = arith.constant 0.949999988 : f32
    %184 = vector.broadcast %cst_72 : f32 to vector<8x128xf32>
    %185 = arith.mulf %184, %170 : vector<8x128xf32>
    %186 = arith.addf %185, %5 : vector<8x128xf32>
    %cst_73 = arith.constant 1.000000e+00 : f32
    %187 = vector.broadcast %cst_73 : f32 to vector<8x128xf32>
    %188 = arith.mulf %183, %187 : vector<8x128xf32>
    %189 = arith.subf %186, %188 : vector<8x128xf32>
    %cst_74 = arith.constant 1.000000e+00 : f32
    %190 = vector.broadcast %cst_74 : f32 to vector<8x128xf32>
    %191 = arith.subf %189, %190 : vector<8x128xf32>
    %cst_75 = arith.constant 0.000000e+00 : f32
    %192 = vector.broadcast %cst_75 : f32 to vector<8x128xf32>
    %193 = arith.cmpf ogt, %191, %192 : vector<8x128xf32>
    %194 = arith.extui %193 : vector<8x128xi1> to vector<8x128xi32>
    %195 = arith.sitofp %194 : vector<8x128xi32> to vector<8x128xf32>
    %c72 = arith.constant 72 : index
    %c0_76 = arith.constant 0 : index
    %196 = vector.load %arg8[%c72, %c0_76] : memref<240x128xf32, #tpu.memory_space<vmem>>, vector<8x128xf32>
    tpu.vector_store %arg8[%c72, %c0_76], %195 {strides = array<i32>} : memref<240x128xf32, #tpu.memory_space<vmem>>, vector<8x128xf32>,
    %cst_77 = arith.constant 1.000000e+00 : f32
    %197 = vector.broadcast %cst_77 : f32 to vector<8x128xf32>
    %198 = arith.subf %189, %197 : vector<8x128xf32>
    %cst_78 = arith.constant 0.000000e+00 : f32
    %199 = vector.broadcast %cst_78 : f32 to vector<8x128xf32>
    %200 = arith.cmpf ogt, %198, %199 : vector<8x128xf32>
    %201 = arith.extui %200 : vector<8x128xi1> to vector<8x128xi32>
    %202 = arith.sitofp %201 : vector<8x128xi32> to vector<8x128xf32>
    %cst_79 = arith.constant 0.949999988 : f32
    %203 = vector.broadcast %cst_79 : f32 to vector<8x128xf32>
    %204 = arith.mulf %203, %189 : vector<8x128xf32>
    %205 = arith.addf %204, %5 : vector<8x128xf32>
    %cst_80 = arith.constant 1.000000e+00 : f32
    %206 = vector.broadcast %cst_80 : f32 to vector<8x128xf32>
    %207 = arith.mulf %202, %206 : vector<8x128xf32>
    %208 = arith.subf %205, %207 : vector<8x128xf32>
    %cst_81 = arith.constant 1.000000e+00 : f32
    %209 = vector.broadcast %cst_81 : f32 to vector<8x128xf32>
    %210 = arith.subf %208, %209 : vector<8x128xf32>
    %cst_82 = arith.constant 0.000000e+00 : f32
    %211 = vector.broadcast %cst_82 : f32 to vector<8x128xf32>
    %212 = arith.cmpf ogt, %210, %211 : vector<8x128xf32>
    %213 = arith.extui %212 : vector<8x128xi1> to vector<8x128xi32>
    %214 = arith.sitofp %213 : vector<8x128xi32> to vector<8x128xf32>
    %c80 = arith.constant 80 : index
    %c0_83 = arith.constant 0 : index
    %215 = vector.load %arg8[%c80, %c0_83] : memref<240x128xf32, #tpu.memory_space<vmem>>, vector<8x128xf32>
    tpu.vector_store %arg8[%c80, %c0_83], %214 {strides = array<i32>} : memref<240x128xf32, #tpu.memory_space<vmem>>, vector<8x128xf32>,
    %cst_84 = arith.constant 1.000000e+00 : f32
    %216 = vector.broadcast %cst_84 : f32 to vector<8x128xf32>
    %217 = arith.subf %208, %216 : vector<8x128xf32>
    %cst_85 = arith.constant 0.000000e+00 : f32
    %218 = vector.broadcast %cst_85 : f32 to vector<8x128xf32>
    %219 = arith.cmpf ogt, %217, %218 : vector<8x128xf32>
    %220 = arith.extui %219 : vector<8x128xi1> to vector<8x128xi32>
    %221 = arith.sitofp %220 : vector<8x128xi32> to vector<8x128xf32>
    %cst_86 = arith.constant 0.949999988 : f32
    %222 = vector.broadcast %cst_86 : f32 to vector<8x128xf32>
    %223 = arith.mulf %222, %208 : vector<8x128xf32>
    %224 = arith.addf %223, %5 : vector<8x128xf32>
    %cst_87 = arith.constant 1.000000e+00 : f32
    %225 = vector.broadcast %cst_87 : f32 to vector<8x128xf32>
    %226 = arith.mulf %221, %225 : vector<8x128xf32>
    %227 = arith.subf %224, %226 : vector<8x128xf32>
    %cst_88 = arith.constant 1.000000e+00 : f32
    %228 = vector.broadcast %cst_88 : f32 to vector<8x128xf32>
    %229 = arith.subf %227, %228 : vector<8x128xf32>
    %cst_89 = arith.constant 0.000000e+00 : f32
    %230 = vector.broadcast %cst_89 : f32 to vector<8x128xf32>
    %231 = arith.cmpf ogt, %229, %230 : vector<8x128xf32>
    %232 = arith.extui %231 : vector<8x128xi1> to vector<8x128xi32>
    %233 = arith.sitofp %232 : vector<8x128xi32> to vector<8x128xf32>
    %c88 = arith.constant 88 : index
    %c0_90 = arith.constant 0 : index
    %234 = vector.load %arg8[%c88, %c0_90] : memref<240x128xf32, #tpu.memory_space<vmem>>, vector<8x128xf32>
    tpu.vector_store %arg8[%c88, %c0_90], %233 {strides = array<i32>} : memref<240x128xf32, #tpu.memory_space<vmem>>, vector<8x128xf32>,
    %cst_91 = arith.constant 1.000000e+00 : f32
    %235 = vector.broadcast %cst_91 : f32 to vector<8x128xf32>
    %236 = arith.subf %227, %235 : vector<8x128xf32>
    %cst_92 = arith.constant 0.000000e+00 : f32
    %237 = vector.broadcast %cst_92 : f32 to vector<8x128xf32>
    %238 = arith.cmpf ogt, %236, %237 : vector<8x128xf32>
    %239 = arith.extui %238 : vector<8x128xi1> to vector<8x128xi32>
    %240 = arith.sitofp %239 : vector<8x128xi32> to vector<8x128xf32>
    %cst_93 = arith.constant 0.949999988 : f32
    %241 = vector.broadcast %cst_93 : f32 to vector<8x128xf32>
    %242 = arith.mulf %241, %227 : vector<8x128xf32>
    %243 = arith.addf %242, %5 : vector<8x128xf32>
    %cst_94 = arith.constant 1.000000e+00 : f32
    %244 = vector.broadcast %cst_94 : f32 to vector<8x128xf32>
    %245 = arith.mulf %240, %244 : vector<8x128xf32>
    %246 = arith.subf %243, %245 : vector<8x128xf32>
    %cst_95 = arith.constant 1.000000e+00 : f32
    %247 = vector.broadcast %cst_95 : f32 to vector<8x128xf32>
    %248 = arith.subf %246, %247 : vector<8x128xf32>
    %cst_96 = arith.constant 0.000000e+00 : f32
    %249 = vector.broadcast %cst_96 : f32 to vector<8x128xf32>
    %250 = arith.cmpf ogt, %248, %249 : vector<8x128xf32>
    %251 = arith.extui %250 : vector<8x128xi1> to vector<8x128xi32>
    %252 = arith.sitofp %251 : vector<8x128xi32> to vector<8x128xf32>
    %c96 = arith.constant 96 : index
    %c0_97 = arith.constant 0 : index
    %253 = vector.load %arg8[%c96, %c0_97] : memref<240x128xf32, #tpu.memory_space<vmem>>, vector<8x128xf32>
    tpu.vector_store %arg8[%c96, %c0_97], %252 {strides = array<i32>} : memref<240x128xf32, #tpu.memory_space<vmem>>, vector<8x128xf32>,
    %cst_98 = arith.constant 1.000000e+00 : f32
    %254 = vector.broadcast %cst_98 : f32 to vector<8x128xf32>
    %255 = arith.subf %246, %254 : vector<8x128xf32>
    %cst_99 = arith.constant 0.000000e+00 : f32
    %256 = vector.broadcast %cst_99 : f32 to vector<8x128xf32>
    %257 = arith.cmpf ogt, %255, %256 : vector<8x128xf32>
    %258 = arith.extui %257 : vector<8x128xi1> to vector<8x128xi32>
    %259 = arith.sitofp %258 : vector<8x128xi32> to vector<8x128xf32>
    %cst_100 = arith.constant 0.949999988 : f32
    %260 = vector.broadcast %cst_100 : f32 to vector<8x128xf32>
    %261 = arith.mulf %260, %246 : vector<8x128xf32>
    %262 = arith.addf %261, %5 : vector<8x128xf32>
    %cst_101 = arith.constant 1.000000e+00 : f32
    %263 = vector.broadcast %cst_101 : f32 to vector<8x128xf32>
    %264 = arith.mulf %259, %263 : vector<8x128xf32>
    %265 = arith.subf %262, %264 : vector<8x128xf32>
    %cst_102 = arith.constant 1.000000e+00 : f32
    %266 = vector.broadcast %cst_102 : f32 to vector<8x128xf32>
    %267 = arith.subf %265, %266 : vector<8x128xf32>
    %cst_103 = arith.constant 0.000000e+00 : f32
    %268 = vector.broadcast %cst_103 : f32 to vector<8x128xf32>
    %269 = arith.cmpf ogt, %267, %268 : vector<8x128xf32>
    %270 = arith.extui %269 : vector<8x128xi1> to vector<8x128xi32>
    %271 = arith.sitofp %270 : vector<8x128xi32> to vector<8x128xf32>
    %c104 = arith.constant 104 : index
    %c0_104 = arith.constant 0 : index
    %272 = vector.load %arg8[%c104, %c0_104] : memref<240x128xf32, #tpu.memory_space<vmem>>, vector<8x128xf32>
    tpu.vector_store %arg8[%c104, %c0_104], %271 {strides = array<i32>} : memref<240x128xf32, #tpu.memory_space<vmem>>, vector<8x128xf32>,
    %cst_105 = arith.constant 1.000000e+00 : f32
    %273 = vector.broadcast %cst_105 : f32 to vector<8x128xf32>
    %274 = arith.subf %265, %273 : vector<8x128xf32>
    %cst_106 = arith.constant 0.000000e+00 : f32
    %275 = vector.broadcast %cst_106 : f32 to vector<8x128xf32>
    %276 = arith.cmpf ogt, %274, %275 : vector<8x128xf32>
    %277 = arith.extui %276 : vector<8x128xi1> to vector<8x128xi32>
    %278 = arith.sitofp %277 : vector<8x128xi32> to vector<8x128xf32>
    %cst_107 = arith.constant 0.949999988 : f32
    %279 = vector.broadcast %cst_107 : f32 to vector<8x128xf32>
    %280 = arith.mulf %279, %265 : vector<8x128xf32>
    %281 = arith.addf %280, %5 : vector<8x128xf32>
    %cst_108 = arith.constant 1.000000e+00 : f32
    %282 = vector.broadcast %cst_108 : f32 to vector<8x128xf32>
    %283 = arith.mulf %278, %282 : vector<8x128xf32>
    %284 = arith.subf %281, %283 : vector<8x128xf32>
    %cst_109 = arith.constant 1.000000e+00 : f32
    %285 = vector.broadcast %cst_109 : f32 to vector<8x128xf32>
    %286 = arith.subf %284, %285 : vector<8x128xf32>
    %cst_110 = arith.constant 0.000000e+00 : f32
    %287 = vector.broadcast %cst_110 : f32 to vector<8x128xf32>
    %288 = arith.cmpf ogt, %286, %287 : vector<8x128xf32>
    %289 = arith.extui %288 : vector<8x128xi1> to vector<8x128xi32>
    %290 = arith.sitofp %289 : vector<8x128xi32> to vector<8x128xf32>
    %c112 = arith.constant 112 : index
    %c0_111 = arith.constant 0 : index
    %291 = vector.load %arg8[%c112, %c0_111] : memref<240x128xf32, #tpu.memory_space<vmem>>, vector<8x128xf32>
    tpu.vector_store %arg8[%c112, %c0_111], %290 {strides = array<i32>} : memref<240x128xf32, #tpu.memory_space<vmem>>, vector<8x128xf32>,
    %cst_112 = arith.constant 1.000000e+00 : f32
    %292 = vector.broadcast %cst_112 : f32 to vector<8x128xf32>
    %293 = arith.subf %284, %292 : vector<8x128xf32>
    %cst_113 = arith.constant 0.000000e+00 : f32
    %294 = vector.broadcast %cst_113 : f32 to vector<8x128xf32>
    %295 = arith.cmpf ogt, %293, %294 : vector<8x128xf32>
    %296 = arith.extui %295 : vector<8x128xi1> to vector<8x128xi32>
    %297 = arith.sitofp %296 : vector<8x128xi32> to vector<8x128xf32>
    %cst_114 = arith.constant 0.949999988 : f32
    %298 = vector.broadcast %cst_114 : f32 to vector<8x128xf32>
    %299 = arith.mulf %298, %284 : vector<8x128xf32>
    %300 = arith.addf %299, %5 : vector<8x128xf32>
    %cst_115 = arith.constant 1.000000e+00 : f32
    %301 = vector.broadcast %cst_115 : f32 to vector<8x128xf32>
    %302 = arith.mulf %297, %301 : vector<8x128xf32>
    %303 = arith.subf %300, %302 : vector<8x128xf32>
    %cst_116 = arith.constant 1.000000e+00 : f32
    %304 = vector.broadcast %cst_116 : f32 to vector<8x128xf32>
    %305 = arith.subf %303, %304 : vector<8x128xf32>
    %cst_117 = arith.constant 0.000000e+00 : f32
    %306 = vector.broadcast %cst_117 : f32 to vector<8x128xf32>
    %307 = arith.cmpf ogt, %305, %306 : vector<8x128xf32>
    %308 = arith.extui %307 : vector<8x128xi1> to vector<8x128xi32>
    %309 = arith.sitofp %308 : vector<8x128xi32> to vector<8x128xf32>
    %c120 = arith.constant 120 : index
    %c0_118 = arith.constant 0 : index
    %310 = vector.load %arg8[%c120, %c0_118] : memref<240x128xf32, #tpu.memory_space<vmem>>, vector<8x128xf32>
    tpu.vector_store %arg8[%c120, %c0_118], %309 {strides = array<i32>} : memref<240x128xf32, #tpu.memory_space<vmem>>, vector<8x128xf32>,
    %cst_119 = arith.constant 1.000000e+00 : f32
    %311 = vector.broadcast %cst_119 : f32 to vector<8x128xf32>
    %312 = arith.subf %303, %311 : vector<8x128xf32>
    %cst_120 = arith.constant 0.000000e+00 : f32
    %313 = vector.broadcast %cst_120 : f32 to vector<8x128xf32>
    %314 = arith.cmpf ogt, %312, %313 : vector<8x128xf32>
    %315 = arith.extui %314 : vector<8x128xi1> to vector<8x128xi32>
    %316 = arith.sitofp %315 : vector<8x128xi32> to vector<8x128xf32>
    %cst_121 = arith.constant 0.949999988 : f32
    %317 = vector.broadcast %cst_121 : f32 to vector<8x128xf32>
    %318 = arith.mulf %317, %303 : vector<8x128xf32>
    %319 = arith.addf %318, %5 : vector<8x128xf32>
    %cst_122 = arith.constant 1.000000e+00 : f32
    %320 = vector.broadcast %cst_122 : f32 to vector<8x128xf32>
    %321 = arith.mulf %316, %320 : vector<8x128xf32>
    %322 = arith.subf %319, %321 : vector<8x128xf32>
    %cst_123 = arith.constant 1.000000e+00 : f32
    %323 = vector.broadcast %cst_123 : f32 to vector<8x128xf32>
    %324 = arith.subf %322, %323 : vector<8x128xf32>
    %cst_124 = arith.constant 0.000000e+00 : f32
    %325 = vector.broadcast %cst_124 : f32 to vector<8x128xf32>
    %326 = arith.cmpf ogt, %324, %325 : vector<8x128xf32>
    %327 = arith.extui %326 : vector<8x128xi1> to vector<8x128xi32>
    %328 = arith.sitofp %327 : vector<8x128xi32> to vector<8x128xf32>
    %c128 = arith.constant 128 : index
    %c0_125 = arith.constant 0 : index
    %329 = vector.load %arg8[%c128, %c0_125] : memref<240x128xf32, #tpu.memory_space<vmem>>, vector<8x128xf32>
    tpu.vector_store %arg8[%c128, %c0_125], %328 {strides = array<i32>} : memref<240x128xf32, #tpu.memory_space<vmem>>, vector<8x128xf32>,
    %cst_126 = arith.constant 1.000000e+00 : f32
    %330 = vector.broadcast %cst_126 : f32 to vector<8x128xf32>
    %331 = arith.subf %322, %330 : vector<8x128xf32>
    %cst_127 = arith.constant 0.000000e+00 : f32
    %332 = vector.broadcast %cst_127 : f32 to vector<8x128xf32>
    %333 = arith.cmpf ogt, %331, %332 : vector<8x128xf32>
    %334 = arith.extui %333 : vector<8x128xi1> to vector<8x128xi32>
    %335 = arith.sitofp %334 : vector<8x128xi32> to vector<8x128xf32>
    %cst_128 = arith.constant 0.949999988 : f32
    %336 = vector.broadcast %cst_128 : f32 to vector<8x128xf32>
    %337 = arith.mulf %336, %322 : vector<8x128xf32>
    %338 = arith.addf %337, %5 : vector<8x128xf32>
    %cst_129 = arith.constant 1.000000e+00 : f32
    %339 = vector.broadcast %cst_129 : f32 to vector<8x128xf32>
    %340 = arith.mulf %335, %339 : vector<8x128xf32>
    %341 = arith.subf %338, %340 : vector<8x128xf32>
    %cst_130 = arith.constant 1.000000e+00 : f32
    %342 = vector.broadcast %cst_130 : f32 to vector<8x128xf32>
    %343 = arith.subf %341, %342 : vector<8x128xf32>
    %cst_131 = arith.constant 0.000000e+00 : f32
    %344 = vector.broadcast %cst_131 : f32 to vector<8x128xf32>
    %345 = arith.cmpf ogt, %343, %344 : vector<8x128xf32>
    %346 = arith.extui %345 : vector<8x128xi1> to vector<8x128xi32>
    %347 = arith.sitofp %346 : vector<8x128xi32> to vector<8x128xf32>
    %c136 = arith.constant 136 : index
    %c0_132 = arith.constant 0 : index
    %348 = vector.load %arg8[%c136, %c0_132] : memref<240x128xf32, #tpu.memory_space<vmem>>, vector<8x128xf32>
    tpu.vector_store %arg8[%c136, %c0_132], %347 {strides = array<i32>} : memref<240x128xf32, #tpu.memory_space<vmem>>, vector<8x128xf32>,
    %cst_133 = arith.constant 1.000000e+00 : f32
    %349 = vector.broadcast %cst_133 : f32 to vector<8x128xf32>
    %350 = arith.subf %341, %349 : vector<8x128xf32>
    %cst_134 = arith.constant 0.000000e+00 : f32
    %351 = vector.broadcast %cst_134 : f32 to vector<8x128xf32>
    %352 = arith.cmpf ogt, %350, %351 : vector<8x128xf32>
    %353 = arith.extui %352 : vector<8x128xi1> to vector<8x128xi32>
    %354 = arith.sitofp %353 : vector<8x128xi32> to vector<8x128xf32>
    %cst_135 = arith.constant 0.949999988 : f32
    %355 = vector.broadcast %cst_135 : f32 to vector<8x128xf32>
    %356 = arith.mulf %355, %341 : vector<8x128xf32>
    %357 = arith.addf %356, %5 : vector<8x128xf32>
    %cst_136 = arith.constant 1.000000e+00 : f32
    %358 = vector.broadcast %cst_136 : f32 to vector<8x128xf32>
    %359 = arith.mulf %354, %358 : vector<8x128xf32>
    %360 = arith.subf %357, %359 : vector<8x128xf32>
    %cst_137 = arith.constant 1.000000e+00 : f32
    %361 = vector.broadcast %cst_137 : f32 to vector<8x128xf32>
    %362 = arith.subf %360, %361 : vector<8x128xf32>
    %cst_138 = arith.constant 0.000000e+00 : f32
    %363 = vector.broadcast %cst_138 : f32 to vector<8x128xf32>
    %364 = arith.cmpf ogt, %362, %363 : vector<8x128xf32>
    %365 = arith.extui %364 : vector<8x128xi1> to vector<8x128xi32>
    %366 = arith.sitofp %365 : vector<8x128xi32> to vector<8x128xf32>
    %c144 = arith.constant 144 : index
    %c0_139 = arith.constant 0 : index
    %367 = vector.load %arg8[%c144, %c0_139] : memref<240x128xf32, #tpu.memory_space<vmem>>, vector<8x128xf32>
    tpu.vector_store %arg8[%c144, %c0_139], %366 {strides = array<i32>} : memref<240x128xf32, #tpu.memory_space<vmem>>, vector<8x128xf32>,
    %cst_140 = arith.constant 1.000000e+00 : f32
    %368 = vector.broadcast %cst_140 : f32 to vector<8x128xf32>
    %369 = arith.subf %360, %368 : vector<8x128xf32>
    %cst_141 = arith.constant 0.000000e+00 : f32
    %370 = vector.broadcast %cst_141 : f32 to vector<8x128xf32>
    %371 = arith.cmpf ogt, %369, %370 : vector<8x128xf32>
    %372 = arith.extui %371 : vector<8x128xi1> to vector<8x128xi32>
    %373 = arith.sitofp %372 : vector<8x128xi32> to vector<8x128xf32>
    %cst_142 = arith.constant 0.949999988 : f32
    %374 = vector.broadcast %cst_142 : f32 to vector<8x128xf32>
    %375 = arith.mulf %374, %360 : vector<8x128xf32>
    %376 = arith.addf %375, %5 : vector<8x128xf32>
    %cst_143 = arith.constant 1.000000e+00 : f32
    %377 = vector.broadcast %cst_143 : f32 to vector<8x128xf32>
    %378 = arith.mulf %373, %377 : vector<8x128xf32>
    %379 = arith.subf %376, %378 : vector<8x128xf32>
    %cst_144 = arith.constant 1.000000e+00 : f32
    %380 = vector.broadcast %cst_144 : f32 to vector<8x128xf32>
    %381 = arith.subf %379, %380 : vector<8x128xf32>
    %cst_145 = arith.constant 0.000000e+00 : f32
    %382 = vector.broadcast %cst_145 : f32 to vector<8x128xf32>
    %383 = arith.cmpf ogt, %381, %382 : vector<8x128xf32>
    %384 = arith.extui %383 : vector<8x128xi1> to vector<8x128xi32>
    %385 = arith.sitofp %384 : vector<8x128xi32> to vector<8x128xf32>
    %c152 = arith.constant 152 : index
    %c0_146 = arith.constant 0 : index
    %386 = vector.load %arg8[%c152, %c0_146] : memref<240x128xf32, #tpu.memory_space<vmem>>, vector<8x128xf32>
    tpu.vector_store %arg8[%c152, %c0_146], %385 {strides = array<i32>} : memref<240x128xf32, #tpu.memory_space<vmem>>, vector<8x128xf32>,
    %cst_147 = arith.constant 1.000000e+00 : f32
    %387 = vector.broadcast %cst_147 : f32 to vector<8x128xf32>
    %388 = arith.subf %379, %387 : vector<8x128xf32>
    %cst_148 = arith.constant 0.000000e+00 : f32
    %389 = vector.broadcast %cst_148 : f32 to vector<8x128xf32>
    %390 = arith.cmpf ogt, %388, %389 : vector<8x128xf32>
    %391 = arith.extui %390 : vector<8x128xi1> to vector<8x128xi32>
    %392 = arith.sitofp %391 : vector<8x128xi32> to vector<8x128xf32>
    %cst_149 = arith.constant 0.949999988 : f32
    %393 = vector.broadcast %cst_149 : f32 to vector<8x128xf32>
    %394 = arith.mulf %393, %379 : vector<8x128xf32>
    %395 = arith.addf %394, %5 : vector<8x128xf32>
    %cst_150 = arith.constant 1.000000e+00 : f32
    %396 = vector.broadcast %cst_150 : f32 to vector<8x128xf32>
    %397 = arith.mulf %392, %396 : vector<8x128xf32>
    %398 = arith.subf %395, %397 : vector<8x128xf32>
    %cst_151 = arith.constant 1.000000e+00 : f32
    %399 = vector.broadcast %cst_151 : f32 to vector<8x128xf32>
    %400 = arith.subf %398, %399 : vector<8x128xf32>
    %cst_152 = arith.constant 0.000000e+00 : f32
    %401 = vector.broadcast %cst_152 : f32 to vector<8x128xf32>
    %402 = arith.cmpf ogt, %400, %401 : vector<8x128xf32>
    %403 = arith.extui %402 : vector<8x128xi1> to vector<8x128xi32>
    %404 = arith.sitofp %403 : vector<8x128xi32> to vector<8x128xf32>
    %c160 = arith.constant 160 : index
    %c0_153 = arith.constant 0 : index
    %405 = vector.load %arg8[%c160, %c0_153] : memref<240x128xf32, #tpu.memory_space<vmem>>, vector<8x128xf32>
    tpu.vector_store %arg8[%c160, %c0_153], %404 {strides = array<i32>} : memref<240x128xf32, #tpu.memory_space<vmem>>, vector<8x128xf32>,
    %cst_154 = arith.constant 1.000000e+00 : f32
    %406 = vector.broadcast %cst_154 : f32 to vector<8x128xf32>
    %407 = arith.subf %398, %406 : vector<8x128xf32>
    %cst_155 = arith.constant 0.000000e+00 : f32
    %408 = vector.broadcast %cst_155 : f32 to vector<8x128xf32>
    %409 = arith.cmpf ogt, %407, %408 : vector<8x128xf32>
    %410 = arith.extui %409 : vector<8x128xi1> to vector<8x128xi32>
    %411 = arith.sitofp %410 : vector<8x128xi32> to vector<8x128xf32>
    %cst_156 = arith.constant 0.949999988 : f32
    %412 = vector.broadcast %cst_156 : f32 to vector<8x128xf32>
    %413 = arith.mulf %412, %398 : vector<8x128xf32>
    %414 = arith.addf %413, %5 : vector<8x128xf32>
    %cst_157 = arith.constant 1.000000e+00 : f32
    %415 = vector.broadcast %cst_157 : f32 to vector<8x128xf32>
    %416 = arith.mulf %411, %415 : vector<8x128xf32>
    %417 = arith.subf %414, %416 : vector<8x128xf32>
    %cst_158 = arith.constant 1.000000e+00 : f32
    %418 = vector.broadcast %cst_158 : f32 to vector<8x128xf32>
    %419 = arith.subf %417, %418 : vector<8x128xf32>
    %cst_159 = arith.constant 0.000000e+00 : f32
    %420 = vector.broadcast %cst_159 : f32 to vector<8x128xf32>
    %421 = arith.cmpf ogt, %419, %420 : vector<8x128xf32>
    %422 = arith.extui %421 : vector<8x128xi1> to vector<8x128xi32>
    %423 = arith.sitofp %422 : vector<8x128xi32> to vector<8x128xf32>
    %c168 = arith.constant 168 : index
    %c0_160 = arith.constant 0 : index
    %424 = vector.load %arg8[%c168, %c0_160] : memref<240x128xf32, #tpu.memory_space<vmem>>, vector<8x128xf32>
    tpu.vector_store %arg8[%c168, %c0_160], %423 {strides = array<i32>} : memref<240x128xf32, #tpu.memory_space<vmem>>, vector<8x128xf32>,
    %cst_161 = arith.constant 1.000000e+00 : f32
    %425 = vector.broadcast %cst_161 : f32 to vector<8x128xf32>
    %426 = arith.subf %417, %425 : vector<8x128xf32>
    %cst_162 = arith.constant 0.000000e+00 : f32
    %427 = vector.broadcast %cst_162 : f32 to vector<8x128xf32>
    %428 = arith.cmpf ogt, %426, %427 : vector<8x128xf32>
    %429 = arith.extui %428 : vector<8x128xi1> to vector<8x128xi32>
    %430 = arith.sitofp %429 : vector<8x128xi32> to vector<8x128xf32>
    %cst_163 = arith.constant 0.949999988 : f32
    %431 = vector.broadcast %cst_163 : f32 to vector<8x128xf32>
    %432 = arith.mulf %431, %417 : vector<8x128xf32>
    %433 = arith.addf %432, %5 : vector<8x128xf32>
    %cst_164 = arith.constant 1.000000e+00 : f32
    %434 = vector.broadcast %cst_164 : f32 to vector<8x128xf32>
    %435 = arith.mulf %430, %434 : vector<8x128xf32>
    %436 = arith.subf %433, %435 : vector<8x128xf32>
    %cst_165 = arith.constant 1.000000e+00 : f32
    %437 = vector.broadcast %cst_165 : f32 to vector<8x128xf32>
    %438 = arith.subf %436, %437 : vector<8x128xf32>
    %cst_166 = arith.constant 0.000000e+00 : f32
    %439 = vector.broadcast %cst_166 : f32 to vector<8x128xf32>
    %440 = arith.cmpf ogt, %438, %439 : vector<8x128xf32>
    %441 = arith.extui %440 : vector<8x128xi1> to vector<8x128xi32>
    %442 = arith.sitofp %441 : vector<8x128xi32> to vector<8x128xf32>
    %c176 = arith.constant 176 : index
    %c0_167 = arith.constant 0 : index
    %443 = vector.load %arg8[%c176, %c0_167] : memref<240x128xf32, #tpu.memory_space<vmem>>, vector<8x128xf32>
    tpu.vector_store %arg8[%c176, %c0_167], %442 {strides = array<i32>} : memref<240x128xf32, #tpu.memory_space<vmem>>, vector<8x128xf32>,
    %cst_168 = arith.constant 1.000000e+00 : f32
    %444 = vector.broadcast %cst_168 : f32 to vector<8x128xf32>
    %445 = arith.subf %436, %444 : vector<8x128xf32>
    %cst_169 = arith.constant 0.000000e+00 : f32
    %446 = vector.broadcast %cst_169 : f32 to vector<8x128xf32>
    %447 = arith.cmpf ogt, %445, %446 : vector<8x128xf32>
    %448 = arith.extui %447 : vector<8x128xi1> to vector<8x128xi32>
    %449 = arith.sitofp %448 : vector<8x128xi32> to vector<8x128xf32>
    %cst_170 = arith.constant 0.949999988 : f32
    %450 = vector.broadcast %cst_170 : f32 to vector<8x128xf32>
    %451 = arith.mulf %450, %436 : vector<8x128xf32>
    %452 = arith.addf %451, %5 : vector<8x128xf32>
    %cst_171 = arith.constant 1.000000e+00 : f32
    %453 = vector.broadcast %cst_171 : f32 to vector<8x128xf32>
    %454 = arith.mulf %449, %453 : vector<8x128xf32>
    %455 = arith.subf %452, %454 : vector<8x128xf32>
    %cst_172 = arith.constant 1.000000e+00 : f32
    %456 = vector.broadcast %cst_172 : f32 to vector<8x128xf32>
    %457 = arith.subf %455, %456 : vector<8x128xf32>
    %cst_173 = arith.constant 0.000000e+00 : f32
    %458 = vector.broadcast %cst_173 : f32 to vector<8x128xf32>
    %459 = arith.cmpf ogt, %457, %458 : vector<8x128xf32>
    %460 = arith.extui %459 : vector<8x128xi1> to vector<8x128xi32>
    %461 = arith.sitofp %460 : vector<8x128xi32> to vector<8x128xf32>
    %c184 = arith.constant 184 : index
    %c0_174 = arith.constant 0 : index
    %462 = vector.load %arg8[%c184, %c0_174] : memref<240x128xf32, #tpu.memory_space<vmem>>, vector<8x128xf32>
    tpu.vector_store %arg8[%c184, %c0_174], %461 {strides = array<i32>} : memref<240x128xf32, #tpu.memory_space<vmem>>, vector<8x128xf32>,
    %cst_175 = arith.constant 1.000000e+00 : f32
    %463 = vector.broadcast %cst_175 : f32 to vector<8x128xf32>
    %464 = arith.subf %455, %463 : vector<8x128xf32>
    %cst_176 = arith.constant 0.000000e+00 : f32
    %465 = vector.broadcast %cst_176 : f32 to vector<8x128xf32>
    %466 = arith.cmpf ogt, %464, %465 : vector<8x128xf32>
    %467 = arith.extui %466 : vector<8x128xi1> to vector<8x128xi32>
    %468 = arith.sitofp %467 : vector<8x128xi32> to vector<8x128xf32>
    %cst_177 = arith.constant 0.949999988 : f32
    %469 = vector.broadcast %cst_177 : f32 to vector<8x128xf32>
    %470 = arith.mulf %469, %455 : vector<8x128xf32>
    %471 = arith.addf %470, %5 : vector<8x128xf32>
    %cst_178 = arith.constant 1.000000e+00 : f32
    %472 = vector.broadcast %cst_178 : f32 to vector<8x128xf32>
    %473 = arith.mulf %468, %472 : vector<8x128xf32>
    %474 = arith.subf %471, %473 : vector<8x128xf32>
    %cst_179 = arith.constant 1.000000e+00 : f32
    %475 = vector.broadcast %cst_179 : f32 to vector<8x128xf32>
    %476 = arith.subf %474, %475 : vector<8x128xf32>
    %cst_180 = arith.constant 0.000000e+00 : f32
    %477 = vector.broadcast %cst_180 : f32 to vector<8x128xf32>
    %478 = arith.cmpf ogt, %476, %477 : vector<8x128xf32>
    %479 = arith.extui %478 : vector<8x128xi1> to vector<8x128xi32>
    %480 = arith.sitofp %479 : vector<8x128xi32> to vector<8x128xf32>
    %c192 = arith.constant 192 : index
    %c0_181 = arith.constant 0 : index
    %481 = vector.load %arg8[%c192, %c0_181] : memref<240x128xf32, #tpu.memory_space<vmem>>, vector<8x128xf32>
    tpu.vector_store %arg8[%c192, %c0_181], %480 {strides = array<i32>} : memref<240x128xf32, #tpu.memory_space<vmem>>, vector<8x128xf32>,
    %cst_182 = arith.constant 1.000000e+00 : f32
    %482 = vector.broadcast %cst_182 : f32 to vector<8x128xf32>
    %483 = arith.subf %474, %482 : vector<8x128xf32>
    %cst_183 = arith.constant 0.000000e+00 : f32
    %484 = vector.broadcast %cst_183 : f32 to vector<8x128xf32>
    %485 = arith.cmpf ogt, %483, %484 : vector<8x128xf32>
    %486 = arith.extui %485 : vector<8x128xi1> to vector<8x128xi32>
    %487 = arith.sitofp %486 : vector<8x128xi32> to vector<8x128xf32>
    %cst_184 = arith.constant 0.949999988 : f32
    %488 = vector.broadcast %cst_184 : f32 to vector<8x128xf32>
    %489 = arith.mulf %488, %474 : vector<8x128xf32>
    %490 = arith.addf %489, %5 : vector<8x128xf32>
    %cst_185 = arith.constant 1.000000e+00 : f32
    %491 = vector.broadcast %cst_185 : f32 to vector<8x128xf32>
    %492 = arith.mulf %487, %491 : vector<8x128xf32>
    %493 = arith.subf %490, %492 : vector<8x128xf32>
    %cst_186 = arith.constant 1.000000e+00 : f32
    %494 = vector.broadcast %cst_186 : f32 to vector<8x128xf32>
    %495 = arith.subf %493, %494 : vector<8x128xf32>
    %cst_187 = arith.constant 0.000000e+00 : f32
    %496 = vector.broadcast %cst_187 : f32 to vector<8x128xf32>
    %497 = arith.cmpf ogt, %495, %496 : vector<8x128xf32>
    %498 = arith.extui %497 : vector<8x128xi1> to vector<8x128xi32>
    %499 = arith.sitofp %498 : vector<8x128xi32> to vector<8x128xf32>
    %c200 = arith.constant 200 : index
    %c0_188 = arith.constant 0 : index
    %500 = vector.load %arg8[%c200, %c0_188] : memref<240x128xf32, #tpu.memory_space<vmem>>, vector<8x128xf32>
    tpu.vector_store %arg8[%c200, %c0_188], %499 {strides = array<i32>} : memref<240x128xf32, #tpu.memory_space<vmem>>, vector<8x128xf32>,
    %cst_189 = arith.constant 1.000000e+00 : f32
    %501 = vector.broadcast %cst_189 : f32 to vector<8x128xf32>
    %502 = arith.subf %493, %501 : vector<8x128xf32>
    %cst_190 = arith.constant 0.000000e+00 : f32
    %503 = vector.broadcast %cst_190 : f32 to vector<8x128xf32>
    %504 = arith.cmpf ogt, %502, %503 : vector<8x128xf32>
    %505 = arith.extui %504 : vector<8x128xi1> to vector<8x128xi32>
    %506 = arith.sitofp %505 : vector<8x128xi32> to vector<8x128xf32>
    %cst_191 = arith.constant 0.949999988 : f32
    %507 = vector.broadcast %cst_191 : f32 to vector<8x128xf32>
    %508 = arith.mulf %507, %493 : vector<8x128xf32>
    %509 = arith.addf %508, %5 : vector<8x128xf32>
    %cst_192 = arith.constant 1.000000e+00 : f32
    %510 = vector.broadcast %cst_192 : f32 to vector<8x128xf32>
    %511 = arith.mulf %506, %510 : vector<8x128xf32>
    %512 = arith.subf %509, %511 : vector<8x128xf32>
    %cst_193 = arith.constant 1.000000e+00 : f32
    %513 = vector.broadcast %cst_193 : f32 to vector<8x128xf32>
    %514 = arith.subf %512, %513 : vector<8x128xf32>
    %cst_194 = arith.constant 0.000000e+00 : f32
    %515 = vector.broadcast %cst_194 : f32 to vector<8x128xf32>
    %516 = arith.cmpf ogt, %514, %515 : vector<8x128xf32>
    %517 = arith.extui %516 : vector<8x128xi1> to vector<8x128xi32>
    %518 = arith.sitofp %517 : vector<8x128xi32> to vector<8x128xf32>
    %c208 = arith.constant 208 : index
    %c0_195 = arith.constant 0 : index
    %519 = vector.load %arg8[%c208, %c0_195] : memref<240x128xf32, #tpu.memory_space<vmem>>, vector<8x128xf32>
    tpu.vector_store %arg8[%c208, %c0_195], %518 {strides = array<i32>} : memref<240x128xf32, #tpu.memory_space<vmem>>, vector<8x128xf32>,
    %cst_196 = arith.constant 1.000000e+00 : f32
    %520 = vector.broadcast %cst_196 : f32 to vector<8x128xf32>
    %521 = arith.subf %512, %520 : vector<8x128xf32>
    %cst_197 = arith.constant 0.000000e+00 : f32
    %522 = vector.broadcast %cst_197 : f32 to vector<8x128xf32>
    %523 = arith.cmpf ogt, %521, %522 : vector<8x128xf32>
    %524 = arith.extui %523 : vector<8x128xi1> to vector<8x128xi32>
    %525 = arith.sitofp %524 : vector<8x128xi32> to vector<8x128xf32>
    %cst_198 = arith.constant 0.949999988 : f32
    %526 = vector.broadcast %cst_198 : f32 to vector<8x128xf32>
    %527 = arith.mulf %526, %512 : vector<8x128xf32>
    %528 = arith.addf %527, %5 : vector<8x128xf32>
    %cst_199 = arith.constant 1.000000e+00 : f32
    %529 = vector.broadcast %cst_199 : f32 to vector<8x128xf32>
    %530 = arith.mulf %525, %529 : vector<8x128xf32>
    %531 = arith.subf %528, %530 : vector<8x128xf32>
    %cst_200 = arith.constant 1.000000e+00 : f32
    %532 = vector.broadcast %cst_200 : f32 to vector<8x128xf32>
    %533 = arith.subf %531, %532 : vector<8x128xf32>
    %cst_201 = arith.constant 0.000000e+00 : f32
    %534 = vector.broadcast %cst_201 : f32 to vector<8x128xf32>
    %535 = arith.cmpf ogt, %533, %534 : vector<8x128xf32>
    %536 = arith.extui %535 : vector<8x128xi1> to vector<8x128xi32>
    %537 = arith.sitofp %536 : vector<8x128xi32> to vector<8x128xf32>
    %c216 = arith.constant 216 : index
    %c0_202 = arith.constant 0 : index
    %538 = vector.load %arg8[%c216, %c0_202] : memref<240x128xf32, #tpu.memory_space<vmem>>, vector<8x128xf32>
    tpu.vector_store %arg8[%c216, %c0_202], %537 {strides = array<i32>} : memref<240x128xf32, #tpu.memory_space<vmem>>, vector<8x128xf32>,
    %cst_203 = arith.constant 1.000000e+00 : f32
    %539 = vector.broadcast %cst_203 : f32 to vector<8x128xf32>
    %540 = arith.subf %531, %539 : vector<8x128xf32>
    %cst_204 = arith.constant 0.000000e+00 : f32
    %541 = vector.broadcast %cst_204 : f32 to vector<8x128xf32>
    %542 = arith.cmpf ogt, %540, %541 : vector<8x128xf32>
    %543 = arith.extui %542 : vector<8x128xi1> to vector<8x128xi32>
    %544 = arith.sitofp %543 : vector<8x128xi32> to vector<8x128xf32>
    %cst_205 = arith.constant 0.949999988 : f32
    %545 = vector.broadcast %cst_205 : f32 to vector<8x128xf32>
    %546 = arith.mulf %545, %531 : vector<8x128xf32>
    %547 = arith.addf %546, %5 : vector<8x128xf32>
    %cst_206 = arith.constant 1.000000e+00 : f32
    %548 = vector.broadcast %cst_206 : f32 to vector<8x128xf32>
    %549 = arith.mulf %544, %548 : vector<8x128xf32>
    %550 = arith.subf %547, %549 : vector<8x128xf32>
    %cst_207 = arith.constant 1.000000e+00 : f32
    %551 = vector.broadcast %cst_207 : f32 to vector<8x128xf32>
    %552 = arith.subf %550, %551 : vector<8x128xf32>
    %cst_208 = arith.constant 0.000000e+00 : f32
    %553 = vector.broadcast %cst_208 : f32 to vector<8x128xf32>
    %554 = arith.cmpf ogt, %552, %553 : vector<8x128xf32>
    %555 = arith.extui %554 : vector<8x128xi1> to vector<8x128xi32>
    %556 = arith.sitofp %555 : vector<8x128xi32> to vector<8x128xf32>
    %c224 = arith.constant 224 : index
    %c0_209 = arith.constant 0 : index
    %557 = vector.load %arg8[%c224, %c0_209] : memref<240x128xf32, #tpu.memory_space<vmem>>, vector<8x128xf32>
    tpu.vector_store %arg8[%c224, %c0_209], %556 {strides = array<i32>} : memref<240x128xf32, #tpu.memory_space<vmem>>, vector<8x128xf32>,
    %cst_210 = arith.constant 1.000000e+00 : f32
    %558 = vector.broadcast %cst_210 : f32 to vector<8x128xf32>
    %559 = arith.subf %550, %558 : vector<8x128xf32>
    %cst_211 = arith.constant 0.000000e+00 : f32
    %560 = vector.broadcast %cst_211 : f32 to vector<8x128xf32>
    %561 = arith.cmpf ogt, %559, %560 : vector<8x128xf32>
    %562 = arith.extui %561 : vector<8x128xi1> to vector<8x128xi32>
    %563 = arith.sitofp %562 : vector<8x128xi32> to vector<8x128xf32>
    %cst_212 = arith.constant 0.949999988 : f32
    %564 = vector.broadcast %cst_212 : f32 to vector<8x128xf32>
    %565 = arith.mulf %564, %550 : vector<8x128xf32>
    %566 = arith.addf %565, %5 : vector<8x128xf32>
    %cst_213 = arith.constant 1.000000e+00 : f32
    %567 = vector.broadcast %cst_213 : f32 to vector<8x128xf32>
    %568 = arith.mulf %563, %567 : vector<8x128xf32>
    %569 = arith.subf %566, %568 : vector<8x128xf32>
    %cst_214 = arith.constant 1.000000e+00 : f32
    %570 = vector.broadcast %cst_214 : f32 to vector<8x128xf32>
    %571 = arith.subf %569, %570 : vector<8x128xf32>
    %cst_215 = arith.constant 0.000000e+00 : f32
    %572 = vector.broadcast %cst_215 : f32 to vector<8x128xf32>
    %573 = arith.cmpf ogt, %571, %572 : vector<8x128xf32>
    %574 = arith.extui %573 : vector<8x128xi1> to vector<8x128xi32>
    %575 = arith.sitofp %574 : vector<8x128xi32> to vector<8x128xf32>
    %c232 = arith.constant 232 : index
    %c0_216 = arith.constant 0 : index
    %576 = vector.load %arg8[%c232, %c0_216] : memref<240x128xf32, #tpu.memory_space<vmem>>, vector<8x128xf32>
    tpu.vector_store %arg8[%c232, %c0_216], %575 {strides = array<i32>} : memref<240x128xf32, #tpu.memory_space<vmem>>, vector<8x128xf32>,
    %c0_217 = arith.constant 0 : index
    %c0_218 = arith.constant 0 : index
    %577 = vector.load %arg8[%c0_217, %c0_218] : memref<240x128xf32, #tpu.memory_space<vmem>>, vector<240x128xf32>
    %c0_219 = arith.constant 0 : index
    %c0_220 = arith.constant 0 : index
    %578 = vector.load %arg4[%c0_219, %c0_220] : memref<128x128xf32, #tpu.memory_space<vmem>>, vector<128x128xf32>
    %cst_221 = arith.constant dense<0.000000e+00> : vector<240x128xf32>
    %579 = tpu.matmul %577, %578, %cst_221 {dimension_numbers = #tpu.dot_dimension_numbers<[1], [0], [0], [1], [0, 0, 1, 1], [], []>} : vector<240x128xf32>, vector<128x128xf32>, vector<240x128xf32> -> vector<240x128xf32>
    %c0_222 = arith.constant 0 : index
    %c0_223 = arith.constant 0 : index
    %580 = vector.load %arg5[%c0_222, %c0_223] : memref<1x128xf32, #tpu.memory_space<vmem>>, vector<1x128xf32>
    %581 = vector.broadcast %580 : vector<1x128xf32> to vector<240x128xf32>
    %582 = arith.addf %579, %581 : vector<240x128xf32>
    %c0_224 = arith.constant 0 : index
    %c0_225 = arith.constant 0 : index
    %583 = vector.load %arg9[%c0_224, %c0_225] : memref<240x128xf32, #tpu.memory_space<vmem>>, vector<240x128xf32>
    tpu.vector_store %arg9[%c0_224, %c0_225], %582 {strides = array<i32>} : memref<240x128xf32, #tpu.memory_space<vmem>>, vector<240x128xf32>,
    %cst_226 = arith.constant 0.000000e+00 : f32
    %584 = vector.broadcast %cst_226 : f32 to vector<8x128xf32>
    %c0_227 = arith.constant 0 : index
    %c0_228 = arith.constant 0 : index
    %585 = vector.load %arg9[%c0_227, %c0_228] : memref<240x128xf32, #tpu.memory_space<vmem>>, vector<8x128xf32>
    %cst_229 = arith.constant 1.000000e+00 : f32
    %586 = vector.broadcast %cst_229 : f32 to vector<8x128xf32>
    %587 = arith.subf %584, %586 : vector<8x128xf32>
    %cst_230 = arith.constant 0.000000e+00 : f32
    %588 = vector.broadcast %cst_230 : f32 to vector<8x128xf32>
    %589 = arith.cmpf ogt, %587, %588 : vector<8x128xf32>
    %590 = arith.extui %589 : vector<8x128xi1> to vector<8x128xi32>
    %591 = arith.sitofp %590 : vector<8x128xi32> to vector<8x128xf32>
    %cst_231 = arith.constant 0.949999988 : f32
    %592 = vector.broadcast %cst_231 : f32 to vector<8x128xf32>
    %593 = arith.mulf %592, %584 : vector<8x128xf32>
    %594 = arith.addf %593, %585 : vector<8x128xf32>
    %cst_232 = arith.constant 1.000000e+00 : f32
    %595 = vector.broadcast %cst_232 : f32 to vector<8x128xf32>
    %596 = arith.mulf %591, %595 : vector<8x128xf32>
    %597 = arith.subf %594, %596 : vector<8x128xf32>
    %cst_233 = arith.constant 1.000000e+00 : f32
    %598 = vector.broadcast %cst_233 : f32 to vector<8x128xf32>
    %599 = arith.subf %597, %598 : vector<8x128xf32>
    %cst_234 = arith.constant 0.000000e+00 : f32
    %600 = vector.broadcast %cst_234 : f32 to vector<8x128xf32>
    %601 = arith.cmpf ogt, %599, %600 : vector<8x128xf32>
    %602 = arith.extui %601 : vector<8x128xi1> to vector<8x128xi32>
    %603 = arith.sitofp %602 : vector<8x128xi32> to vector<8x128xf32>
    %c0_235 = arith.constant 0 : index
    %c0_236 = arith.constant 0 : index
    %c0_237 = arith.constant 0 : index
    %604 = vector.load %arg6[%c0_235, %c0_236, %c0_237] : memref<30x8x128xf32, #tpu.memory_space<vmem>>, vector<1x8x128xf32>
    %605 = vector.shape_cast %604 : vector<1x8x128xf32> to vector<8x128xf32>
    %606 = vector.shape_cast %603 : vector<8x128xf32> to vector<1x8x128xf32>
    tpu.vector_store %arg6[%c0_235, %c0_236, %c0_237], %606 {strides = array<i32>} : memref<30x8x128xf32, #tpu.memory_space<vmem>>, vector<1x8x128xf32>,
    %c0_238 = arith.constant 0 : index
    %c0_239 = arith.constant 0 : index
    %c0_240 = arith.constant 0 : index
    %607 = vector.load %arg7[%c0_238, %c0_239, %c0_240] : memref<30x8x128xf32, #tpu.memory_space<vmem>>, vector<1x8x128xf32>
    %608 = vector.shape_cast %607 : vector<1x8x128xf32> to vector<8x128xf32>
    %609 = vector.shape_cast %597 : vector<8x128xf32> to vector<1x8x128xf32>
    tpu.vector_store %arg7[%c0_238, %c0_239, %c0_240], %609 {strides = array<i32>} : memref<30x8x128xf32, #tpu.memory_space<vmem>>, vector<1x8x128xf32>,
    %c8_241 = arith.constant 8 : index
    %c0_242 = arith.constant 0 : index
    %610 = vector.load %arg9[%c8_241, %c0_242] : memref<240x128xf32, #tpu.memory_space<vmem>>, vector<8x128xf32>
    %cst_243 = arith.constant 1.000000e+00 : f32
    %611 = vector.broadcast %cst_243 : f32 to vector<8x128xf32>
    %612 = arith.subf %597, %611 : vector<8x128xf32>
    %cst_244 = arith.constant 0.000000e+00 : f32
    %613 = vector.broadcast %cst_244 : f32 to vector<8x128xf32>
    %614 = arith.cmpf ogt, %612, %613 : vector<8x128xf32>
    %615 = arith.extui %614 : vector<8x128xi1> to vector<8x128xi32>
    %616 = arith.sitofp %615 : vector<8x128xi32> to vector<8x128xf32>
    %cst_245 = arith.constant 0.949999988 : f32
    %617 = vector.broadcast %cst_245 : f32 to vector<8x128xf32>
    %618 = arith.mulf %617, %597 : vector<8x128xf32>
    %619 = arith.addf %618, %610 : vector<8x128xf32>
    %cst_246 = arith.constant 1.000000e+00 : f32
    %620 = vector.broadcast %cst_246 : f32 to vector<8x128xf32>
    %621 = arith.mulf %616, %620 : vector<8x128xf32>
    %622 = arith.subf %619, %621 : vector<8x128xf32>
    %cst_247 = arith.constant 1.000000e+00 : f32
    %623 = vector.broadcast %cst_247 : f32 to vector<8x128xf32>
    %624 = arith.subf %622, %623 : vector<8x128xf32>
    %cst_248 = arith.constant 0.000000e+00 : f32
    %625 = vector.broadcast %cst_248 : f32 to vector<8x128xf32>
    %626 = arith.cmpf ogt, %624, %625 : vector<8x128xf32>
    %627 = arith.extui %626 : vector<8x128xi1> to vector<8x128xi32>
    %628 = arith.sitofp %627 : vector<8x128xi32> to vector<8x128xf32>
    %c1 = arith.constant 1 : index
    %c0_249 = arith.constant 0 : index
    %c0_250 = arith.constant 0 : index
    %629 = vector.load %arg6[%c1, %c0_249, %c0_250] : memref<30x8x128xf32, #tpu.memory_space<vmem>>, vector<1x8x128xf32>
    %630 = vector.shape_cast %629 : vector<1x8x128xf32> to vector<8x128xf32>
    %631 = vector.shape_cast %628 : vector<8x128xf32> to vector<1x8x128xf32>
    tpu.vector_store %arg6[%c1, %c0_249, %c0_250], %631 {strides = array<i32>} : memref<30x8x128xf32, #tpu.memory_space<vmem>>, vector<1x8x128xf32>,
    %c1_251 = arith.constant 1 : index
    %c0_252 = arith.constant 0 : index
    %c0_253 = arith.constant 0 : index
    %632 = vector.load %arg7[%c1_251, %c0_252, %c0_253] : memref<30x8x128xf32, #tpu.memory_space<vmem>>, vector<1x8x128xf32>
    %633 = vector.shape_cast %632 : vector<1x8x128xf32> to vector<8x128xf32>
    %634 = vector.shape_cast %622 : vector<8x128xf32> to vector<1x8x128xf32>
    tpu.vector_store %arg7[%c1_251, %c0_252, %c0_253], %634 {strides = array<i32>} : memref<30x8x128xf32, #tpu.memory_space<vmem>>, vector<1x8x128xf32>,
    %c16_254 = arith.constant 16 : index
    %c0_255 = arith.constant 0 : index
    %635 = vector.load %arg9[%c16_254, %c0_255] : memref<240x128xf32, #tpu.memory_space<vmem>>, vector<8x128xf32>
    %cst_256 = arith.constant 1.000000e+00 : f32
    %636 = vector.broadcast %cst_256 : f32 to vector<8x128xf32>
    %637 = arith.subf %622, %636 : vector<8x128xf32>
    %cst_257 = arith.constant 0.000000e+00 : f32
    %638 = vector.broadcast %cst_257 : f32 to vector<8x128xf32>
    %639 = arith.cmpf ogt, %637, %638 : vector<8x128xf32>
    %640 = arith.extui %639 : vector<8x128xi1> to vector<8x128xi32>
    %641 = arith.sitofp %640 : vector<8x128xi32> to vector<8x128xf32>
    %cst_258 = arith.constant 0.949999988 : f32
    %642 = vector.broadcast %cst_258 : f32 to vector<8x128xf32>
    %643 = arith.mulf %642, %622 : vector<8x128xf32>
    %644 = arith.addf %643, %635 : vector<8x128xf32>
    %cst_259 = arith.constant 1.000000e+00 : f32
    %645 = vector.broadcast %cst_259 : f32 to vector<8x128xf32>
    %646 = arith.mulf %641, %645 : vector<8x128xf32>
    %647 = arith.subf %644, %646 : vector<8x128xf32>
    %cst_260 = arith.constant 1.000000e+00 : f32
    %648 = vector.broadcast %cst_260 : f32 to vector<8x128xf32>
    %649 = arith.subf %647, %648 : vector<8x128xf32>
    %cst_261 = arith.constant 0.000000e+00 : f32
    %650 = vector.broadcast %cst_261 : f32 to vector<8x128xf32>
    %651 = arith.cmpf ogt, %649, %650 : vector<8x128xf32>
    %652 = arith.extui %651 : vector<8x128xi1> to vector<8x128xi32>
    %653 = arith.sitofp %652 : vector<8x128xi32> to vector<8x128xf32>
    %c2 = arith.constant 2 : index
    %c0_262 = arith.constant 0 : index
    %c0_263 = arith.constant 0 : index
    %654 = vector.load %arg6[%c2, %c0_262, %c0_263] : memref<30x8x128xf32, #tpu.memory_space<vmem>>, vector<1x8x128xf32>
    %655 = vector.shape_cast %654 : vector<1x8x128xf32> to vector<8x128xf32>
    %656 = vector.shape_cast %653 : vector<8x128xf32> to vector<1x8x128xf32>
    tpu.vector_store %arg6[%c2, %c0_262, %c0_263], %656 {strides = array<i32>} : memref<30x8x128xf32, #tpu.memory_space<vmem>>, vector<1x8x128xf32>,
    %c2_264 = arith.constant 2 : index
    %c0_265 = arith.constant 0 : index
    %c0_266 = arith.constant 0 : index
    %657 = vector.load %arg7[%c2_264, %c0_265, %c0_266] : memref<30x8x128xf32, #tpu.memory_space<vmem>>, vector<1x8x128xf32>
    %658 = vector.shape_cast %657 : vector<1x8x128xf32> to vector<8x128xf32>
    %659 = vector.shape_cast %647 : vector<8x128xf32> to vector<1x8x128xf32>
    tpu.vector_store %arg7[%c2_264, %c0_265, %c0_266], %659 {strides = array<i32>} : memref<30x8x128xf32, #tpu.memory_space<vmem>>, vector<1x8x128xf32>,
    %c24_267 = arith.constant 24 : index
    %c0_268 = arith.constant 0 : index
    %660 = vector.load %arg9[%c24_267, %c0_268] : memref<240x128xf32, #tpu.memory_space<vmem>>, vector<8x128xf32>
    %cst_269 = arith.constant 1.000000e+00 : f32
    %661 = vector.broadcast %cst_269 : f32 to vector<8x128xf32>
    %662 = arith.subf %647, %661 : vector<8x128xf32>
    %cst_270 = arith.constant 0.000000e+00 : f32
    %663 = vector.broadcast %cst_270 : f32 to vector<8x128xf32>
    %664 = arith.cmpf ogt, %662, %663 : vector<8x128xf32>
    %665 = arith.extui %664 : vector<8x128xi1> to vector<8x128xi32>
    %666 = arith.sitofp %665 : vector<8x128xi32> to vector<8x128xf32>
    %cst_271 = arith.constant 0.949999988 : f32
    %667 = vector.broadcast %cst_271 : f32 to vector<8x128xf32>
    %668 = arith.mulf %667, %647 : vector<8x128xf32>
    %669 = arith.addf %668, %660 : vector<8x128xf32>
    %cst_272 = arith.constant 1.000000e+00 : f32
    %670 = vector.broadcast %cst_272 : f32 to vector<8x128xf32>
    %671 = arith.mulf %666, %670 : vector<8x128xf32>
    %672 = arith.subf %669, %671 : vector<8x128xf32>
    %cst_273 = arith.constant 1.000000e+00 : f32
    %673 = vector.broadcast %cst_273 : f32 to vector<8x128xf32>
    %674 = arith.subf %672, %673 : vector<8x128xf32>
    %cst_274 = arith.constant 0.000000e+00 : f32
    %675 = vector.broadcast %cst_274 : f32 to vector<8x128xf32>
    %676 = arith.cmpf ogt, %674, %675 : vector<8x128xf32>
    %677 = arith.extui %676 : vector<8x128xi1> to vector<8x128xi32>
    %678 = arith.sitofp %677 : vector<8x128xi32> to vector<8x128xf32>
    %c3 = arith.constant 3 : index
    %c0_275 = arith.constant 0 : index
    %c0_276 = arith.constant 0 : index
    %679 = vector.load %arg6[%c3, %c0_275, %c0_276] : memref<30x8x128xf32, #tpu.memory_space<vmem>>, vector<1x8x128xf32>
    %680 = vector.shape_cast %679 : vector<1x8x128xf32> to vector<8x128xf32>
    %681 = vector.shape_cast %678 : vector<8x128xf32> to vector<1x8x128xf32>
    tpu.vector_store %arg6[%c3, %c0_275, %c0_276], %681 {strides = array<i32>} : memref<30x8x128xf32, #tpu.memory_space<vmem>>, vector<1x8x128xf32>,
    %c3_277 = arith.constant 3 : index
    %c0_278 = arith.constant 0 : index
    %c0_279 = arith.constant 0 : index
    %682 = vector.load %arg7[%c3_277, %c0_278, %c0_279] : memref<30x8x128xf32, #tpu.memory_space<vmem>>, vector<1x8x128xf32>
    %683 = vector.shape_cast %682 : vector<1x8x128xf32> to vector<8x128xf32>
    %684 = vector.shape_cast %672 : vector<8x128xf32> to vector<1x8x128xf32>
    tpu.vector_store %arg7[%c3_277, %c0_278, %c0_279], %684 {strides = array<i32>} : memref<30x8x128xf32, #tpu.memory_space<vmem>>, vector<1x8x128xf32>,
    %c32_280 = arith.constant 32 : index
    %c0_281 = arith.constant 0 : index
    %685 = vector.load %arg9[%c32_280, %c0_281] : memref<240x128xf32, #tpu.memory_space<vmem>>, vector<8x128xf32>
    %cst_282 = arith.constant 1.000000e+00 : f32
    %686 = vector.broadcast %cst_282 : f32 to vector<8x128xf32>
    %687 = arith.subf %672, %686 : vector<8x128xf32>
    %cst_283 = arith.constant 0.000000e+00 : f32
    %688 = vector.broadcast %cst_283 : f32 to vector<8x128xf32>
    %689 = arith.cmpf ogt, %687, %688 : vector<8x128xf32>
    %690 = arith.extui %689 : vector<8x128xi1> to vector<8x128xi32>
    %691 = arith.sitofp %690 : vector<8x128xi32> to vector<8x128xf32>
    %cst_284 = arith.constant 0.949999988 : f32
    %692 = vector.broadcast %cst_284 : f32 to vector<8x128xf32>
    %693 = arith.mulf %692, %672 : vector<8x128xf32>
    %694 = arith.addf %693, %685 : vector<8x128xf32>
    %cst_285 = arith.constant 1.000000e+00 : f32
    %695 = vector.broadcast %cst_285 : f32 to vector<8x128xf32>
    %696 = arith.mulf %691, %695 : vector<8x128xf32>
    %697 = arith.subf %694, %696 : vector<8x128xf32>
    %cst_286 = arith.constant 1.000000e+00 : f32
    %698 = vector.broadcast %cst_286 : f32 to vector<8x128xf32>
    %699 = arith.subf %697, %698 : vector<8x128xf32>
    %cst_287 = arith.constant 0.000000e+00 : f32
    %700 = vector.broadcast %cst_287 : f32 to vector<8x128xf32>
    %701 = arith.cmpf ogt, %699, %700 : vector<8x128xf32>
    %702 = arith.extui %701 : vector<8x128xi1> to vector<8x128xi32>
    %703 = arith.sitofp %702 : vector<8x128xi32> to vector<8x128xf32>
    %c4 = arith.constant 4 : index
    %c0_288 = arith.constant 0 : index
    %c0_289 = arith.constant 0 : index
    %704 = vector.load %arg6[%c4, %c0_288, %c0_289] : memref<30x8x128xf32, #tpu.memory_space<vmem>>, vector<1x8x128xf32>
    %705 = vector.shape_cast %704 : vector<1x8x128xf32> to vector<8x128xf32>
    %706 = vector.shape_cast %703 : vector<8x128xf32> to vector<1x8x128xf32>
    tpu.vector_store %arg6[%c4, %c0_288, %c0_289], %706 {strides = array<i32>} : memref<30x8x128xf32, #tpu.memory_space<vmem>>, vector<1x8x128xf32>,
    %c4_290 = arith.constant 4 : index
    %c0_291 = arith.constant 0 : index
    %c0_292 = arith.constant 0 : index
    %707 = vector.load %arg7[%c4_290, %c0_291, %c0_292] : memref<30x8x128xf32, #tpu.memory_space<vmem>>, vector<1x8x128xf32>
    %708 = vector.shape_cast %707 : vector<1x8x128xf32> to vector<8x128xf32>
    %709 = vector.shape_cast %697 : vector<8x128xf32> to vector<1x8x128xf32>
    tpu.vector_store %arg7[%c4_290, %c0_291, %c0_292], %709 {strides = array<i32>} : memref<30x8x128xf32, #tpu.memory_space<vmem>>, vector<1x8x128xf32>,
    %c40_293 = arith.constant 40 : index
    %c0_294 = arith.constant 0 : index
    %710 = vector.load %arg9[%c40_293, %c0_294] : memref<240x128xf32, #tpu.memory_space<vmem>>, vector<8x128xf32>
    %cst_295 = arith.constant 1.000000e+00 : f32
    %711 = vector.broadcast %cst_295 : f32 to vector<8x128xf32>
    %712 = arith.subf %697, %711 : vector<8x128xf32>
    %cst_296 = arith.constant 0.000000e+00 : f32
    %713 = vector.broadcast %cst_296 : f32 to vector<8x128xf32>
    %714 = arith.cmpf ogt, %712, %713 : vector<8x128xf32>
    %715 = arith.extui %714 : vector<8x128xi1> to vector<8x128xi32>
    %716 = arith.sitofp %715 : vector<8x128xi32> to vector<8x128xf32>
    %cst_297 = arith.constant 0.949999988 : f32
    %717 = vector.broadcast %cst_297 : f32 to vector<8x128xf32>
    %718 = arith.mulf %717, %697 : vector<8x128xf32>
    %719 = arith.addf %718, %710 : vector<8x128xf32>
    %cst_298 = arith.constant 1.000000e+00 : f32
    %720 = vector.broadcast %cst_298 : f32 to vector<8x128xf32>
    %721 = arith.mulf %716, %720 : vector<8x128xf32>
    %722 = arith.subf %719, %721 : vector<8x128xf32>
    %cst_299 = arith.constant 1.000000e+00 : f32
    %723 = vector.broadcast %cst_299 : f32 to vector<8x128xf32>
    %724 = arith.subf %722, %723 : vector<8x128xf32>
    %cst_300 = arith.constant 0.000000e+00 : f32
    %725 = vector.broadcast %cst_300 : f32 to vector<8x128xf32>
    %726 = arith.cmpf ogt, %724, %725 : vector<8x128xf32>
    %727 = arith.extui %726 : vector<8x128xi1> to vector<8x128xi32>
    %728 = arith.sitofp %727 : vector<8x128xi32> to vector<8x128xf32>
    %c5 = arith.constant 5 : index
    %c0_301 = arith.constant 0 : index
    %c0_302 = arith.constant 0 : index
    %729 = vector.load %arg6[%c5, %c0_301, %c0_302] : memref<30x8x128xf32, #tpu.memory_space<vmem>>, vector<1x8x128xf32>
    %730 = vector.shape_cast %729 : vector<1x8x128xf32> to vector<8x128xf32>
    %731 = vector.shape_cast %728 : vector<8x128xf32> to vector<1x8x128xf32>
    tpu.vector_store %arg6[%c5, %c0_301, %c0_302], %731 {strides = array<i32>} : memref<30x8x128xf32, #tpu.memory_space<vmem>>, vector<1x8x128xf32>,
    %c5_303 = arith.constant 5 : index
    %c0_304 = arith.constant 0 : index
    %c0_305 = arith.constant 0 : index
    %732 = vector.load %arg7[%c5_303, %c0_304, %c0_305] : memref<30x8x128xf32, #tpu.memory_space<vmem>>, vector<1x8x128xf32>
    %733 = vector.shape_cast %732 : vector<1x8x128xf32> to vector<8x128xf32>
    %734 = vector.shape_cast %722 : vector<8x128xf32> to vector<1x8x128xf32>
    tpu.vector_store %arg7[%c5_303, %c0_304, %c0_305], %734 {strides = array<i32>} : memref<30x8x128xf32, #tpu.memory_space<vmem>>, vector<1x8x128xf32>,
    %c48_306 = arith.constant 48 : index
    %c0_307 = arith.constant 0 : index
    %735 = vector.load %arg9[%c48_306, %c0_307] : memref<240x128xf32, #tpu.memory_space<vmem>>, vector<8x128xf32>
    %cst_308 = arith.constant 1.000000e+00 : f32
    %736 = vector.broadcast %cst_308 : f32 to vector<8x128xf32>
    %737 = arith.subf %722, %736 : vector<8x128xf32>
    %cst_309 = arith.constant 0.000000e+00 : f32
    %738 = vector.broadcast %cst_309 : f32 to vector<8x128xf32>
    %739 = arith.cmpf ogt, %737, %738 : vector<8x128xf32>
    %740 = arith.extui %739 : vector<8x128xi1> to vector<8x128xi32>
    %741 = arith.sitofp %740 : vector<8x128xi32> to vector<8x128xf32>
    %cst_310 = arith.constant 0.949999988 : f32
    %742 = vector.broadcast %cst_310 : f32 to vector<8x128xf32>
    %743 = arith.mulf %742, %722 : vector<8x128xf32>
    %744 = arith.addf %743, %735 : vector<8x128xf32>
    %cst_311 = arith.constant 1.000000e+00 : f32
    %745 = vector.broadcast %cst_311 : f32 to vector<8x128xf32>
    %746 = arith.mulf %741, %745 : vector<8x128xf32>
    %747 = arith.subf %744, %746 : vector<8x128xf32>
    %cst_312 = arith.constant 1.000000e+00 : f32
    %748 = vector.broadcast %cst_312 : f32 to vector<8x128xf32>
    %749 = arith.subf %747, %748 : vector<8x128xf32>
    %cst_313 = arith.constant 0.000000e+00 : f32
    %750 = vector.broadcast %cst_313 : f32 to vector<8x128xf32>
    %751 = arith.cmpf ogt, %749, %750 : vector<8x128xf32>
    %752 = arith.extui %751 : vector<8x128xi1> to vector<8x128xi32>
    %753 = arith.sitofp %752 : vector<8x128xi32> to vector<8x128xf32>
    %c6 = arith.constant 6 : index
    %c0_314 = arith.constant 0 : index
    %c0_315 = arith.constant 0 : index
    %754 = vector.load %arg6[%c6, %c0_314, %c0_315] : memref<30x8x128xf32, #tpu.memory_space<vmem>>, vector<1x8x128xf32>
    %755 = vector.shape_cast %754 : vector<1x8x128xf32> to vector<8x128xf32>
    %756 = vector.shape_cast %753 : vector<8x128xf32> to vector<1x8x128xf32>
    tpu.vector_store %arg6[%c6, %c0_314, %c0_315], %756 {strides = array<i32>} : memref<30x8x128xf32, #tpu.memory_space<vmem>>, vector<1x8x128xf32>,
    %c6_316 = arith.constant 6 : index
    %c0_317 = arith.constant 0 : index
    %c0_318 = arith.constant 0 : index
    %757 = vector.load %arg7[%c6_316, %c0_317, %c0_318] : memref<30x8x128xf32, #tpu.memory_space<vmem>>, vector<1x8x128xf32>
    %758 = vector.shape_cast %757 : vector<1x8x128xf32> to vector<8x128xf32>
    %759 = vector.shape_cast %747 : vector<8x128xf32> to vector<1x8x128xf32>
    tpu.vector_store %arg7[%c6_316, %c0_317, %c0_318], %759 {strides = array<i32>} : memref<30x8x128xf32, #tpu.memory_space<vmem>>, vector<1x8x128xf32>,
    %c56_319 = arith.constant 56 : index
    %c0_320 = arith.constant 0 : index
    %760 = vector.load %arg9[%c56_319, %c0_320] : memref<240x128xf32, #tpu.memory_space<vmem>>, vector<8x128xf32>
    %cst_321 = arith.constant 1.000000e+00 : f32
    %761 = vector.broadcast %cst_321 : f32 to vector<8x128xf32>
    %762 = arith.subf %747, %761 : vector<8x128xf32>
    %cst_322 = arith.constant 0.000000e+00 : f32
    %763 = vector.broadcast %cst_322 : f32 to vector<8x128xf32>
    %764 = arith.cmpf ogt, %762, %763 : vector<8x128xf32>
    %765 = arith.extui %764 : vector<8x128xi1> to vector<8x128xi32>
    %766 = arith.sitofp %765 : vector<8x128xi32> to vector<8x128xf32>
    %cst_323 = arith.constant 0.949999988 : f32
    %767 = vector.broadcast %cst_323 : f32 to vector<8x128xf32>
    %768 = arith.mulf %767, %747 : vector<8x128xf32>
    %769 = arith.addf %768, %760 : vector<8x128xf32>
    %cst_324 = arith.constant 1.000000e+00 : f32
    %770 = vector.broadcast %cst_324 : f32 to vector<8x128xf32>
    %771 = arith.mulf %766, %770 : vector<8x128xf32>
    %772 = arith.subf %769, %771 : vector<8x128xf32>
    %cst_325 = arith.constant 1.000000e+00 : f32
    %773 = vector.broadcast %cst_325 : f32 to vector<8x128xf32>
    %774 = arith.subf %772, %773 : vector<8x128xf32>
    %cst_326 = arith.constant 0.000000e+00 : f32
    %775 = vector.broadcast %cst_326 : f32 to vector<8x128xf32>
    %776 = arith.cmpf ogt, %774, %775 : vector<8x128xf32>
    %777 = arith.extui %776 : vector<8x128xi1> to vector<8x128xi32>
    %778 = arith.sitofp %777 : vector<8x128xi32> to vector<8x128xf32>
    %c7 = arith.constant 7 : index
    %c0_327 = arith.constant 0 : index
    %c0_328 = arith.constant 0 : index
    %779 = vector.load %arg6[%c7, %c0_327, %c0_328] : memref<30x8x128xf32, #tpu.memory_space<vmem>>, vector<1x8x128xf32>
    %780 = vector.shape_cast %779 : vector<1x8x128xf32> to vector<8x128xf32>
    %781 = vector.shape_cast %778 : vector<8x128xf32> to vector<1x8x128xf32>
    tpu.vector_store %arg6[%c7, %c0_327, %c0_328], %781 {strides = array<i32>} : memref<30x8x128xf32, #tpu.memory_space<vmem>>, vector<1x8x128xf32>,
    %c7_329 = arith.constant 7 : index
    %c0_330 = arith.constant 0 : index
    %c0_331 = arith.constant 0 : index
    %782 = vector.load %arg7[%c7_329, %c0_330, %c0_331] : memref<30x8x128xf32, #tpu.memory_space<vmem>>, vector<1x8x128xf32>
    %783 = vector.shape_cast %782 : vector<1x8x128xf32> to vector<8x128xf32>
    %784 = vector.shape_cast %772 : vector<8x128xf32> to vector<1x8x128xf32>
    tpu.vector_store %arg7[%c7_329, %c0_330, %c0_331], %784 {strides = array<i32>} : memref<30x8x128xf32, #tpu.memory_space<vmem>>, vector<1x8x128xf32>,
    %c64_332 = arith.constant 64 : index
    %c0_333 = arith.constant 0 : index
    %785 = vector.load %arg9[%c64_332, %c0_333] : memref<240x128xf32, #tpu.memory_space<vmem>>, vector<8x128xf32>
    %cst_334 = arith.constant 1.000000e+00 : f32
    %786 = vector.broadcast %cst_334 : f32 to vector<8x128xf32>
    %787 = arith.subf %772, %786 : vector<8x128xf32>
    %cst_335 = arith.constant 0.000000e+00 : f32
    %788 = vector.broadcast %cst_335 : f32 to vector<8x128xf32>
    %789 = arith.cmpf ogt, %787, %788 : vector<8x128xf32>
    %790 = arith.extui %789 : vector<8x128xi1> to vector<8x128xi32>
    %791 = arith.sitofp %790 : vector<8x128xi32> to vector<8x128xf32>
    %cst_336 = arith.constant 0.949999988 : f32
    %792 = vector.broadcast %cst_336 : f32 to vector<8x128xf32>
    %793 = arith.mulf %792, %772 : vector<8x128xf32>
    %794 = arith.addf %793, %785 : vector<8x128xf32>
    %cst_337 = arith.constant 1.000000e+00 : f32
    %795 = vector.broadcast %cst_337 : f32 to vector<8x128xf32>
    %796 = arith.mulf %791, %795 : vector<8x128xf32>
    %797 = arith.subf %794, %796 : vector<8x128xf32>
    %cst_338 = arith.constant 1.000000e+00 : f32
    %798 = vector.broadcast %cst_338 : f32 to vector<8x128xf32>
    %799 = arith.subf %797, %798 : vector<8x128xf32>
    %cst_339 = arith.constant 0.000000e+00 : f32
    %800 = vector.broadcast %cst_339 : f32 to vector<8x128xf32>
    %801 = arith.cmpf ogt, %799, %800 : vector<8x128xf32>
    %802 = arith.extui %801 : vector<8x128xi1> to vector<8x128xi32>
    %803 = arith.sitofp %802 : vector<8x128xi32> to vector<8x128xf32>
    %c8_340 = arith.constant 8 : index
    %c0_341 = arith.constant 0 : index
    %c0_342 = arith.constant 0 : index
    %804 = vector.load %arg6[%c8_340, %c0_341, %c0_342] : memref<30x8x128xf32, #tpu.memory_space<vmem>>, vector<1x8x128xf32>
    %805 = vector.shape_cast %804 : vector<1x8x128xf32> to vector<8x128xf32>
    %806 = vector.shape_cast %803 : vector<8x128xf32> to vector<1x8x128xf32>
    tpu.vector_store %arg6[%c8_340, %c0_341, %c0_342], %806 {strides = array<i32>} : memref<30x8x128xf32, #tpu.memory_space<vmem>>, vector<1x8x128xf32>,
    %c8_343 = arith.constant 8 : index
    %c0_344 = arith.constant 0 : index
    %c0_345 = arith.constant 0 : index
    %807 = vector.load %arg7[%c8_343, %c0_344, %c0_345] : memref<30x8x128xf32, #tpu.memory_space<vmem>>, vector<1x8x128xf32>
    %808 = vector.shape_cast %807 : vector<1x8x128xf32> to vector<8x128xf32>
    %809 = vector.shape_cast %797 : vector<8x128xf32> to vector<1x8x128xf32>
    tpu.vector_store %arg7[%c8_343, %c0_344, %c0_345], %809 {strides = array<i32>} : memref<30x8x128xf32, #tpu.memory_space<vmem>>, vector<1x8x128xf32>,
    %c72_346 = arith.constant 72 : index
    %c0_347 = arith.constant 0 : index
    %810 = vector.load %arg9[%c72_346, %c0_347] : memref<240x128xf32, #tpu.memory_space<vmem>>, vector<8x128xf32>
    %cst_348 = arith.constant 1.000000e+00 : f32
    %811 = vector.broadcast %cst_348 : f32 to vector<8x128xf32>
    %812 = arith.subf %797, %811 : vector<8x128xf32>
    %cst_349 = arith.constant 0.000000e+00 : f32
    %813 = vector.broadcast %cst_349 : f32 to vector<8x128xf32>
    %814 = arith.cmpf ogt, %812, %813 : vector<8x128xf32>
    %815 = arith.extui %814 : vector<8x128xi1> to vector<8x128xi32>
    %816 = arith.sitofp %815 : vector<8x128xi32> to vector<8x128xf32>
    %cst_350 = arith.constant 0.949999988 : f32
    %817 = vector.broadcast %cst_350 : f32 to vector<8x128xf32>
    %818 = arith.mulf %817, %797 : vector<8x128xf32>
    %819 = arith.addf %818, %810 : vector<8x128xf32>
    %cst_351 = arith.constant 1.000000e+00 : f32
    %820 = vector.broadcast %cst_351 : f32 to vector<8x128xf32>
    %821 = arith.mulf %816, %820 : vector<8x128xf32>
    %822 = arith.subf %819, %821 : vector<8x128xf32>
    %cst_352 = arith.constant 1.000000e+00 : f32
    %823 = vector.broadcast %cst_352 : f32 to vector<8x128xf32>
    %824 = arith.subf %822, %823 : vector<8x128xf32>
    %cst_353 = arith.constant 0.000000e+00 : f32
    %825 = vector.broadcast %cst_353 : f32 to vector<8x128xf32>
    %826 = arith.cmpf ogt, %824, %825 : vector<8x128xf32>
    %827 = arith.extui %826 : vector<8x128xi1> to vector<8x128xi32>
    %828 = arith.sitofp %827 : vector<8x128xi32> to vector<8x128xf32>
    %c9 = arith.constant 9 : index
    %c0_354 = arith.constant 0 : index
    %c0_355 = arith.constant 0 : index
    %829 = vector.load %arg6[%c9, %c0_354, %c0_355] : memref<30x8x128xf32, #tpu.memory_space<vmem>>, vector<1x8x128xf32>
    %830 = vector.shape_cast %829 : vector<1x8x128xf32> to vector<8x128xf32>
    %831 = vector.shape_cast %828 : vector<8x128xf32> to vector<1x8x128xf32>
    tpu.vector_store %arg6[%c9, %c0_354, %c0_355], %831 {strides = array<i32>} : memref<30x8x128xf32, #tpu.memory_space<vmem>>, vector<1x8x128xf32>,
    %c9_356 = arith.constant 9 : index
    %c0_357 = arith.constant 0 : index
    %c0_358 = arith.constant 0 : index
    %832 = vector.load %arg7[%c9_356, %c0_357, %c0_358] : memref<30x8x128xf32, #tpu.memory_space<vmem>>, vector<1x8x128xf32>
    %833 = vector.shape_cast %832 : vector<1x8x128xf32> to vector<8x128xf32>
    %834 = vector.shape_cast %822 : vector<8x128xf32> to vector<1x8x128xf32>
    tpu.vector_store %arg7[%c9_356, %c0_357, %c0_358], %834 {strides = array<i32>} : memref<30x8x128xf32, #tpu.memory_space<vmem>>, vector<1x8x128xf32>,
    %c80_359 = arith.constant 80 : index
    %c0_360 = arith.constant 0 : index
    %835 = vector.load %arg9[%c80_359, %c0_360] : memref<240x128xf32, #tpu.memory_space<vmem>>, vector<8x128xf32>
    %cst_361 = arith.constant 1.000000e+00 : f32
    %836 = vector.broadcast %cst_361 : f32 to vector<8x128xf32>
    %837 = arith.subf %822, %836 : vector<8x128xf32>
    %cst_362 = arith.constant 0.000000e+00 : f32
    %838 = vector.broadcast %cst_362 : f32 to vector<8x128xf32>
    %839 = arith.cmpf ogt, %837, %838 : vector<8x128xf32>
    %840 = arith.extui %839 : vector<8x128xi1> to vector<8x128xi32>
    %841 = arith.sitofp %840 : vector<8x128xi32> to vector<8x128xf32>
    %cst_363 = arith.constant 0.949999988 : f32
    %842 = vector.broadcast %cst_363 : f32 to vector<8x128xf32>
    %843 = arith.mulf %842, %822 : vector<8x128xf32>
    %844 = arith.addf %843, %835 : vector<8x128xf32>
    %cst_364 = arith.constant 1.000000e+00 : f32
    %845 = vector.broadcast %cst_364 : f32 to vector<8x128xf32>
    %846 = arith.mulf %841, %845 : vector<8x128xf32>
    %847 = arith.subf %844, %846 : vector<8x128xf32>
    %cst_365 = arith.constant 1.000000e+00 : f32
    %848 = vector.broadcast %cst_365 : f32 to vector<8x128xf32>
    %849 = arith.subf %847, %848 : vector<8x128xf32>
    %cst_366 = arith.constant 0.000000e+00 : f32
    %850 = vector.broadcast %cst_366 : f32 to vector<8x128xf32>
    %851 = arith.cmpf ogt, %849, %850 : vector<8x128xf32>
    %852 = arith.extui %851 : vector<8x128xi1> to vector<8x128xi32>
    %853 = arith.sitofp %852 : vector<8x128xi32> to vector<8x128xf32>
    %c10 = arith.constant 10 : index
    %c0_367 = arith.constant 0 : index
    %c0_368 = arith.constant 0 : index
    %854 = vector.load %arg6[%c10, %c0_367, %c0_368] : memref<30x8x128xf32, #tpu.memory_space<vmem>>, vector<1x8x128xf32>
    %855 = vector.shape_cast %854 : vector<1x8x128xf32> to vector<8x128xf32>
    %856 = vector.shape_cast %853 : vector<8x128xf32> to vector<1x8x128xf32>
    tpu.vector_store %arg6[%c10, %c0_367, %c0_368], %856 {strides = array<i32>} : memref<30x8x128xf32, #tpu.memory_space<vmem>>, vector<1x8x128xf32>,
    %c10_369 = arith.constant 10 : index
    %c0_370 = arith.constant 0 : index
    %c0_371 = arith.constant 0 : index
    %857 = vector.load %arg7[%c10_369, %c0_370, %c0_371] : memref<30x8x128xf32, #tpu.memory_space<vmem>>, vector<1x8x128xf32>
    %858 = vector.shape_cast %857 : vector<1x8x128xf32> to vector<8x128xf32>
    %859 = vector.shape_cast %847 : vector<8x128xf32> to vector<1x8x128xf32>
    tpu.vector_store %arg7[%c10_369, %c0_370, %c0_371], %859 {strides = array<i32>} : memref<30x8x128xf32, #tpu.memory_space<vmem>>, vector<1x8x128xf32>,
    %c88_372 = arith.constant 88 : index
    %c0_373 = arith.constant 0 : index
    %860 = vector.load %arg9[%c88_372, %c0_373] : memref<240x128xf32, #tpu.memory_space<vmem>>, vector<8x128xf32>
    %cst_374 = arith.constant 1.000000e+00 : f32
    %861 = vector.broadcast %cst_374 : f32 to vector<8x128xf32>
    %862 = arith.subf %847, %861 : vector<8x128xf32>
    %cst_375 = arith.constant 0.000000e+00 : f32
    %863 = vector.broadcast %cst_375 : f32 to vector<8x128xf32>
    %864 = arith.cmpf ogt, %862, %863 : vector<8x128xf32>
    %865 = arith.extui %864 : vector<8x128xi1> to vector<8x128xi32>
    %866 = arith.sitofp %865 : vector<8x128xi32> to vector<8x128xf32>
    %cst_376 = arith.constant 0.949999988 : f32
    %867 = vector.broadcast %cst_376 : f32 to vector<8x128xf32>
    %868 = arith.mulf %867, %847 : vector<8x128xf32>
    %869 = arith.addf %868, %860 : vector<8x128xf32>
    %cst_377 = arith.constant 1.000000e+00 : f32
    %870 = vector.broadcast %cst_377 : f32 to vector<8x128xf32>
    %871 = arith.mulf %866, %870 : vector<8x128xf32>
    %872 = arith.subf %869, %871 : vector<8x128xf32>
    %cst_378 = arith.constant 1.000000e+00 : f32
    %873 = vector.broadcast %cst_378 : f32 to vector<8x128xf32>
    %874 = arith.subf %872, %873 : vector<8x128xf32>
    %cst_379 = arith.constant 0.000000e+00 : f32
    %875 = vector.broadcast %cst_379 : f32 to vector<8x128xf32>
    %876 = arith.cmpf ogt, %874, %875 : vector<8x128xf32>
    %877 = arith.extui %876 : vector<8x128xi1> to vector<8x128xi32>
    %878 = arith.sitofp %877 : vector<8x128xi32> to vector<8x128xf32>
    %c11 = arith.constant 11 : index
    %c0_380 = arith.constant 0 : index
    %c0_381 = arith.constant 0 : index
    %879 = vector.load %arg6[%c11, %c0_380, %c0_381] : memref<30x8x128xf32, #tpu.memory_space<vmem>>, vector<1x8x128xf32>
    %880 = vector.shape_cast %879 : vector<1x8x128xf32> to vector<8x128xf32>
    %881 = vector.shape_cast %878 : vector<8x128xf32> to vector<1x8x128xf32>
    tpu.vector_store %arg6[%c11, %c0_380, %c0_381], %881 {strides = array<i32>} : memref<30x8x128xf32, #tpu.memory_space<vmem>>, vector<1x8x128xf32>,
    %c11_382 = arith.constant 11 : index
    %c0_383 = arith.constant 0 : index
    %c0_384 = arith.constant 0 : index
    %882 = vector.load %arg7[%c11_382, %c0_383, %c0_384] : memref<30x8x128xf32, #tpu.memory_space<vmem>>, vector<1x8x128xf32>
    %883 = vector.shape_cast %882 : vector<1x8x128xf32> to vector<8x128xf32>
    %884 = vector.shape_cast %872 : vector<8x128xf32> to vector<1x8x128xf32>
    tpu.vector_store %arg7[%c11_382, %c0_383, %c0_384], %884 {strides = array<i32>} : memref<30x8x128xf32, #tpu.memory_space<vmem>>, vector<1x8x128xf32>,
    %c96_385 = arith.constant 96 : index
    %c0_386 = arith.constant 0 : index
    %885 = vector.load %arg9[%c96_385, %c0_386] : memref<240x128xf32, #tpu.memory_space<vmem>>, vector<8x128xf32>
    %cst_387 = arith.constant 1.000000e+00 : f32
    %886 = vector.broadcast %cst_387 : f32 to vector<8x128xf32>
    %887 = arith.subf %872, %886 : vector<8x128xf32>
    %cst_388 = arith.constant 0.000000e+00 : f32
    %888 = vector.broadcast %cst_388 : f32 to vector<8x128xf32>
    %889 = arith.cmpf ogt, %887, %888 : vector<8x128xf32>
    %890 = arith.extui %889 : vector<8x128xi1> to vector<8x128xi32>
    %891 = arith.sitofp %890 : vector<8x128xi32> to vector<8x128xf32>
    %cst_389 = arith.constant 0.949999988 : f32
    %892 = vector.broadcast %cst_389 : f32 to vector<8x128xf32>
    %893 = arith.mulf %892, %872 : vector<8x128xf32>
    %894 = arith.addf %893, %885 : vector<8x128xf32>
    %cst_390 = arith.constant 1.000000e+00 : f32
    %895 = vector.broadcast %cst_390 : f32 to vector<8x128xf32>
    %896 = arith.mulf %891, %895 : vector<8x128xf32>
    %897 = arith.subf %894, %896 : vector<8x128xf32>
    %cst_391 = arith.constant 1.000000e+00 : f32
    %898 = vector.broadcast %cst_391 : f32 to vector<8x128xf32>
    %899 = arith.subf %897, %898 : vector<8x128xf32>
    %cst_392 = arith.constant 0.000000e+00 : f32
    %900 = vector.broadcast %cst_392 : f32 to vector<8x128xf32>
    %901 = arith.cmpf ogt, %899, %900 : vector<8x128xf32>
    %902 = arith.extui %901 : vector<8x128xi1> to vector<8x128xi32>
    %903 = arith.sitofp %902 : vector<8x128xi32> to vector<8x128xf32>
    %c12 = arith.constant 12 : index
    %c0_393 = arith.constant 0 : index
    %c0_394 = arith.constant 0 : index
    %904 = vector.load %arg6[%c12, %c0_393, %c0_394] : memref<30x8x128xf32, #tpu.memory_space<vmem>>, vector<1x8x128xf32>
    %905 = vector.shape_cast %904 : vector<1x8x128xf32> to vector<8x128xf32>
    %906 = vector.shape_cast %903 : vector<8x128xf32> to vector<1x8x128xf32>
    tpu.vector_store %arg6[%c12, %c0_393, %c0_394], %906 {strides = array<i32>} : memref<30x8x128xf32, #tpu.memory_space<vmem>>, vector<1x8x128xf32>,
    %c12_395 = arith.constant 12 : index
    %c0_396 = arith.constant 0 : index
    %c0_397 = arith.constant 0 : index
    %907 = vector.load %arg7[%c12_395, %c0_396, %c0_397] : memref<30x8x128xf32, #tpu.memory_space<vmem>>, vector<1x8x128xf32>
    %908 = vector.shape_cast %907 : vector<1x8x128xf32> to vector<8x128xf32>
    %909 = vector.shape_cast %897 : vector<8x128xf32> to vector<1x8x128xf32>
    tpu.vector_store %arg7[%c12_395, %c0_396, %c0_397], %909 {strides = array<i32>} : memref<30x8x128xf32, #tpu.memory_space<vmem>>, vector<1x8x128xf32>,
    %c104_398 = arith.constant 104 : index
    %c0_399 = arith.constant 0 : index
    %910 = vector.load %arg9[%c104_398, %c0_399] : memref<240x128xf32, #tpu.memory_space<vmem>>, vector<8x128xf32>
    %cst_400 = arith.constant 1.000000e+00 : f32
    %911 = vector.broadcast %cst_400 : f32 to vector<8x128xf32>
    %912 = arith.subf %897, %911 : vector<8x128xf32>
    %cst_401 = arith.constant 0.000000e+00 : f32
    %913 = vector.broadcast %cst_401 : f32 to vector<8x128xf32>
    %914 = arith.cmpf ogt, %912, %913 : vector<8x128xf32>
    %915 = arith.extui %914 : vector<8x128xi1> to vector<8x128xi32>
    %916 = arith.sitofp %915 : vector<8x128xi32> to vector<8x128xf32>
    %cst_402 = arith.constant 0.949999988 : f32
    %917 = vector.broadcast %cst_402 : f32 to vector<8x128xf32>
    %918 = arith.mulf %917, %897 : vector<8x128xf32>
    %919 = arith.addf %918, %910 : vector<8x128xf32>
    %cst_403 = arith.constant 1.000000e+00 : f32
    %920 = vector.broadcast %cst_403 : f32 to vector<8x128xf32>
    %921 = arith.mulf %916, %920 : vector<8x128xf32>
    %922 = arith.subf %919, %921 : vector<8x128xf32>
    %cst_404 = arith.constant 1.000000e+00 : f32
    %923 = vector.broadcast %cst_404 : f32 to vector<8x128xf32>
    %924 = arith.subf %922, %923 : vector<8x128xf32>
    %cst_405 = arith.constant 0.000000e+00 : f32
    %925 = vector.broadcast %cst_405 : f32 to vector<8x128xf32>
    %926 = arith.cmpf ogt, %924, %925 : vector<8x128xf32>
    %927 = arith.extui %926 : vector<8x128xi1> to vector<8x128xi32>
    %928 = arith.sitofp %927 : vector<8x128xi32> to vector<8x128xf32>
    %c13 = arith.constant 13 : index
    %c0_406 = arith.constant 0 : index
    %c0_407 = arith.constant 0 : index
    %929 = vector.load %arg6[%c13, %c0_406, %c0_407] : memref<30x8x128xf32, #tpu.memory_space<vmem>>, vector<1x8x128xf32>
    %930 = vector.shape_cast %929 : vector<1x8x128xf32> to vector<8x128xf32>
    %931 = vector.shape_cast %928 : vector<8x128xf32> to vector<1x8x128xf32>
    tpu.vector_store %arg6[%c13, %c0_406, %c0_407], %931 {strides = array<i32>} : memref<30x8x128xf32, #tpu.memory_space<vmem>>, vector<1x8x128xf32>,
    %c13_408 = arith.constant 13 : index
    %c0_409 = arith.constant 0 : index
    %c0_410 = arith.constant 0 : index
    %932 = vector.load %arg7[%c13_408, %c0_409, %c0_410] : memref<30x8x128xf32, #tpu.memory_space<vmem>>, vector<1x8x128xf32>
    %933 = vector.shape_cast %932 : vector<1x8x128xf32> to vector<8x128xf32>
    %934 = vector.shape_cast %922 : vector<8x128xf32> to vector<1x8x128xf32>
    tpu.vector_store %arg7[%c13_408, %c0_409, %c0_410], %934 {strides = array<i32>} : memref<30x8x128xf32, #tpu.memory_space<vmem>>, vector<1x8x128xf32>,
    %c112_411 = arith.constant 112 : index
    %c0_412 = arith.constant 0 : index
    %935 = vector.load %arg9[%c112_411, %c0_412] : memref<240x128xf32, #tpu.memory_space<vmem>>, vector<8x128xf32>
    %cst_413 = arith.constant 1.000000e+00 : f32
    %936 = vector.broadcast %cst_413 : f32 to vector<8x128xf32>
    %937 = arith.subf %922, %936 : vector<8x128xf32>
    %cst_414 = arith.constant 0.000000e+00 : f32
    %938 = vector.broadcast %cst_414 : f32 to vector<8x128xf32>
    %939 = arith.cmpf ogt, %937, %938 : vector<8x128xf32>
    %940 = arith.extui %939 : vector<8x128xi1> to vector<8x128xi32>
    %941 = arith.sitofp %940 : vector<8x128xi32> to vector<8x128xf32>
    %cst_415 = arith.constant 0.949999988 : f32
    %942 = vector.broadcast %cst_415 : f32 to vector<8x128xf32>
    %943 = arith.mulf %942, %922 : vector<8x128xf32>
    %944 = arith.addf %943, %935 : vector<8x128xf32>
    %cst_416 = arith.constant 1.000000e+00 : f32
    %945 = vector.broadcast %cst_416 : f32 to vector<8x128xf32>
    %946 = arith.mulf %941, %945 : vector<8x128xf32>
    %947 = arith.subf %944, %946 : vector<8x128xf32>
    %cst_417 = arith.constant 1.000000e+00 : f32
    %948 = vector.broadcast %cst_417 : f32 to vector<8x128xf32>
    %949 = arith.subf %947, %948 : vector<8x128xf32>
    %cst_418 = arith.constant 0.000000e+00 : f32
    %950 = vector.broadcast %cst_418 : f32 to vector<8x128xf32>
    %951 = arith.cmpf ogt, %949, %950 : vector<8x128xf32>
    %952 = arith.extui %951 : vector<8x128xi1> to vector<8x128xi32>
    %953 = arith.sitofp %952 : vector<8x128xi32> to vector<8x128xf32>
    %c14 = arith.constant 14 : index
    %c0_419 = arith.constant 0 : index
    %c0_420 = arith.constant 0 : index
    %954 = vector.load %arg6[%c14, %c0_419, %c0_420] : memref<30x8x128xf32, #tpu.memory_space<vmem>>, vector<1x8x128xf32>
    %955 = vector.shape_cast %954 : vector<1x8x128xf32> to vector<8x128xf32>
    %956 = vector.shape_cast %953 : vector<8x128xf32> to vector<1x8x128xf32>
    tpu.vector_store %arg6[%c14, %c0_419, %c0_420], %956 {strides = array<i32>} : memref<30x8x128xf32, #tpu.memory_space<vmem>>, vector<1x8x128xf32>,
    %c14_421 = arith.constant 14 : index
    %c0_422 = arith.constant 0 : index
    %c0_423 = arith.constant 0 : index
    %957 = vector.load %arg7[%c14_421, %c0_422, %c0_423] : memref<30x8x128xf32, #tpu.memory_space<vmem>>, vector<1x8x128xf32>
    %958 = vector.shape_cast %957 : vector<1x8x128xf32> to vector<8x128xf32>
    %959 = vector.shape_cast %947 : vector<8x128xf32> to vector<1x8x128xf32>
    tpu.vector_store %arg7[%c14_421, %c0_422, %c0_423], %959 {strides = array<i32>} : memref<30x8x128xf32, #tpu.memory_space<vmem>>, vector<1x8x128xf32>,
    %c120_424 = arith.constant 120 : index
    %c0_425 = arith.constant 0 : index
    %960 = vector.load %arg9[%c120_424, %c0_425] : memref<240x128xf32, #tpu.memory_space<vmem>>, vector<8x128xf32>
    %cst_426 = arith.constant 1.000000e+00 : f32
    %961 = vector.broadcast %cst_426 : f32 to vector<8x128xf32>
    %962 = arith.subf %947, %961 : vector<8x128xf32>
    %cst_427 = arith.constant 0.000000e+00 : f32
    %963 = vector.broadcast %cst_427 : f32 to vector<8x128xf32>
    %964 = arith.cmpf ogt, %962, %963 : vector<8x128xf32>
    %965 = arith.extui %964 : vector<8x128xi1> to vector<8x128xi32>
    %966 = arith.sitofp %965 : vector<8x128xi32> to vector<8x128xf32>
    %cst_428 = arith.constant 0.949999988 : f32
    %967 = vector.broadcast %cst_428 : f32 to vector<8x128xf32>
    %968 = arith.mulf %967, %947 : vector<8x128xf32>
    %969 = arith.addf %968, %960 : vector<8x128xf32>
    %cst_429 = arith.constant 1.000000e+00 : f32
    %970 = vector.broadcast %cst_429 : f32 to vector<8x128xf32>
    %971 = arith.mulf %966, %970 : vector<8x128xf32>
    %972 = arith.subf %969, %971 : vector<8x128xf32>
    %cst_430 = arith.constant 1.000000e+00 : f32
    %973 = vector.broadcast %cst_430 : f32 to vector<8x128xf32>
    %974 = arith.subf %972, %973 : vector<8x128xf32>
    %cst_431 = arith.constant 0.000000e+00 : f32
    %975 = vector.broadcast %cst_431 : f32 to vector<8x128xf32>
    %976 = arith.cmpf ogt, %974, %975 : vector<8x128xf32>
    %977 = arith.extui %976 : vector<8x128xi1> to vector<8x128xi32>
    %978 = arith.sitofp %977 : vector<8x128xi32> to vector<8x128xf32>
    %c15 = arith.constant 15 : index
    %c0_432 = arith.constant 0 : index
    %c0_433 = arith.constant 0 : index
    %979 = vector.load %arg6[%c15, %c0_432, %c0_433] : memref<30x8x128xf32, #tpu.memory_space<vmem>>, vector<1x8x128xf32>
    %980 = vector.shape_cast %979 : vector<1x8x128xf32> to vector<8x128xf32>
    %981 = vector.shape_cast %978 : vector<8x128xf32> to vector<1x8x128xf32>
    tpu.vector_store %arg6[%c15, %c0_432, %c0_433], %981 {strides = array<i32>} : memref<30x8x128xf32, #tpu.memory_space<vmem>>, vector<1x8x128xf32>,
    %c15_434 = arith.constant 15 : index
    %c0_435 = arith.constant 0 : index
    %c0_436 = arith.constant 0 : index
    %982 = vector.load %arg7[%c15_434, %c0_435, %c0_436] : memref<30x8x128xf32, #tpu.memory_space<vmem>>, vector<1x8x128xf32>
    %983 = vector.shape_cast %982 : vector<1x8x128xf32> to vector<8x128xf32>
    %984 = vector.shape_cast %972 : vector<8x128xf32> to vector<1x8x128xf32>
    tpu.vector_store %arg7[%c15_434, %c0_435, %c0_436], %984 {strides = array<i32>} : memref<30x8x128xf32, #tpu.memory_space<vmem>>, vector<1x8x128xf32>,
    %c128_437 = arith.constant 128 : index
    %c0_438 = arith.constant 0 : index
    %985 = vector.load %arg9[%c128_437, %c0_438] : memref<240x128xf32, #tpu.memory_space<vmem>>, vector<8x128xf32>
    %cst_439 = arith.constant 1.000000e+00 : f32
    %986 = vector.broadcast %cst_439 : f32 to vector<8x128xf32>
    %987 = arith.subf %972, %986 : vector<8x128xf32>
    %cst_440 = arith.constant 0.000000e+00 : f32
    %988 = vector.broadcast %cst_440 : f32 to vector<8x128xf32>
    %989 = arith.cmpf ogt, %987, %988 : vector<8x128xf32>
    %990 = arith.extui %989 : vector<8x128xi1> to vector<8x128xi32>
    %991 = arith.sitofp %990 : vector<8x128xi32> to vector<8x128xf32>
    %cst_441 = arith.constant 0.949999988 : f32
    %992 = vector.broadcast %cst_441 : f32 to vector<8x128xf32>
    %993 = arith.mulf %992, %972 : vector<8x128xf32>
    %994 = arith.addf %993, %985 : vector<8x128xf32>
    %cst_442 = arith.constant 1.000000e+00 : f32
    %995 = vector.broadcast %cst_442 : f32 to vector<8x128xf32>
    %996 = arith.mulf %991, %995 : vector<8x128xf32>
    %997 = arith.subf %994, %996 : vector<8x128xf32>
    %cst_443 = arith.constant 1.000000e+00 : f32
    %998 = vector.broadcast %cst_443 : f32 to vector<8x128xf32>
    %999 = arith.subf %997, %998 : vector<8x128xf32>
    %cst_444 = arith.constant 0.000000e+00 : f32
    %1000 = vector.broadcast %cst_444 : f32 to vector<8x128xf32>
    %1001 = arith.cmpf ogt, %999, %1000 : vector<8x128xf32>
    %1002 = arith.extui %1001 : vector<8x128xi1> to vector<8x128xi32>
    %1003 = arith.sitofp %1002 : vector<8x128xi32> to vector<8x128xf32>
    %c16_445 = arith.constant 16 : index
    %c0_446 = arith.constant 0 : index
    %c0_447 = arith.constant 0 : index
    %1004 = vector.load %arg6[%c16_445, %c0_446, %c0_447] : memref<30x8x128xf32, #tpu.memory_space<vmem>>, vector<1x8x128xf32>
    %1005 = vector.shape_cast %1004 : vector<1x8x128xf32> to vector<8x128xf32>
    %1006 = vector.shape_cast %1003 : vector<8x128xf32> to vector<1x8x128xf32>
    tpu.vector_store %arg6[%c16_445, %c0_446, %c0_447], %1006 {strides = array<i32>} : memref<30x8x128xf32, #tpu.memory_space<vmem>>, vector<1x8x128xf32>,
    %c16_448 = arith.constant 16 : index
    %c0_449 = arith.constant 0 : index
    %c0_450 = arith.constant 0 : index
    %1007 = vector.load %arg7[%c16_448, %c0_449, %c0_450] : memref<30x8x128xf32, #tpu.memory_space<vmem>>, vector<1x8x128xf32>
    %1008 = vector.shape_cast %1007 : vector<1x8x128xf32> to vector<8x128xf32>
    %1009 = vector.shape_cast %997 : vector<8x128xf32> to vector<1x8x128xf32>
    tpu.vector_store %arg7[%c16_448, %c0_449, %c0_450], %1009 {strides = array<i32>} : memref<30x8x128xf32, #tpu.memory_space<vmem>>, vector<1x8x128xf32>,
    %c136_451 = arith.constant 136 : index
    %c0_452 = arith.constant 0 : index
    %1010 = vector.load %arg9[%c136_451, %c0_452] : memref<240x128xf32, #tpu.memory_space<vmem>>, vector<8x128xf32>
    %cst_453 = arith.constant 1.000000e+00 : f32
    %1011 = vector.broadcast %cst_453 : f32 to vector<8x128xf32>
    %1012 = arith.subf %997, %1011 : vector<8x128xf32>
    %cst_454 = arith.constant 0.000000e+00 : f32
    %1013 = vector.broadcast %cst_454 : f32 to vector<8x128xf32>
    %1014 = arith.cmpf ogt, %1012, %1013 : vector<8x128xf32>
    %1015 = arith.extui %1014 : vector<8x128xi1> to vector<8x128xi32>
    %1016 = arith.sitofp %1015 : vector<8x128xi32> to vector<8x128xf32>
    %cst_455 = arith.constant 0.949999988 : f32
    %1017 = vector.broadcast %cst_455 : f32 to vector<8x128xf32>
    %1018 = arith.mulf %1017, %997 : vector<8x128xf32>
    %1019 = arith.addf %1018, %1010 : vector<8x128xf32>
    %cst_456 = arith.constant 1.000000e+00 : f32
    %1020 = vector.broadcast %cst_456 : f32 to vector<8x128xf32>
    %1021 = arith.mulf %1016, %1020 : vector<8x128xf32>
    %1022 = arith.subf %1019, %1021 : vector<8x128xf32>
    %cst_457 = arith.constant 1.000000e+00 : f32
    %1023 = vector.broadcast %cst_457 : f32 to vector<8x128xf32>
    %1024 = arith.subf %1022, %1023 : vector<8x128xf32>
    %cst_458 = arith.constant 0.000000e+00 : f32
    %1025 = vector.broadcast %cst_458 : f32 to vector<8x128xf32>
    %1026 = arith.cmpf ogt, %1024, %1025 : vector<8x128xf32>
    %1027 = arith.extui %1026 : vector<8x128xi1> to vector<8x128xi32>
    %1028 = arith.sitofp %1027 : vector<8x128xi32> to vector<8x128xf32>
    %c17 = arith.constant 17 : index
    %c0_459 = arith.constant 0 : index
    %c0_460 = arith.constant 0 : index
    %1029 = vector.load %arg6[%c17, %c0_459, %c0_460] : memref<30x8x128xf32, #tpu.memory_space<vmem>>, vector<1x8x128xf32>
    %1030 = vector.shape_cast %1029 : vector<1x8x128xf32> to vector<8x128xf32>
    %1031 = vector.shape_cast %1028 : vector<8x128xf32> to vector<1x8x128xf32>
    tpu.vector_store %arg6[%c17, %c0_459, %c0_460], %1031 {strides = array<i32>} : memref<30x8x128xf32, #tpu.memory_space<vmem>>, vector<1x8x128xf32>,
    %c17_461 = arith.constant 17 : index
    %c0_462 = arith.constant 0 : index
    %c0_463 = arith.constant 0 : index
    %1032 = vector.load %arg7[%c17_461, %c0_462, %c0_463] : memref<30x8x128xf32, #tpu.memory_space<vmem>>, vector<1x8x128xf32>
    %1033 = vector.shape_cast %1032 : vector<1x8x128xf32> to vector<8x128xf32>
    %1034 = vector.shape_cast %1022 : vector<8x128xf32> to vector<1x8x128xf32>
    tpu.vector_store %arg7[%c17_461, %c0_462, %c0_463], %1034 {strides = array<i32>} : memref<30x8x128xf32, #tpu.memory_space<vmem>>, vector<1x8x128xf32>,
    %c144_464 = arith.constant 144 : index
    %c0_465 = arith.constant 0 : index
    %1035 = vector.load %arg9[%c144_464, %c0_465] : memref<240x128xf32, #tpu.memory_space<vmem>>, vector<8x128xf32>
    %cst_466 = arith.constant 1.000000e+00 : f32
    %1036 = vector.broadcast %cst_466 : f32 to vector<8x128xf32>
    %1037 = arith.subf %1022, %1036 : vector<8x128xf32>
    %cst_467 = arith.constant 0.000000e+00 : f32
    %1038 = vector.broadcast %cst_467 : f32 to vector<8x128xf32>
    %1039 = arith.cmpf ogt, %1037, %1038 : vector<8x128xf32>
    %1040 = arith.extui %1039 : vector<8x128xi1> to vector<8x128xi32>
    %1041 = arith.sitofp %1040 : vector<8x128xi32> to vector<8x128xf32>
    %cst_468 = arith.constant 0.949999988 : f32
    %1042 = vector.broadcast %cst_468 : f32 to vector<8x128xf32>
    %1043 = arith.mulf %1042, %1022 : vector<8x128xf32>
    %1044 = arith.addf %1043, %1035 : vector<8x128xf32>
    %cst_469 = arith.constant 1.000000e+00 : f32
    %1045 = vector.broadcast %cst_469 : f32 to vector<8x128xf32>
    %1046 = arith.mulf %1041, %1045 : vector<8x128xf32>
    %1047 = arith.subf %1044, %1046 : vector<8x128xf32>
    %cst_470 = arith.constant 1.000000e+00 : f32
    %1048 = vector.broadcast %cst_470 : f32 to vector<8x128xf32>
    %1049 = arith.subf %1047, %1048 : vector<8x128xf32>
    %cst_471 = arith.constant 0.000000e+00 : f32
    %1050 = vector.broadcast %cst_471 : f32 to vector<8x128xf32>
    %1051 = arith.cmpf ogt, %1049, %1050 : vector<8x128xf32>
    %1052 = arith.extui %1051 : vector<8x128xi1> to vector<8x128xi32>
    %1053 = arith.sitofp %1052 : vector<8x128xi32> to vector<8x128xf32>
    %c18 = arith.constant 18 : index
    %c0_472 = arith.constant 0 : index
    %c0_473 = arith.constant 0 : index
    %1054 = vector.load %arg6[%c18, %c0_472, %c0_473] : memref<30x8x128xf32, #tpu.memory_space<vmem>>, vector<1x8x128xf32>
    %1055 = vector.shape_cast %1054 : vector<1x8x128xf32> to vector<8x128xf32>
    %1056 = vector.shape_cast %1053 : vector<8x128xf32> to vector<1x8x128xf32>
    tpu.vector_store %arg6[%c18, %c0_472, %c0_473], %1056 {strides = array<i32>} : memref<30x8x128xf32, #tpu.memory_space<vmem>>, vector<1x8x128xf32>,
    %c18_474 = arith.constant 18 : index
    %c0_475 = arith.constant 0 : index
    %c0_476 = arith.constant 0 : index
    %1057 = vector.load %arg7[%c18_474, %c0_475, %c0_476] : memref<30x8x128xf32, #tpu.memory_space<vmem>>, vector<1x8x128xf32>
    %1058 = vector.shape_cast %1057 : vector<1x8x128xf32> to vector<8x128xf32>
    %1059 = vector.shape_cast %1047 : vector<8x128xf32> to vector<1x8x128xf32>
    tpu.vector_store %arg7[%c18_474, %c0_475, %c0_476], %1059 {strides = array<i32>} : memref<30x8x128xf32, #tpu.memory_space<vmem>>, vector<1x8x128xf32>,
    %c152_477 = arith.constant 152 : index
    %c0_478 = arith.constant 0 : index
    %1060 = vector.load %arg9[%c152_477, %c0_478] : memref<240x128xf32, #tpu.memory_space<vmem>>, vector<8x128xf32>
    %cst_479 = arith.constant 1.000000e+00 : f32
    %1061 = vector.broadcast %cst_479 : f32 to vector<8x128xf32>
    %1062 = arith.subf %1047, %1061 : vector<8x128xf32>
    %cst_480 = arith.constant 0.000000e+00 : f32
    %1063 = vector.broadcast %cst_480 : f32 to vector<8x128xf32>
    %1064 = arith.cmpf ogt, %1062, %1063 : vector<8x128xf32>
    %1065 = arith.extui %1064 : vector<8x128xi1> to vector<8x128xi32>
    %1066 = arith.sitofp %1065 : vector<8x128xi32> to vector<8x128xf32>
    %cst_481 = arith.constant 0.949999988 : f32
    %1067 = vector.broadcast %cst_481 : f32 to vector<8x128xf32>
    %1068 = arith.mulf %1067, %1047 : vector<8x128xf32>
    %1069 = arith.addf %1068, %1060 : vector<8x128xf32>
    %cst_482 = arith.constant 1.000000e+00 : f32
    %1070 = vector.broadcast %cst_482 : f32 to vector<8x128xf32>
    %1071 = arith.mulf %1066, %1070 : vector<8x128xf32>
    %1072 = arith.subf %1069, %1071 : vector<8x128xf32>
    %cst_483 = arith.constant 1.000000e+00 : f32
    %1073 = vector.broadcast %cst_483 : f32 to vector<8x128xf32>
    %1074 = arith.subf %1072, %1073 : vector<8x128xf32>
    %cst_484 = arith.constant 0.000000e+00 : f32
    %1075 = vector.broadcast %cst_484 : f32 to vector<8x128xf32>
    %1076 = arith.cmpf ogt, %1074, %1075 : vector<8x128xf32>
    %1077 = arith.extui %1076 : vector<8x128xi1> to vector<8x128xi32>
    %1078 = arith.sitofp %1077 : vector<8x128xi32> to vector<8x128xf32>
    %c19 = arith.constant 19 : index
    %c0_485 = arith.constant 0 : index
    %c0_486 = arith.constant 0 : index
    %1079 = vector.load %arg6[%c19, %c0_485, %c0_486] : memref<30x8x128xf32, #tpu.memory_space<vmem>>, vector<1x8x128xf32>
    %1080 = vector.shape_cast %1079 : vector<1x8x128xf32> to vector<8x128xf32>
    %1081 = vector.shape_cast %1078 : vector<8x128xf32> to vector<1x8x128xf32>
    tpu.vector_store %arg6[%c19, %c0_485, %c0_486], %1081 {strides = array<i32>} : memref<30x8x128xf32, #tpu.memory_space<vmem>>, vector<1x8x128xf32>,
    %c19_487 = arith.constant 19 : index
    %c0_488 = arith.constant 0 : index
    %c0_489 = arith.constant 0 : index
    %1082 = vector.load %arg7[%c19_487, %c0_488, %c0_489] : memref<30x8x128xf32, #tpu.memory_space<vmem>>, vector<1x8x128xf32>
    %1083 = vector.shape_cast %1082 : vector<1x8x128xf32> to vector<8x128xf32>
    %1084 = vector.shape_cast %1072 : vector<8x128xf32> to vector<1x8x128xf32>
    tpu.vector_store %arg7[%c19_487, %c0_488, %c0_489], %1084 {strides = array<i32>} : memref<30x8x128xf32, #tpu.memory_space<vmem>>, vector<1x8x128xf32>,
    %c160_490 = arith.constant 160 : index
    %c0_491 = arith.constant 0 : index
    %1085 = vector.load %arg9[%c160_490, %c0_491] : memref<240x128xf32, #tpu.memory_space<vmem>>, vector<8x128xf32>
    %cst_492 = arith.constant 1.000000e+00 : f32
    %1086 = vector.broadcast %cst_492 : f32 to vector<8x128xf32>
    %1087 = arith.subf %1072, %1086 : vector<8x128xf32>
    %cst_493 = arith.constant 0.000000e+00 : f32
    %1088 = vector.broadcast %cst_493 : f32 to vector<8x128xf32>
    %1089 = arith.cmpf ogt, %1087, %1088 : vector<8x128xf32>
    %1090 = arith.extui %1089 : vector<8x128xi1> to vector<8x128xi32>
    %1091 = arith.sitofp %1090 : vector<8x128xi32> to vector<8x128xf32>
    %cst_494 = arith.constant 0.949999988 : f32
    %1092 = vector.broadcast %cst_494 : f32 to vector<8x128xf32>
    %1093 = arith.mulf %1092, %1072 : vector<8x128xf32>
    %1094 = arith.addf %1093, %1085 : vector<8x128xf32>
    %cst_495 = arith.constant 1.000000e+00 : f32
    %1095 = vector.broadcast %cst_495 : f32 to vector<8x128xf32>
    %1096 = arith.mulf %1091, %1095 : vector<8x128xf32>
    %1097 = arith.subf %1094, %1096 : vector<8x128xf32>
    %cst_496 = arith.constant 1.000000e+00 : f32
    %1098 = vector.broadcast %cst_496 : f32 to vector<8x128xf32>
    %1099 = arith.subf %1097, %1098 : vector<8x128xf32>
    %cst_497 = arith.constant 0.000000e+00 : f32
    %1100 = vector.broadcast %cst_497 : f32 to vector<8x128xf32>
    %1101 = arith.cmpf ogt, %1099, %1100 : vector<8x128xf32>
    %1102 = arith.extui %1101 : vector<8x128xi1> to vector<8x128xi32>
    %1103 = arith.sitofp %1102 : vector<8x128xi32> to vector<8x128xf32>
    %c20 = arith.constant 20 : index
    %c0_498 = arith.constant 0 : index
    %c0_499 = arith.constant 0 : index
    %1104 = vector.load %arg6[%c20, %c0_498, %c0_499] : memref<30x8x128xf32, #tpu.memory_space<vmem>>, vector<1x8x128xf32>
    %1105 = vector.shape_cast %1104 : vector<1x8x128xf32> to vector<8x128xf32>
    %1106 = vector.shape_cast %1103 : vector<8x128xf32> to vector<1x8x128xf32>
    tpu.vector_store %arg6[%c20, %c0_498, %c0_499], %1106 {strides = array<i32>} : memref<30x8x128xf32, #tpu.memory_space<vmem>>, vector<1x8x128xf32>,
    %c20_500 = arith.constant 20 : index
    %c0_501 = arith.constant 0 : index
    %c0_502 = arith.constant 0 : index
    %1107 = vector.load %arg7[%c20_500, %c0_501, %c0_502] : memref<30x8x128xf32, #tpu.memory_space<vmem>>, vector<1x8x128xf32>
    %1108 = vector.shape_cast %1107 : vector<1x8x128xf32> to vector<8x128xf32>
    %1109 = vector.shape_cast %1097 : vector<8x128xf32> to vector<1x8x128xf32>
    tpu.vector_store %arg7[%c20_500, %c0_501, %c0_502], %1109 {strides = array<i32>} : memref<30x8x128xf32, #tpu.memory_space<vmem>>, vector<1x8x128xf32>,
    %c168_503 = arith.constant 168 : index
    %c0_504 = arith.constant 0 : index
    %1110 = vector.load %arg9[%c168_503, %c0_504] : memref<240x128xf32, #tpu.memory_space<vmem>>, vector<8x128xf32>
    %cst_505 = arith.constant 1.000000e+00 : f32
    %1111 = vector.broadcast %cst_505 : f32 to vector<8x128xf32>
    %1112 = arith.subf %1097, %1111 : vector<8x128xf32>
    %cst_506 = arith.constant 0.000000e+00 : f32
    %1113 = vector.broadcast %cst_506 : f32 to vector<8x128xf32>
    %1114 = arith.cmpf ogt, %1112, %1113 : vector<8x128xf32>
    %1115 = arith.extui %1114 : vector<8x128xi1> to vector<8x128xi32>
    %1116 = arith.sitofp %1115 : vector<8x128xi32> to vector<8x128xf32>
    %cst_507 = arith.constant 0.949999988 : f32
    %1117 = vector.broadcast %cst_507 : f32 to vector<8x128xf32>
    %1118 = arith.mulf %1117, %1097 : vector<8x128xf32>
    %1119 = arith.addf %1118, %1110 : vector<8x128xf32>
    %cst_508 = arith.constant 1.000000e+00 : f32
    %1120 = vector.broadcast %cst_508 : f32 to vector<8x128xf32>
    %1121 = arith.mulf %1116, %1120 : vector<8x128xf32>
    %1122 = arith.subf %1119, %1121 : vector<8x128xf32>
    %cst_509 = arith.constant 1.000000e+00 : f32
    %1123 = vector.broadcast %cst_509 : f32 to vector<8x128xf32>
    %1124 = arith.subf %1122, %1123 : vector<8x128xf32>
    %cst_510 = arith.constant 0.000000e+00 : f32
    %1125 = vector.broadcast %cst_510 : f32 to vector<8x128xf32>
    %1126 = arith.cmpf ogt, %1124, %1125 : vector<8x128xf32>
    %1127 = arith.extui %1126 : vector<8x128xi1> to vector<8x128xi32>
    %1128 = arith.sitofp %1127 : vector<8x128xi32> to vector<8x128xf32>
    %c21 = arith.constant 21 : index
    %c0_511 = arith.constant 0 : index
    %c0_512 = arith.constant 0 : index
    %1129 = vector.load %arg6[%c21, %c0_511, %c0_512] : memref<30x8x128xf32, #tpu.memory_space<vmem>>, vector<1x8x128xf32>
    %1130 = vector.shape_cast %1129 : vector<1x8x128xf32> to vector<8x128xf32>
    %1131 = vector.shape_cast %1128 : vector<8x128xf32> to vector<1x8x128xf32>
    tpu.vector_store %arg6[%c21, %c0_511, %c0_512], %1131 {strides = array<i32>} : memref<30x8x128xf32, #tpu.memory_space<vmem>>, vector<1x8x128xf32>,
    %c21_513 = arith.constant 21 : index
    %c0_514 = arith.constant 0 : index
    %c0_515 = arith.constant 0 : index
    %1132 = vector.load %arg7[%c21_513, %c0_514, %c0_515] : memref<30x8x128xf32, #tpu.memory_space<vmem>>, vector<1x8x128xf32>
    %1133 = vector.shape_cast %1132 : vector<1x8x128xf32> to vector<8x128xf32>
    %1134 = vector.shape_cast %1122 : vector<8x128xf32> to vector<1x8x128xf32>
    tpu.vector_store %arg7[%c21_513, %c0_514, %c0_515], %1134 {strides = array<i32>} : memref<30x8x128xf32, #tpu.memory_space<vmem>>, vector<1x8x128xf32>,
    %c176_516 = arith.constant 176 : index
    %c0_517 = arith.constant 0 : index
    %1135 = vector.load %arg9[%c176_516, %c0_517] : memref<240x128xf32, #tpu.memory_space<vmem>>, vector<8x128xf32>
    %cst_518 = arith.constant 1.000000e+00 : f32
    %1136 = vector.broadcast %cst_518 : f32 to vector<8x128xf32>
    %1137 = arith.subf %1122, %1136 : vector<8x128xf32>
    %cst_519 = arith.constant 0.000000e+00 : f32
    %1138 = vector.broadcast %cst_519 : f32 to vector<8x128xf32>
    %1139 = arith.cmpf ogt, %1137, %1138 : vector<8x128xf32>
    %1140 = arith.extui %1139 : vector<8x128xi1> to vector<8x128xi32>
    %1141 = arith.sitofp %1140 : vector<8x128xi32> to vector<8x128xf32>
    %cst_520 = arith.constant 0.949999988 : f32
    %1142 = vector.broadcast %cst_520 : f32 to vector<8x128xf32>
    %1143 = arith.mulf %1142, %1122 : vector<8x128xf32>
    %1144 = arith.addf %1143, %1135 : vector<8x128xf32>
    %cst_521 = arith.constant 1.000000e+00 : f32
    %1145 = vector.broadcast %cst_521 : f32 to vector<8x128xf32>
    %1146 = arith.mulf %1141, %1145 : vector<8x128xf32>
    %1147 = arith.subf %1144, %1146 : vector<8x128xf32>
    %cst_522 = arith.constant 1.000000e+00 : f32
    %1148 = vector.broadcast %cst_522 : f32 to vector<8x128xf32>
    %1149 = arith.subf %1147, %1148 : vector<8x128xf32>
    %cst_523 = arith.constant 0.000000e+00 : f32
    %1150 = vector.broadcast %cst_523 : f32 to vector<8x128xf32>
    %1151 = arith.cmpf ogt, %1149, %1150 : vector<8x128xf32>
    %1152 = arith.extui %1151 : vector<8x128xi1> to vector<8x128xi32>
    %1153 = arith.sitofp %1152 : vector<8x128xi32> to vector<8x128xf32>
    %c22 = arith.constant 22 : index
    %c0_524 = arith.constant 0 : index
    %c0_525 = arith.constant 0 : index
    %1154 = vector.load %arg6[%c22, %c0_524, %c0_525] : memref<30x8x128xf32, #tpu.memory_space<vmem>>, vector<1x8x128xf32>
    %1155 = vector.shape_cast %1154 : vector<1x8x128xf32> to vector<8x128xf32>
    %1156 = vector.shape_cast %1153 : vector<8x128xf32> to vector<1x8x128xf32>
    tpu.vector_store %arg6[%c22, %c0_524, %c0_525], %1156 {strides = array<i32>} : memref<30x8x128xf32, #tpu.memory_space<vmem>>, vector<1x8x128xf32>,
    %c22_526 = arith.constant 22 : index
    %c0_527 = arith.constant 0 : index
    %c0_528 = arith.constant 0 : index
    %1157 = vector.load %arg7[%c22_526, %c0_527, %c0_528] : memref<30x8x128xf32, #tpu.memory_space<vmem>>, vector<1x8x128xf32>
    %1158 = vector.shape_cast %1157 : vector<1x8x128xf32> to vector<8x128xf32>
    %1159 = vector.shape_cast %1147 : vector<8x128xf32> to vector<1x8x128xf32>
    tpu.vector_store %arg7[%c22_526, %c0_527, %c0_528], %1159 {strides = array<i32>} : memref<30x8x128xf32, #tpu.memory_space<vmem>>, vector<1x8x128xf32>,
    %c184_529 = arith.constant 184 : index
    %c0_530 = arith.constant 0 : index
    %1160 = vector.load %arg9[%c184_529, %c0_530] : memref<240x128xf32, #tpu.memory_space<vmem>>, vector<8x128xf32>
    %cst_531 = arith.constant 1.000000e+00 : f32
    %1161 = vector.broadcast %cst_531 : f32 to vector<8x128xf32>
    %1162 = arith.subf %1147, %1161 : vector<8x128xf32>
    %cst_532 = arith.constant 0.000000e+00 : f32
    %1163 = vector.broadcast %cst_532 : f32 to vector<8x128xf32>
    %1164 = arith.cmpf ogt, %1162, %1163 : vector<8x128xf32>
    %1165 = arith.extui %1164 : vector<8x128xi1> to vector<8x128xi32>
    %1166 = arith.sitofp %1165 : vector<8x128xi32> to vector<8x128xf32>
    %cst_533 = arith.constant 0.949999988 : f32
    %1167 = vector.broadcast %cst_533 : f32 to vector<8x128xf32>
    %1168 = arith.mulf %1167, %1147 : vector<8x128xf32>
    %1169 = arith.addf %1168, %1160 : vector<8x128xf32>
    %cst_534 = arith.constant 1.000000e+00 : f32
    %1170 = vector.broadcast %cst_534 : f32 to vector<8x128xf32>
    %1171 = arith.mulf %1166, %1170 : vector<8x128xf32>
    %1172 = arith.subf %1169, %1171 : vector<8x128xf32>
    %cst_535 = arith.constant 1.000000e+00 : f32
    %1173 = vector.broadcast %cst_535 : f32 to vector<8x128xf32>
    %1174 = arith.subf %1172, %1173 : vector<8x128xf32>
    %cst_536 = arith.constant 0.000000e+00 : f32
    %1175 = vector.broadcast %cst_536 : f32 to vector<8x128xf32>
    %1176 = arith.cmpf ogt, %1174, %1175 : vector<8x128xf32>
    %1177 = arith.extui %1176 : vector<8x128xi1> to vector<8x128xi32>
    %1178 = arith.sitofp %1177 : vector<8x128xi32> to vector<8x128xf32>
    %c23 = arith.constant 23 : index
    %c0_537 = arith.constant 0 : index
    %c0_538 = arith.constant 0 : index
    %1179 = vector.load %arg6[%c23, %c0_537, %c0_538] : memref<30x8x128xf32, #tpu.memory_space<vmem>>, vector<1x8x128xf32>
    %1180 = vector.shape_cast %1179 : vector<1x8x128xf32> to vector<8x128xf32>
    %1181 = vector.shape_cast %1178 : vector<8x128xf32> to vector<1x8x128xf32>
    tpu.vector_store %arg6[%c23, %c0_537, %c0_538], %1181 {strides = array<i32>} : memref<30x8x128xf32, #tpu.memory_space<vmem>>, vector<1x8x128xf32>,
    %c23_539 = arith.constant 23 : index
    %c0_540 = arith.constant 0 : index
    %c0_541 = arith.constant 0 : index
    %1182 = vector.load %arg7[%c23_539, %c0_540, %c0_541] : memref<30x8x128xf32, #tpu.memory_space<vmem>>, vector<1x8x128xf32>
    %1183 = vector.shape_cast %1182 : vector<1x8x128xf32> to vector<8x128xf32>
    %1184 = vector.shape_cast %1172 : vector<8x128xf32> to vector<1x8x128xf32>
    tpu.vector_store %arg7[%c23_539, %c0_540, %c0_541], %1184 {strides = array<i32>} : memref<30x8x128xf32, #tpu.memory_space<vmem>>, vector<1x8x128xf32>,
    %c192_542 = arith.constant 192 : index
    %c0_543 = arith.constant 0 : index
    %1185 = vector.load %arg9[%c192_542, %c0_543] : memref<240x128xf32, #tpu.memory_space<vmem>>, vector<8x128xf32>
    %cst_544 = arith.constant 1.000000e+00 : f32
    %1186 = vector.broadcast %cst_544 : f32 to vector<8x128xf32>
    %1187 = arith.subf %1172, %1186 : vector<8x128xf32>
    %cst_545 = arith.constant 0.000000e+00 : f32
    %1188 = vector.broadcast %cst_545 : f32 to vector<8x128xf32>
    %1189 = arith.cmpf ogt, %1187, %1188 : vector<8x128xf32>
    %1190 = arith.extui %1189 : vector<8x128xi1> to vector<8x128xi32>
    %1191 = arith.sitofp %1190 : vector<8x128xi32> to vector<8x128xf32>
    %cst_546 = arith.constant 0.949999988 : f32
    %1192 = vector.broadcast %cst_546 : f32 to vector<8x128xf32>
    %1193 = arith.mulf %1192, %1172 : vector<8x128xf32>
    %1194 = arith.addf %1193, %1185 : vector<8x128xf32>
    %cst_547 = arith.constant 1.000000e+00 : f32
    %1195 = vector.broadcast %cst_547 : f32 to vector<8x128xf32>
    %1196 = arith.mulf %1191, %1195 : vector<8x128xf32>
    %1197 = arith.subf %1194, %1196 : vector<8x128xf32>
    %cst_548 = arith.constant 1.000000e+00 : f32
    %1198 = vector.broadcast %cst_548 : f32 to vector<8x128xf32>
    %1199 = arith.subf %1197, %1198 : vector<8x128xf32>
    %cst_549 = arith.constant 0.000000e+00 : f32
    %1200 = vector.broadcast %cst_549 : f32 to vector<8x128xf32>
    %1201 = arith.cmpf ogt, %1199, %1200 : vector<8x128xf32>
    %1202 = arith.extui %1201 : vector<8x128xi1> to vector<8x128xi32>
    %1203 = arith.sitofp %1202 : vector<8x128xi32> to vector<8x128xf32>
    %c24_550 = arith.constant 24 : index
    %c0_551 = arith.constant 0 : index
    %c0_552 = arith.constant 0 : index
    %1204 = vector.load %arg6[%c24_550, %c0_551, %c0_552] : memref<30x8x128xf32, #tpu.memory_space<vmem>>, vector<1x8x128xf32>
    %1205 = vector.shape_cast %1204 : vector<1x8x128xf32> to vector<8x128xf32>
    %1206 = vector.shape_cast %1203 : vector<8x128xf32> to vector<1x8x128xf32>
    tpu.vector_store %arg6[%c24_550, %c0_551, %c0_552], %1206 {strides = array<i32>} : memref<30x8x128xf32, #tpu.memory_space<vmem>>, vector<1x8x128xf32>,
    %c24_553 = arith.constant 24 : index
    %c0_554 = arith.constant 0 : index
    %c0_555 = arith.constant 0 : index
    %1207 = vector.load %arg7[%c24_553, %c0_554, %c0_555] : memref<30x8x128xf32, #tpu.memory_space<vmem>>, vector<1x8x128xf32>
    %1208 = vector.shape_cast %1207 : vector<1x8x128xf32> to vector<8x128xf32>
    %1209 = vector.shape_cast %1197 : vector<8x128xf32> to vector<1x8x128xf32>
    tpu.vector_store %arg7[%c24_553, %c0_554, %c0_555], %1209 {strides = array<i32>} : memref<30x8x128xf32, #tpu.memory_space<vmem>>, vector<1x8x128xf32>,
    %c200_556 = arith.constant 200 : index
    %c0_557 = arith.constant 0 : index
    %1210 = vector.load %arg9[%c200_556, %c0_557] : memref<240x128xf32, #tpu.memory_space<vmem>>, vector<8x128xf32>
    %cst_558 = arith.constant 1.000000e+00 : f32
    %1211 = vector.broadcast %cst_558 : f32 to vector<8x128xf32>
    %1212 = arith.subf %1197, %1211 : vector<8x128xf32>
    %cst_559 = arith.constant 0.000000e+00 : f32
    %1213 = vector.broadcast %cst_559 : f32 to vector<8x128xf32>
    %1214 = arith.cmpf ogt, %1212, %1213 : vector<8x128xf32>
    %1215 = arith.extui %1214 : vector<8x128xi1> to vector<8x128xi32>
    %1216 = arith.sitofp %1215 : vector<8x128xi32> to vector<8x128xf32>
    %cst_560 = arith.constant 0.949999988 : f32
    %1217 = vector.broadcast %cst_560 : f32 to vector<8x128xf32>
    %1218 = arith.mulf %1217, %1197 : vector<8x128xf32>
    %1219 = arith.addf %1218, %1210 : vector<8x128xf32>
    %cst_561 = arith.constant 1.000000e+00 : f32
    %1220 = vector.broadcast %cst_561 : f32 to vector<8x128xf32>
    %1221 = arith.mulf %1216, %1220 : vector<8x128xf32>
    %1222 = arith.subf %1219, %1221 : vector<8x128xf32>
    %cst_562 = arith.constant 1.000000e+00 : f32
    %1223 = vector.broadcast %cst_562 : f32 to vector<8x128xf32>
    %1224 = arith.subf %1222, %1223 : vector<8x128xf32>
    %cst_563 = arith.constant 0.000000e+00 : f32
    %1225 = vector.broadcast %cst_563 : f32 to vector<8x128xf32>
    %1226 = arith.cmpf ogt, %1224, %1225 : vector<8x128xf32>
    %1227 = arith.extui %1226 : vector<8x128xi1> to vector<8x128xi32>
    %1228 = arith.sitofp %1227 : vector<8x128xi32> to vector<8x128xf32>
    %c25 = arith.constant 25 : index
    %c0_564 = arith.constant 0 : index
    %c0_565 = arith.constant 0 : index
    %1229 = vector.load %arg6[%c25, %c0_564, %c0_565] : memref<30x8x128xf32, #tpu.memory_space<vmem>>, vector<1x8x128xf32>
    %1230 = vector.shape_cast %1229 : vector<1x8x128xf32> to vector<8x128xf32>
    %1231 = vector.shape_cast %1228 : vector<8x128xf32> to vector<1x8x128xf32>
    tpu.vector_store %arg6[%c25, %c0_564, %c0_565], %1231 {strides = array<i32>} : memref<30x8x128xf32, #tpu.memory_space<vmem>>, vector<1x8x128xf32>,
    %c25_566 = arith.constant 25 : index
    %c0_567 = arith.constant 0 : index
    %c0_568 = arith.constant 0 : index
    %1232 = vector.load %arg7[%c25_566, %c0_567, %c0_568] : memref<30x8x128xf32, #tpu.memory_space<vmem>>, vector<1x8x128xf32>
    %1233 = vector.shape_cast %1232 : vector<1x8x128xf32> to vector<8x128xf32>
    %1234 = vector.shape_cast %1222 : vector<8x128xf32> to vector<1x8x128xf32>
    tpu.vector_store %arg7[%c25_566, %c0_567, %c0_568], %1234 {strides = array<i32>} : memref<30x8x128xf32, #tpu.memory_space<vmem>>, vector<1x8x128xf32>,
    %c208_569 = arith.constant 208 : index
    %c0_570 = arith.constant 0 : index
    %1235 = vector.load %arg9[%c208_569, %c0_570] : memref<240x128xf32, #tpu.memory_space<vmem>>, vector<8x128xf32>
    %cst_571 = arith.constant 1.000000e+00 : f32
    %1236 = vector.broadcast %cst_571 : f32 to vector<8x128xf32>
    %1237 = arith.subf %1222, %1236 : vector<8x128xf32>
    %cst_572 = arith.constant 0.000000e+00 : f32
    %1238 = vector.broadcast %cst_572 : f32 to vector<8x128xf32>
    %1239 = arith.cmpf ogt, %1237, %1238 : vector<8x128xf32>
    %1240 = arith.extui %1239 : vector<8x128xi1> to vector<8x128xi32>
    %1241 = arith.sitofp %1240 : vector<8x128xi32> to vector<8x128xf32>
    %cst_573 = arith.constant 0.949999988 : f32
    %1242 = vector.broadcast %cst_573 : f32 to vector<8x128xf32>
    %1243 = arith.mulf %1242, %1222 : vector<8x128xf32>
    %1244 = arith.addf %1243, %1235 : vector<8x128xf32>
    %cst_574 = arith.constant 1.000000e+00 : f32
    %1245 = vector.broadcast %cst_574 : f32 to vector<8x128xf32>
    %1246 = arith.mulf %1241, %1245 : vector<8x128xf32>
    %1247 = arith.subf %1244, %1246 : vector<8x128xf32>
    %cst_575 = arith.constant 1.000000e+00 : f32
    %1248 = vector.broadcast %cst_575 : f32 to vector<8x128xf32>
    %1249 = arith.subf %1247, %1248 : vector<8x128xf32>
    %cst_576 = arith.constant 0.000000e+00 : f32
    %1250 = vector.broadcast %cst_576 : f32 to vector<8x128xf32>
    %1251 = arith.cmpf ogt, %1249, %1250 : vector<8x128xf32>
    %1252 = arith.extui %1251 : vector<8x128xi1> to vector<8x128xi32>
    %1253 = arith.sitofp %1252 : vector<8x128xi32> to vector<8x128xf32>
    %c26 = arith.constant 26 : index
    %c0_577 = arith.constant 0 : index
    %c0_578 = arith.constant 0 : index
    %1254 = vector.load %arg6[%c26, %c0_577, %c0_578] : memref<30x8x128xf32, #tpu.memory_space<vmem>>, vector<1x8x128xf32>
    %1255 = vector.shape_cast %1254 : vector<1x8x128xf32> to vector<8x128xf32>
    %1256 = vector.shape_cast %1253 : vector<8x128xf32> to vector<1x8x128xf32>
    tpu.vector_store %arg6[%c26, %c0_577, %c0_578], %1256 {strides = array<i32>} : memref<30x8x128xf32, #tpu.memory_space<vmem>>, vector<1x8x128xf32>,
    %c26_579 = arith.constant 26 : index
    %c0_580 = arith.constant 0 : index
    %c0_581 = arith.constant 0 : index
    %1257 = vector.load %arg7[%c26_579, %c0_580, %c0_581] : memref<30x8x128xf32, #tpu.memory_space<vmem>>, vector<1x8x128xf32>
    %1258 = vector.shape_cast %1257 : vector<1x8x128xf32> to vector<8x128xf32>
    %1259 = vector.shape_cast %1247 : vector<8x128xf32> to vector<1x8x128xf32>
    tpu.vector_store %arg7[%c26_579, %c0_580, %c0_581], %1259 {strides = array<i32>} : memref<30x8x128xf32, #tpu.memory_space<vmem>>, vector<1x8x128xf32>,
    %c216_582 = arith.constant 216 : index
    %c0_583 = arith.constant 0 : index
    %1260 = vector.load %arg9[%c216_582, %c0_583] : memref<240x128xf32, #tpu.memory_space<vmem>>, vector<8x128xf32>
    %cst_584 = arith.constant 1.000000e+00 : f32
    %1261 = vector.broadcast %cst_584 : f32 to vector<8x128xf32>
    %1262 = arith.subf %1247, %1261 : vector<8x128xf32>
    %cst_585 = arith.constant 0.000000e+00 : f32
    %1263 = vector.broadcast %cst_585 : f32 to vector<8x128xf32>
    %1264 = arith.cmpf ogt, %1262, %1263 : vector<8x128xf32>
    %1265 = arith.extui %1264 : vector<8x128xi1> to vector<8x128xi32>
    %1266 = arith.sitofp %1265 : vector<8x128xi32> to vector<8x128xf32>
    %cst_586 = arith.constant 0.949999988 : f32
    %1267 = vector.broadcast %cst_586 : f32 to vector<8x128xf32>
    %1268 = arith.mulf %1267, %1247 : vector<8x128xf32>
    %1269 = arith.addf %1268, %1260 : vector<8x128xf32>
    %cst_587 = arith.constant 1.000000e+00 : f32
    %1270 = vector.broadcast %cst_587 : f32 to vector<8x128xf32>
    %1271 = arith.mulf %1266, %1270 : vector<8x128xf32>
    %1272 = arith.subf %1269, %1271 : vector<8x128xf32>
    %cst_588 = arith.constant 1.000000e+00 : f32
    %1273 = vector.broadcast %cst_588 : f32 to vector<8x128xf32>
    %1274 = arith.subf %1272, %1273 : vector<8x128xf32>
    %cst_589 = arith.constant 0.000000e+00 : f32
    %1275 = vector.broadcast %cst_589 : f32 to vector<8x128xf32>
    %1276 = arith.cmpf ogt, %1274, %1275 : vector<8x128xf32>
    %1277 = arith.extui %1276 : vector<8x128xi1> to vector<8x128xi32>
    %1278 = arith.sitofp %1277 : vector<8x128xi32> to vector<8x128xf32>
    %c27 = arith.constant 27 : index
    %c0_590 = arith.constant 0 : index
    %c0_591 = arith.constant 0 : index
    %1279 = vector.load %arg6[%c27, %c0_590, %c0_591] : memref<30x8x128xf32, #tpu.memory_space<vmem>>, vector<1x8x128xf32>
    %1280 = vector.shape_cast %1279 : vector<1x8x128xf32> to vector<8x128xf32>
    %1281 = vector.shape_cast %1278 : vector<8x128xf32> to vector<1x8x128xf32>
    tpu.vector_store %arg6[%c27, %c0_590, %c0_591], %1281 {strides = array<i32>} : memref<30x8x128xf32, #tpu.memory_space<vmem>>, vector<1x8x128xf32>,
    %c27_592 = arith.constant 27 : index
    %c0_593 = arith.constant 0 : index
    %c0_594 = arith.constant 0 : index
    %1282 = vector.load %arg7[%c27_592, %c0_593, %c0_594] : memref<30x8x128xf32, #tpu.memory_space<vmem>>, vector<1x8x128xf32>
    %1283 = vector.shape_cast %1282 : vector<1x8x128xf32> to vector<8x128xf32>
    %1284 = vector.shape_cast %1272 : vector<8x128xf32> to vector<1x8x128xf32>
    tpu.vector_store %arg7[%c27_592, %c0_593, %c0_594], %1284 {strides = array<i32>} : memref<30x8x128xf32, #tpu.memory_space<vmem>>, vector<1x8x128xf32>,
    %c224_595 = arith.constant 224 : index
    %c0_596 = arith.constant 0 : index
    %1285 = vector.load %arg9[%c224_595, %c0_596] : memref<240x128xf32, #tpu.memory_space<vmem>>, vector<8x128xf32>
    %cst_597 = arith.constant 1.000000e+00 : f32
    %1286 = vector.broadcast %cst_597 : f32 to vector<8x128xf32>
    %1287 = arith.subf %1272, %1286 : vector<8x128xf32>
    %cst_598 = arith.constant 0.000000e+00 : f32
    %1288 = vector.broadcast %cst_598 : f32 to vector<8x128xf32>
    %1289 = arith.cmpf ogt, %1287, %1288 : vector<8x128xf32>
    %1290 = arith.extui %1289 : vector<8x128xi1> to vector<8x128xi32>
    %1291 = arith.sitofp %1290 : vector<8x128xi32> to vector<8x128xf32>
    %cst_599 = arith.constant 0.949999988 : f32
    %1292 = vector.broadcast %cst_599 : f32 to vector<8x128xf32>
    %1293 = arith.mulf %1292, %1272 : vector<8x128xf32>
    %1294 = arith.addf %1293, %1285 : vector<8x128xf32>
    %cst_600 = arith.constant 1.000000e+00 : f32
    %1295 = vector.broadcast %cst_600 : f32 to vector<8x128xf32>
    %1296 = arith.mulf %1291, %1295 : vector<8x128xf32>
    %1297 = arith.subf %1294, %1296 : vector<8x128xf32>
    %cst_601 = arith.constant 1.000000e+00 : f32
    %1298 = vector.broadcast %cst_601 : f32 to vector<8x128xf32>
    %1299 = arith.subf %1297, %1298 : vector<8x128xf32>
    %cst_602 = arith.constant 0.000000e+00 : f32
    %1300 = vector.broadcast %cst_602 : f32 to vector<8x128xf32>
    %1301 = arith.cmpf ogt, %1299, %1300 : vector<8x128xf32>
    %1302 = arith.extui %1301 : vector<8x128xi1> to vector<8x128xi32>
    %1303 = arith.sitofp %1302 : vector<8x128xi32> to vector<8x128xf32>
    %c28 = arith.constant 28 : index
    %c0_603 = arith.constant 0 : index
    %c0_604 = arith.constant 0 : index
    %1304 = vector.load %arg6[%c28, %c0_603, %c0_604] : memref<30x8x128xf32, #tpu.memory_space<vmem>>, vector<1x8x128xf32>
    %1305 = vector.shape_cast %1304 : vector<1x8x128xf32> to vector<8x128xf32>
    %1306 = vector.shape_cast %1303 : vector<8x128xf32> to vector<1x8x128xf32>
    tpu.vector_store %arg6[%c28, %c0_603, %c0_604], %1306 {strides = array<i32>} : memref<30x8x128xf32, #tpu.memory_space<vmem>>, vector<1x8x128xf32>,
    %c28_605 = arith.constant 28 : index
    %c0_606 = arith.constant 0 : index
    %c0_607 = arith.constant 0 : index
    %1307 = vector.load %arg7[%c28_605, %c0_606, %c0_607] : memref<30x8x128xf32, #tpu.memory_space<vmem>>, vector<1x8x128xf32>
    %1308 = vector.shape_cast %1307 : vector<1x8x128xf32> to vector<8x128xf32>
    %1309 = vector.shape_cast %1297 : vector<8x128xf32> to vector<1x8x128xf32>
    tpu.vector_store %arg7[%c28_605, %c0_606, %c0_607], %1309 {strides = array<i32>} : memref<30x8x128xf32, #tpu.memory_space<vmem>>, vector<1x8x128xf32>,
    %c232_608 = arith.constant 232 : index
    %c0_609 = arith.constant 0 : index
    %1310 = vector.load %arg9[%c232_608, %c0_609] : memref<240x128xf32, #tpu.memory_space<vmem>>, vector<8x128xf32>
    %cst_610 = arith.constant 1.000000e+00 : f32
    %1311 = vector.broadcast %cst_610 : f32 to vector<8x128xf32>
    %1312 = arith.subf %1297, %1311 : vector<8x128xf32>
    %cst_611 = arith.constant 0.000000e+00 : f32
    %1313 = vector.broadcast %cst_611 : f32 to vector<8x128xf32>
    %1314 = arith.cmpf ogt, %1312, %1313 : vector<8x128xf32>
    %1315 = arith.extui %1314 : vector<8x128xi1> to vector<8x128xi32>
    %1316 = arith.sitofp %1315 : vector<8x128xi32> to vector<8x128xf32>
    %cst_612 = arith.constant 0.949999988 : f32
    %1317 = vector.broadcast %cst_612 : f32 to vector<8x128xf32>
    %1318 = arith.mulf %1317, %1297 : vector<8x128xf32>
    %1319 = arith.addf %1318, %1310 : vector<8x128xf32>
    %cst_613 = arith.constant 1.000000e+00 : f32
    %1320 = vector.broadcast %cst_613 : f32 to vector<8x128xf32>
    %1321 = arith.mulf %1316, %1320 : vector<8x128xf32>
    %1322 = arith.subf %1319, %1321 : vector<8x128xf32>
    %cst_614 = arith.constant 1.000000e+00 : f32
    %1323 = vector.broadcast %cst_614 : f32 to vector<8x128xf32>
    %1324 = arith.subf %1322, %1323 : vector<8x128xf32>
    %cst_615 = arith.constant 0.000000e+00 : f32
    %1325 = vector.broadcast %cst_615 : f32 to vector<8x128xf32>
    %1326 = arith.cmpf ogt, %1324, %1325 : vector<8x128xf32>
    %1327 = arith.extui %1326 : vector<8x128xi1> to vector<8x128xi32>
    %1328 = arith.sitofp %1327 : vector<8x128xi32> to vector<8x128xf32>
    %c29 = arith.constant 29 : index
    %c0_616 = arith.constant 0 : index
    %c0_617 = arith.constant 0 : index
    %1329 = vector.load %arg6[%c29, %c0_616, %c0_617] : memref<30x8x128xf32, #tpu.memory_space<vmem>>, vector<1x8x128xf32>
    %1330 = vector.shape_cast %1329 : vector<1x8x128xf32> to vector<8x128xf32>
    %1331 = vector.shape_cast %1328 : vector<8x128xf32> to vector<1x8x128xf32>
    tpu.vector_store %arg6[%c29, %c0_616, %c0_617], %1331 {strides = array<i32>} : memref<30x8x128xf32, #tpu.memory_space<vmem>>, vector<1x8x128xf32>,
    %c29_618 = arith.constant 29 : index
    %c0_619 = arith.constant 0 : index
    %c0_620 = arith.constant 0 : index
    %1332 = vector.load %arg7[%c29_618, %c0_619, %c0_620] : memref<30x8x128xf32, #tpu.memory_space<vmem>>, vector<1x8x128xf32>
    %1333 = vector.shape_cast %1332 : vector<1x8x128xf32> to vector<8x128xf32>
    %1334 = vector.shape_cast %1322 : vector<8x128xf32> to vector<1x8x128xf32>
    tpu.vector_store %arg7[%c29_618, %c0_619, %c0_620], %1334 {strides = array<i32>} : memref<30x8x128xf32, #tpu.memory_space<vmem>>, vector<1x8x128xf32>,
    return
  }
  func.func @transform_0(%arg0: i32) -> (i32, i32) {
    %c0_i32 = arith.constant 0 : i32
    %c0_i32_0 = arith.constant 0 : i32
    %c0_i32_1 = arith.constant 0 : i32
    return %c0_i32, %c0_i32_0 : i32, i32
  }
  func.func @transform_1(%arg0: i32) -> (i32, i32) {
    %c0_i32 = arith.constant 0 : i32
    %c0_i32_0 = arith.constant 0 : i32
    %c0_i32_1 = arith.constant 0 : i32
    return %c0_i32, %c0_i32_0 : i32, i32
  }
  func.func @transform_2(%arg0: i32) -> (i32, i32) {
    %c0_i32 = arith.constant 0 : i32
    %c0_i32_0 = arith.constant 0 : i32
    %c0_i32_1 = arith.constant 0 : i32
    return %c0_i32, %c0_i32_0 : i32, i32
  }
  func.func @transform_3(%arg0: i32) -> (i32, i32) {
    %c0_i32 = arith.constant 0 : i32
    %c0_i32_0 = arith.constant 0 : i32
    %c0_i32_1 = arith.constant 0 : i32
    return %c0_i32, %c0_i32_0 : i32, i32
  }
  func.func @transform_4(%arg0: i32) -> (i32, i32) {
    %c0_i32 = arith.constant 0 : i32
    %c0_i32_0 = arith.constant 0 : i32
    %c0_i32_1 = arith.constant 0 : i32
    return %c0_i32, %c0_i32_0 : i32, i32
  }
  func.func @transform_5(%arg0: i32) -> (i32, i32, i32) {
    %c0_i32 = arith.constant 0 : i32
    %c0_i32_0 = arith.constant 0 : i32
    %c0_i32_1 = arith.constant 0 : i32
    %c0_i32_2 = arith.constant 0 : i32
    return %c0_i32, %c0_i32_0, %c0_i32_1 : i32, i32, i32
  }
  func.func @transform_6(%arg0: i32) -> (i32, i32, i32) {
    %c0_i32 = arith.constant 0 : i32
    %c0_i32_0 = arith.constant 0 : i32
    %c0_i32_1 = arith.constant 0 : i32
    %c0_i32_2 = arith.constant 0 : i32
    return %c0_i32, %c0_i32_0, %c0_i32_1 : i32, i32, i32
  }
}

</mosaic_0001>

<llo_original>
// kernel: net_forward.1
$region0: #{net_forward.1}
  #allocation0 [shape = 'u32[]', space=smem, size = 0x4, offset = 0x4, fixed_abs, tag = 'smem constant byte address 0x4 - core index']
  #allocation1 [shape = 'u32[144,128]{1,0:T(1,128)}', space=vmem, size = 0x12000, scoped, tag = 'internal scratch']
  #allocation2 [shape = 'f32[240,128]{1,0:T(8,128)}', space=vmem, size = 0x1e000, scoped, tag = 'scratch operand']
  #allocation3 [shape = 'f32[240,128]{1,0:T(8,128)}', space=vmem, size = 0x1e000, scoped, tag = 'scratch operand']
  %s0 = inlined_call_operand.vmem [shape: f32[8,128], index: 0, kind: input, shape index: {}]
  %s1 = inlined_call_operand.vmem [shape: f32[128,128], index: 1, kind: input, shape index: {}]
  %s2 = inlined_call_operand.vmem [shape: f32[1,128], index: 2, kind: input, shape index: {}]
  %s3 = inlined_call_operand.vmem [shape: f32[128,128], index: 3, kind: input, shape index: {}]
  %s4 = inlined_call_operand.vmem [shape: f32[1,128], index: 4, kind: input, shape index: {}]
  %s5 = inlined_call_operand.vmem [shape: f32[30,8,128], index: 5, kind: output, shape index: {0}]
  %s6 = inlined_call_operand.vmem [shape: f32[30,8,128], index: 6, kind: output, shape index: {1}]
  %7 = xla_tuple %s5, %s6
  %s8 = sld [smem:[#allocation0]]
  $region38: #{net_forward.1} parent=0
    _
  %s10 = ssub.s32 1, %s8
  %s11 = scalar_select 0, %s10, %s8
  // Predicated region
  $region2: #{net_forward.1} parent=0 // pred_check
    _
  $region3: #{net_forward.1} parent=0 // pred_check_branch
    %13 = sbr.rel (0) target = $region5
  $region4: #{net_forward.1} parent=0 // pred_region
    _
  $region5: #{net_forward.1} parent=0 // pred_fallthru
    _
  // Predicated region
  $region6: #{net_forward.1} parent=0 // pred_check
    _
  $region7: #{net_forward.1} parent=0 // pred_check_branch
    %15 = sbr.rel (0) target = $region9
  $region8: #{net_forward.1} parent=0 // pred_region
    _
  $region9: #{net_forward.1} parent=0 // pred_fallthru
    _
  // Predicated region
  $region10: #{net_forward.1} parent=0 // pred_check
    _
  $region11: #{net_forward.1} parent=0 // pred_check_branch
    %17 = sbr.rel (0) target = $region13
  $region12: #{net_forward.1} parent=0 // pred_region
    _
  $region13: #{net_forward.1} parent=0 // pred_fallthru
    _
  // Predicated region
  $region14: #{net_forward.1} parent=0 // pred_check
    _
  $region15: #{net_forward.1} parent=0 // pred_check_branch
    %19 = sbr.rel (0) target = $region17
  $region16: #{net_forward.1} parent=0 // pred_region
    _
  $region17: #{net_forward.1} parent=0 // pred_fallthru
    _
  // Predicated region
  $region18: #{net_forward.1} parent=0 // pred_check
    _
  $region19: #{net_forward.1} parent=0 // pred_check_branch
    %21 = sbr.rel (0) target = $region21
  $region20: #{net_forward.1} parent=0 // pred_region
    _
  $region21: #{net_forward.1} parent=0 // pred_fallthru
    _
  %v22 = vld [vmem:[%s0] sm:$0xff]
  %v23 = vld [vmem:[%s1] sm:$0xff]
  %v24 = vld [vmem:[%s1 + $0x8] sm:$0xff]
  %v25 = vld [vmem:[%s1 + $0x10] sm:$0xff]
  %v26 = vld [vmem:[%s1 + $0x18] sm:$0xff]
  %v27 = vld [vmem:[%s1 + $0x20] sm:$0xff]
  %v28 = vld [vmem:[%s1 + $0x28] sm:$0xff]
  %v29 = vld [vmem:[%s1 + $0x30] sm:$0xff]
  %v30 = vld [vmem:[%s1 + $0x38] sm:$0xff]
  %v31 = vld [vmem:[%s1 + $0x40] sm:$0xff]
  %v32 = vld [vmem:[%s1 + $0x48] sm:$0xff]
  %v33 = vld [vmem:[%s1 + $0x50] sm:$0xff]
  %v34 = vld [vmem:[%s1 + $0x58] sm:$0xff]
  %v35 = vld [vmem:[%s1 + $0x60] sm:$0xff]
  %v36 = vld [vmem:[%s1 + $0x68] sm:$0xff]
  %v37 = vld [vmem:[%s1 + $0x70] sm:$0xff]
  %v38 = vld [vmem:[%s1 + $0x78] sm:$0xff]
  %v39 = vld [vmem:[%s2] sm:$0x1]
  %v41 = vlaneseq
  %v42 = vshrl.u32 %v41, 7
  %v43 = vsub.s32 0, %v42
  %v44 = vrot.slane %v39, %v43
  %46 = vmatprep.subr.mxu0 0.0
  %47 = vmatpush1.msra.mxu0 %v23
  %48 = vmatprep.subr.mxu0 0.0
  %49 = vmatpush1.msra.mxu0 %v24
  %50 = vmatprep.subr.mxu0 0.0
  %51 = vmatpush1.msra.mxu0 %v25
  %52 = vmatprep.subr.mxu0 0.0
  %53 = vmatpush1.msra.mxu0 %v26
  %54 = vmatprep.subr.mxu0 0.0
  %55 = vmatpush1.msra.mxu0 %v27
  %56 = vmatprep.subr.mxu0 0.0
  %57 = vmatpush1.msra.mxu0 %v28
  %58 = vmatprep.subr.mxu0 0.0
  %59 = vmatpush1.msra.mxu0 %v29
  %60 = vmatprep.subr.mxu0 0.0
  %61 = vmatpush1.msra.mxu0 %v30
  %62 = vmatprep.subr.mxu0 0.0
  %63 = vmatpush1.msra.mxu0 %v31
  %64 = vmatprep.subr.mxu0 0.0
  %65 = vmatpush1.msra.mxu0 %v32
  %66 = vmatprep.subr.mxu0 0.0
  %67 = vmatpush1.msra.mxu0 %v33
  %68 = vmatprep.subr.mxu0 0.0
  %69 = vmatpush1.msra.mxu0 %v34
  %70 = vmatprep.subr.mxu0 0.0
  %71 = vmatpush1.msra.mxu0 %v35
  %72 = vmatprep.subr.mxu0 0.0
  %73 = vmatpush1.msra.mxu0 %v36
  %74 = vmatprep.subr.mxu0 0.0
  %75 = vmatpush1.msra.mxu0 %v37
  %76 = vmatprep.subr.mxu0 0.0
  %77 = vmatpush1.msra.mxu0 %v38
  %78 = vmatprep.subr.mxu0 0.0
  %79 = vmatpush1.msra.mxu0 0.0
  %80 = vmatprep.subr.mxu0 0.0
  %81 = vmatpush1.msra.mxu0 0.0
  %82 = vmatprep.subr.mxu0 0.0
  %83 = vmatpush1.msra.mxu0 0.0
  %84 = vmatprep.subr.mxu0 0.0
  %85 = vmatpush1.msra.mxu0 0.0
  %86 = vmatprep.subr.mxu0 0.0
  %87 = vmatpush1.msra.mxu0 0.0
  %88 = vmatprep.subr.mxu0 0.0
  %89 = vmatpush1.msra.mxu0 0.0
  %90 = vmatprep.subr.mxu0 0.0
  %91 = vmatpush1.msra.mxu0 0.0
  %92 = vmatprep.subr.mxu0 0.0
  %93 = vmatpush1.msra.mxu0 0.0
  %94 = vmatprep.subr.mxu0 0.0
  %95 = vmatpush1.msra.mxu0 0.0
  %96 = vmatprep.subr.mxu0 0.0
  %97 = vmatpush1.msra.mxu0 0.0
  %98 = vmatprep.subr.mxu0 0.0
  %99 = vmatpush1.msra.mxu0 0.0
  %100 = vmatprep.subr.mxu0 0.0
  %101 = vmatpush1.msra.mxu0 0.0
  %102 = vmatprep.subr.mxu0 0.0
  %103 = vmatpush1.msra.mxu0 0.0
  %104 = vmatprep.subr.mxu0 0.0
  %105 = vmatpush1.msra.mxu0 0.0
  %106 = vmatprep.subr.mxu0 0.0
  %107 = vmatpush1.msra.mxu0 0.0
  %108 = vmatprep.subr.mxu0 0.0
  %109 = vmatpush1.msra.mxu0 0.0
  %110 = vmatprep.mubr.f32.mxu0 0.0
  %111 = vmatmul.mubr.f32.gmra.mrb[0].mxu0 %v22
  %v112 = vpop.f32.mrb[0].mxu0
  %v113 = vadd.f32 %v44, %v112
  %v114 = vpop.f32.mrb[0].mxu0
  %115 = vdwg.mxu0
  %vm116 = vcmp.gt.f32.partialorder -1.0, 0.0
  %v117 = vsel %vm116, 1, 0
  %v118 = vcvt.s32.f32 %v117
  %v119 = vadd.f32 %v113, 0.0
  %v120 = vsub.f32 %v119, %v118
  %v121 = vsub.f32 %v120, 1.0
  %vm122 = vcmp.gt.f32.partialorder %v121, 0.0
  %v123 = vsel %vm122, 1, 0
  %v124 = vcvt.s32.f32 %v123
  %125 = vst [vmem:[#allocation2] sm:$0xff] %v124
  %v126 = vmul.f32 %v120, 0.95
  %v127 = vadd.f32 %v126, %v113
  %v128 = vsub.f32 %v127, %v124
  %v129 = vsub.f32 %v128, 1.0
  %vm130 = vcmp.gt.f32.partialorder %v129, 0.0
  %v131 = vsel %vm130, 1, 0
  %v132 = vcvt.s32.f32 %v131
  %133 = vst [vmem:[#allocation2 + $0x8] sm:$0xff] %v132
  %v134 = vmul.f32 %v128, 0.95
  %v135 = vadd.f32 %v134, %v113
  %v136 = vsub.f32 %v135, %v132
  %v137 = vsub.f32 %v136, 1.0
  %vm138 = vcmp.gt.f32.partialorder %v137, 0.0
  %v139 = vsel %vm138, 1, 0
  %v140 = vcvt.s32.f32 %v139
  %141 = vst [vmem:[#allocation2 + $0x10] sm:$0xff] %v140
  %v142 = vmul.f32 %v136, 0.95
  %v143 = vadd.f32 %v142, %v113
  %v144 = vsub.f32 %v143, %v140
  %v145 = vsub.f32 %v144, 1.0
  %vm146 = vcmp.gt.f32.partialorder %v145, 0.0
  %v147 = vsel %vm146, 1, 0
  %v148 = vcvt.s32.f32 %v147
  %149 = vst [vmem:[#allocation2 + $0x18] sm:$0xff] %v148
  %v150 = vmul.f32 %v144, 0.95
  %v151 = vadd.f32 %v150, %v113
  %v152 = vsub.f32 %v151, %v148
  %v153 = vsub.f32 %v152, 1.0
  %vm154 = vcmp.gt.f32.partialorder %v153, 0.0
  %v155 = vsel %vm154, 1, 0
  %v156 = vcvt.s32.f32 %v155
  %157 = vst [vmem:[#allocation2 + $0x20] sm:$0xff] %v156
  %v158 = vmul.f32 %v152, 0.95
  %v159 = vadd.f32 %v158, %v113
  %v160 = vsub.f32 %v159, %v156
  %v161 = vsub.f32 %v160, 1.0
  %vm162 = vcmp.gt.f32.partialorder %v161, 0.0
  %v163 = vsel %vm162, 1, 0
  %v164 = vcvt.s32.f32 %v163
  %165 = vst [vmem:[#allocation2 + $0x28] sm:$0xff] %v164
  %v166 = vmul.f32 %v160, 0.95
  %v167 = vadd.f32 %v166, %v113
  %v168 = vsub.f32 %v167, %v164
  %v169 = vsub.f32 %v168, 1.0
  %vm170 = vcmp.gt.f32.partialorder %v169, 0.0
  %v171 = vsel %vm170, 1, 0
  %v172 = vcvt.s32.f32 %v171
  %173 = vst [vmem:[#allocation2 + $0x30] sm:$0xff] %v172
  %v174 = vmul.f32 %v168, 0.95
  %v175 = vadd.f32 %v174, %v113
  %v176 = vsub.f32 %v175, %v172
  %v177 = vsub.f32 %v176, 1.0
  %vm178 = vcmp.gt.f32.partialorder %v177, 0.0
  %v179 = vsel %vm178, 1, 0
  %v180 = vcvt.s32.f32 %v179
  %181 = vst [vmem:[#allocation2 + $0x38] sm:$0xff] %v180
  %v182 = vmul.f32 %v176, 0.95
  %v183 = vadd.f32 %v182, %v113
  %v184 = vsub.f32 %v183, %v180
  %v185 = vsub.f32 %v184, 1.0
  %vm186 = vcmp.gt.f32.partialorder %v185, 0.0
  %v187 = vsel %vm186, 1, 0
  %v188 = vcvt.s32.f32 %v187
  %189 = vst [vmem:[#allocation2 + $0x40] sm:$0xff] %v188
  %v190 = vmul.f32 %v184, 0.95
  %v191 = vadd.f32 %v190, %v113
  %v192 = vsub.f32 %v191, %v188
  %v193 = vsub.f32 %v192, 1.0
  %vm194 = vcmp.gt.f32.partialorder %v193, 0.0
  %v195 = vsel %vm194, 1, 0
  %v196 = vcvt.s32.f32 %v195
  %197 = vst [vmem:[#allocation2 + $0x48] sm:$0xff] %v196
  %v198 = vmul.f32 %v192, 0.95
  %v199 = vadd.f32 %v198, %v113
  %v200 = vsub.f32 %v199, %v196
  %v201 = vsub.f32 %v200, 1.0
  %vm202 = vcmp.gt.f32.partialorder %v201, 0.0
  %v203 = vsel %vm202, 1, 0
  %v204 = vcvt.s32.f32 %v203
  %205 = vst [vmem:[#allocation2 + $0x50] sm:$0xff] %v204
  %v206 = vmul.f32 %v200, 0.95
  %v207 = vadd.f32 %v206, %v113
  %v208 = vsub.f32 %v207, %v204
  %v209 = vsub.f32 %v208, 1.0
  %vm210 = vcmp.gt.f32.partialorder %v209, 0.0
  %v211 = vsel %vm210, 1, 0
  %v212 = vcvt.s32.f32 %v211
  %213 = vst [vmem:[#allocation2 + $0x58] sm:$0xff] %v212
  %v214 = vmul.f32 %v208, 0.95
  %v215 = vadd.f32 %v214, %v113
  %v216 = vsub.f32 %v215, %v212
  %v217 = vsub.f32 %v216, 1.0
  %vm218 = vcmp.gt.f32.partialorder %v217, 0.0
  %v219 = vsel %vm218, 1, 0
  %v220 = vcvt.s32.f32 %v219
  %221 = vst [vmem:[#allocation2 + $0x60] sm:$0xff] %v220
  %v222 = vmul.f32 %v216, 0.95
  %v223 = vadd.f32 %v222, %v113
  %v224 = vsub.f32 %v223, %v220
  %v225 = vsub.f32 %v224, 1.0
  %vm226 = vcmp.gt.f32.partialorder %v225, 0.0
  %v227 = vsel %vm226, 1, 0
  %v228 = vcvt.s32.f32 %v227
  %229 = vst [vmem:[#allocation2 + $0x68] sm:$0xff] %v228
  %v230 = vmul.f32 %v224, 0.95
  %v231 = vadd.f32 %v230, %v113
  %v232 = vsub.f32 %v231, %v228
  %v233 = vsub.f32 %v232, 1.0
  %vm234 = vcmp.gt.f32.partialorder %v233, 0.0
  %v235 = vsel %vm234, 1, 0
  %v236 = vcvt.s32.f32 %v235
  %237 = vst [vmem:[#allocation2 + $0x70] sm:$0xff] %v236
  %v238 = vmul.f32 %v232, 0.95
  %v239 = vadd.f32 %v238, %v113
  %v240 = vsub.f32 %v239, %v236
  %v241 = vsub.f32 %v240, 1.0
  %vm242 = vcmp.gt.f32.partialorder %v241, 0.0
  %v243 = vsel %vm242, 1, 0
  %v244 = vcvt.s32.f32 %v243
  %245 = vst [vmem:[#allocation2 + $0x78] sm:$0xff] %v244
  %v246 = vmul.f32 %v240, 0.95
  %v247 = vadd.f32 %v246, %v113
  %v248 = vsub.f32 %v247, %v244
  %v249 = vsub.f32 %v248, 1.0
  %vm250 = vcmp.gt.f32.partialorder %v249, 0.0
  %v251 = vsel %vm250, 1, 0
  %v252 = vcvt.s32.f32 %v251
  %253 = vst [vmem:[#allocation2 + $0x80] sm:$0xff] %v252
  %v254 = vmul.f32 %v248, 0.95
  %v255 = vadd.f32 %v254, %v113
  %v256 = vsub.f32 %v255, %v252
  %v257 = vsub.f32 %v256, 1.0
  %vm258 = vcmp.gt.f32.partialorder %v257, 0.0
  %v259 = vsel %vm258, 1, 0
  %v260 = vcvt.s32.f32 %v259
  %261 = vst [vmem:[#allocation2 + $0x88] sm:$0xff] %v260
  %v262 = vmul.f32 %v256, 0.95
  %v263 = vadd.f32 %v262, %v113
  %v264 = vsub.f32 %v263, %v260
  %v265 = vsub.f32 %v264, 1.0
  %vm266 = vcmp.gt.f32.partialorder %v265, 0.0
  %v267 = vsel %vm266, 1, 0
  %v268 = vcvt.s32.f32 %v267
  %269 = vst [vmem:[#allocation2 + $0x90] sm:$0xff] %v268
  %v270 = vmul.f32 %v264, 0.95
  %v271 = vadd.f32 %v270, %v113
  %v272 = vsub.f32 %v271, %v268
  %v273 = vsub.f32 %v272, 1.0
  %vm274 = vcmp.gt.f32.partialorder %v273, 0.0
  %v275 = vsel %vm274, 1, 0
  %v276 = vcvt.s32.f32 %v275
  %277 = vst [vmem:[#allocation2 + $0x98] sm:$0xff] %v276
  %v278 = vmul.f32 %v272, 0.95
  %v279 = vadd.f32 %v278, %v113
  %v280 = vsub.f32 %v279, %v276
  %v281 = vsub.f32 %v280, 1.0
  %vm282 = vcmp.gt.f32.partialorder %v281, 0.0
  %v283 = vsel %vm282, 1, 0
  %v284 = vcvt.s32.f32 %v283
  %285 = vst [vmem:[#allocation2 + $0xa0] sm:$0xff] %v284
  %v286 = vmul.f32 %v280, 0.95
  %v287 = vadd.f32 %v286, %v113
  %v288 = vsub.f32 %v287, %v284
  %v289 = vsub.f32 %v288, 1.0
  %vm290 = vcmp.gt.f32.partialorder %v289, 0.0
  %v291 = vsel %vm290, 1, 0
  %v292 = vcvt.s32.f32 %v291
  %293 = vst [vmem:[#allocation2 + $0xa8] sm:$0xff] %v292
  %v294 = vmul.f32 %v288, 0.95
  %v295 = vadd.f32 %v294, %v113
  %v296 = vsub.f32 %v295, %v292
  %v297 = vsub.f32 %v296, 1.0
  %vm298 = vcmp.gt.f32.partialorder %v297, 0.0
  %v299 = vsel %vm298, 1, 0
  %v300 = vcvt.s32.f32 %v299
  %301 = vst [vmem:[#allocation2 + $0xb0] sm:$0xff] %v300
  %v302 = vmul.f32 %v296, 0.95
  %v303 = vadd.f32 %v302, %v113
  %v304 = vsub.f32 %v303, %v300
  %v305 = vsub.f32 %v304, 1.0
  %vm306 = vcmp.gt.f32.partialorder %v305, 0.0
  %v307 = vsel %vm306, 1, 0
  %v308 = vcvt.s32.f32 %v307
  %309 = vst [vmem:[#allocation2 + $0xb8] sm:$0xff] %v308
  %v310 = vmul.f32 %v304, 0.95
  %v311 = vadd.f32 %v310, %v113
  %v312 = vsub.f32 %v311, %v308
  %v313 = vsub.f32 %v312, 1.0
  %vm314 = vcmp.gt.f32.partialorder %v313, 0.0
  %v315 = vsel %vm314, 1, 0
  %v316 = vcvt.s32.f32 %v315
  %317 = vst [vmem:[#allocation2 + $0xc0] sm:$0xff] %v316
  %v318 = vmul.f32 %v312, 0.95
  %v319 = vadd.f32 %v318, %v113
  %v320 = vsub.f32 %v319, %v316
  %v321 = vsub.f32 %v320, 1.0
  %vm322 = vcmp.gt.f32.partialorder %v321, 0.0
  %v323 = vsel %vm322, 1, 0
  %v324 = vcvt.s32.f32 %v323
  %325 = vst [vmem:[#allocation2 + $0xc8] sm:$0xff] %v324
  %v326 = vmul.f32 %v320, 0.95
  %v327 = vadd.f32 %v326, %v113
  %v328 = vsub.f32 %v327, %v324
  %v329 = vsub.f32 %v328, 1.0
  %vm330 = vcmp.gt.f32.partialorder %v329, 0.0
  %v331 = vsel %vm330, 1, 0
  %v332 = vcvt.s32.f32 %v331
  %333 = vst [vmem:[#allocation2 + $0xd0] sm:$0xff] %v332
  %v334 = vmul.f32 %v328, 0.95
  %v335 = vadd.f32 %v334, %v113
  %v336 = vsub.f32 %v335, %v332
  %v337 = vsub.f32 %v336, 1.0
  %vm338 = vcmp.gt.f32.partialorder %v337, 0.0
  %v339 = vsel %vm338, 1, 0
  %v340 = vcvt.s32.f32 %v339
  %341 = vst [vmem:[#allocation2 + $0xd8] sm:$0xff] %v340
  %v342 = vmul.f32 %v336, 0.95
  %v343 = vadd.f32 %v342, %v113
  %v344 = vsub.f32 %v343, %v340
  %v345 = vsub.f32 %v344, 1.0
  %vm346 = vcmp.gt.f32.partialorder %v345, 0.0
  %v347 = vsel %vm346, 1, 0
  %v348 = vcvt.s32.f32 %v347
  %349 = vst [vmem:[#allocation2 + $0xe0] sm:$0xff] %v348
  %v350 = vmul.f32 %v344, 0.95
  %v351 = vadd.f32 %v350, %v113
  %v352 = vsub.f32 %v351, %v348
  %v353 = vsub.f32 %v352, 1.0
  %vm354 = vcmp.gt.f32.partialorder %v353, 0.0
  %v355 = vsel %vm354, 1, 0
  %v356 = vcvt.s32.f32 %v355
  %357 = vst [vmem:[#allocation2 + $0xe8] sm:$0xff] %v356
  %v358 = vld [vmem:[#allocation2] sm:$0xff]
  %v359 = vld [vmem:[#allocation2 + $0x8] sm:$0xff]
  %v360 = vld [vmem:[#allocation2 + $0x10] sm:$0xff]
  %v361 = vld [vmem:[#allocation2 + $0x18] sm:$0xff]
  %v362 = vld [vmem:[#allocation2 + $0x20] sm:$0xff]
  %v363 = vld [vmem:[#allocation2 + $0x28] sm:$0xff]
  %v364 = vld [vmem:[#allocation2 + $0x30] sm:$0xff]
  %v365 = vld [vmem:[#allocation2 + $0x38] sm:$0xff]
  %v366 = vld [vmem:[#allocation2 + $0x40] sm:$0xff]
  %v367 = vld [vmem:[#allocation2 + $0x48] sm:$0xff]
  %v368 = vld [vmem:[#allocation2 + $0x50] sm:$0xff]
  %v369 = vld [vmem:[#allocation2 + $0x58] sm:$0xff]
  %v370 = vld [vmem:[#allocation2 + $0x60] sm:$0xff]
  %v371 = vld [vmem:[#allocation2 + $0x68] sm:$0xff]
  %v372 = vld [vmem:[#allocation2 + $0x70] sm:$0xff]
  %v373 = vld [vmem:[#allocation2 + $0x78] sm:$0xff]
  %v374 = vld [vmem:[#allocation2 + $0x80] sm:$0xff]
  %v375 = vld [vmem:[#allocation2 + $0x88] sm:$0xff]
  %v376 = vld [vmem:[#allocation2 + $0x90] sm:$0xff]
  %v377 = vld [vmem:[#allocation2 + $0x98] sm:$0xff]
  %v378 = vld [vmem:[#allocation2 + $0xa0] sm:$0xff]
  %v379 = vld [vmem:[#allocation2 + $0xa8] sm:$0xff]
  %v380 = vld [vmem:[#allocation2 + $0xb0] sm:$0xff]
  %v381 = vld [vmem:[#allocation2 + $0xb8] sm:$0xff]
  %v382 = vld [vmem:[#allocation2 + $0xc0] sm:$0xff]
  %v383 = vld [vmem:[#allocation2 + $0xc8] sm:$0xff]
  %v384 = vld [vmem:[#allocation2 + $0xd0] sm:$0xff]
  %v385 = vld [vmem:[#allocation2 + $0xd8] sm:$0xff]
  %v386 = vld [vmem:[#allocation2 + $0xe0] sm:$0xff]
  %v387 = vld [vmem:[#allocation2 + $0xe8] sm:$0xff]
  %v388 = vld [vmem:[%s3] sm:$0xff]
  %v389 = vld [vmem:[%s3 + $0x8] sm:$0xff]
  %v390 = vld [vmem:[%s3 + $0x10] sm:$0xff]
  %v391 = vld [vmem:[%s3 + $0x18] sm:$0xff]
  %v392 = vld [vmem:[%s3 + $0x20] sm:$0xff]
  %v393 = vld [vmem:[%s3 + $0x28] sm:$0xff]
  %v394 = vld [vmem:[%s3 + $0x30] sm:$0xff]
  %v395 = vld [vmem:[%s3 + $0x38] sm:$0xff]
  %v396 = vld [vmem:[%s3 + $0x40] sm:$0xff]
  %v397 = vld [vmem:[%s3 + $0x48] sm:$0xff]
  %v398 = vld [vmem:[%s3 + $0x50] sm:$0xff]
  %v399 = vld [vmem:[%s3 + $0x58] sm:$0xff]
  %v400 = vld [vmem:[%s3 + $0x60] sm:$0xff]
  %v401 = vld [vmem:[%s3 + $0x68] sm:$0xff]
  %v402 = vld [vmem:[%s3 + $0x70] sm:$0xff]
  %v403 = vld [vmem:[%s3 + $0x78] sm:$0xff]
  %v404 = vld [vmem:[%s4] sm:$0x1]
  %v406 = vlaneseq
  %v407 = vshrl.u32 %v406, 7
  %v408 = vsub.s32 0, %v407
  %v409 = vrot.slane %v404, %v408
  %411 = vmatprep.subr.mxu0 0.0
  %412 = vmatpush1.msra.mxu0 %v388
  %413 = vmatprep.subr.mxu0 0.0
  %414 = vmatpush1.msra.mxu0 %v389
  %415 = vmatprep.subr.mxu0 0.0
  %416 = vmatpush1.msra.mxu0 %v390
  %417 = vmatprep.subr.mxu0 0.0
  %418 = vmatpush1.msra.mxu0 %v391
  %419 = vmatprep.subr.mxu0 0.0
  %420 = vmatpush1.msra.mxu0 %v392
  %421 = vmatprep.subr.mxu0 0.0
  %422 = vmatpush1.msra.mxu0 %v393
  %423 = vmatprep.subr.mxu0 0.0
  %424 = vmatpush1.msra.mxu0 %v394
  %425 = vmatprep.subr.mxu0 0.0
  %426 = vmatpush1.msra.mxu0 %v395
  %427 = vmatprep.subr.mxu0 0.0
  %428 = vmatpush1.msra.mxu0 %v396
  %429 = vmatprep.subr.mxu0 0.0
  %430 = vmatpush1.msra.mxu0 %v397
  %431 = vmatprep.subr.mxu0 0.0
  %432 = vmatpush1.msra.mxu0 %v398
  %433 = vmatprep.subr.mxu0 0.0
  %434 = vmatpush1.msra.mxu0 %v399
  %435 = vmatprep.subr.mxu0 0.0
  %436 = vmatpush1.msra.mxu0 %v400
  %437 = vmatprep.subr.mxu0 0.0
  %438 = vmatpush1.msra.mxu0 %v401
  %439 = vmatprep.subr.mxu0 0.0
  %440 = vmatpush1.msra.mxu0 %v402
  %441 = vmatprep.subr.mxu0 0.0
  %442 = vmatpush1.msra.mxu0 %v403
  %443 = vmatprep.subr.mxu0 0.0
  %444 = vmatpush1.msra.mxu0 0.0
  %445 = vmatprep.subr.mxu0 0.0
  %446 = vmatpush1.msra.mxu0 0.0
  %447 = vmatprep.subr.mxu0 0.0
  %448 = vmatpush1.msra.mxu0 0.0
  %449 = vmatprep.subr.mxu0 0.0
  %450 = vmatpush1.msra.mxu0 0.0
  %451 = vmatprep.subr.mxu0 0.0
  %452 = vmatpush1.msra.mxu0 0.0
  %453 = vmatprep.subr.mxu0 0.0
  %454 = vmatpush1.msra.mxu0 0.0
  %455 = vmatprep.subr.mxu0 0.0
  %456 = vmatpush1.msra.mxu0 0.0
  %457 = vmatprep.subr.mxu0 0.0
  %458 = vmatpush1.msra.mxu0 0.0
  %459 = vmatprep.subr.mxu0 0.0
  %460 = vmatpush1.msra.mxu0 0.0
  %461 = vmatprep.subr.mxu0 0.0
  %462 = vmatpush1.msra.mxu0 0.0
  %463 = vmatprep.subr.mxu0 0.0
  %464 = vmatpush1.msra.mxu0 0.0
  %465 = vmatprep.subr.mxu0 0.0
  %466 = vmatpush1.msra.mxu0 0.0
  %467 = vmatprep.subr.mxu0 0.0
  %468 = vmatpush1.msra.mxu0 0.0
  %469 = vmatprep.subr.mxu0 0.0
  %470 = vmatpush1.msra.mxu0 0.0
  %471 = vmatprep.subr.mxu0 0.0
  %472 = vmatpush1.msra.mxu0 0.0
  %473 = vmatprep.subr.mxu0 0.0
  %474 = vmatpush1.msra.mxu0 0.0
  %475 = vmatprep.mubr.f32.mxu0 0.0
  %476 = vmatmul.mubr.f32.gmra.mrb[0].mxu0 %v358
  %v477 = vpop.f32.mrb[0].mxu0
  %v478 = vadd.f32 %v409, %v477
  %v479 = vpop.f32.mrb[0].mxu0
  %480 = vmatprep.mubr.f32.mxu0 0.0
  %481 = vmatmul.mubr.f32.gmra.mrb[0].mxu0 %v359
  %v482 = vpop.f32.mrb[0].mxu0
  %v483 = vadd.f32 %v409, %v482
  %v484 = vpop.f32.mrb[0].mxu0
  %485 = vmatprep.mubr.f32.mxu0 0.0
  %486 = vmatmul.mubr.f32.gmra.mrb[0].mxu0 %v360
  %v487 = vpop.f32.mrb[0].mxu0
  %v488 = vadd.f32 %v409, %v487
  %v489 = vpop.f32.mrb[0].mxu0
  %490 = vmatprep.mubr.f32.mxu0 0.0
  %491 = vmatmul.mubr.f32.gmra.mrb[0].mxu0 %v361
  %v492 = vpop.f32.mrb[0].mxu0
  %v493 = vadd.f32 %v409, %v492
  %v494 = vpop.f32.mrb[0].mxu0
  %495 = vmatprep.mubr.f32.mxu0 0.0
  %496 = vmatmul.mubr.f32.gmra.mrb[0].mxu0 %v362
  %v497 = vpop.f32.mrb[0].mxu0
  %v498 = vadd.f32 %v409, %v497
  %v499 = vpop.f32.mrb[0].mxu0
  %500 = vmatprep.mubr.f32.mxu0 0.0
  %501 = vmatmul.mubr.f32.gmra.mrb[0].mxu0 %v363
  %v502 = vpop.f32.mrb[0].mxu0
  %v503 = vadd.f32 %v409, %v502
  %v504 = vpop.f32.mrb[0].mxu0
  %505 = vmatprep.mubr.f32.mxu0 0.0
  %506 = vmatmul.mubr.f32.gmra.mrb[0].mxu0 %v364
  %v507 = vpop.f32.mrb[0].mxu0
  %v508 = vadd.f32 %v409, %v507
  %v509 = vpop.f32.mrb[0].mxu0
  %510 = vmatprep.mubr.f32.mxu0 0.0
  %511 = vmatmul.mubr.f32.gmra.mrb[0].mxu0 %v365
  %v512 = vpop.f32.mrb[0].mxu0
  %v513 = vadd.f32 %v409, %v512
  %v514 = vpop.f32.mrb[0].mxu0
  %515 = vmatprep.mubr.f32.mxu0 0.0
  %516 = vmatmul.mubr.f32.gmra.mrb[0].mxu0 %v366
  %v517 = vpop.f32.mrb[0].mxu0
  %v518 = vadd.f32 %v409, %v517
  %v519 = vpop.f32.mrb[0].mxu0
  %520 = vmatprep.mubr.f32.mxu0 0.0
  %521 = vmatmul.mubr.f32.gmra.mrb[0].mxu0 %v367
  %v522 = vpop.f32.mrb[0].mxu0
  %v523 = vadd.f32 %v409, %v522
  %v524 = vpop.f32.mrb[0].mxu0
  %525 = vmatprep.mubr.f32.mxu0 0.0
  %526 = vmatmul.mubr.f32.gmra.mrb[0].mxu0 %v368
  %v527 = vpop.f32.mrb[0].mxu0
  %v528 = vadd.f32 %v409, %v527
  %v529 = vpop.f32.mrb[0].mxu0
  %530 = vmatprep.mubr.f32.mxu0 0.0
  %531 = vmatmul.mubr.f32.gmra.mrb[0].mxu0 %v369
  %v532 = vpop.f32.mrb[0].mxu0
  %v533 = vadd.f32 %v409, %v532
  %v534 = vpop.f32.mrb[0].mxu0
  %535 = vmatprep.mubr.f32.mxu0 0.0
  %536 = vmatmul.mubr.f32.gmra.mrb[0].mxu0 %v370
  %v537 = vpop.f32.mrb[0].mxu0
  %v538 = vadd.f32 %v409, %v537
  %v539 = vpop.f32.mrb[0].mxu0
  %540 = vmatprep.mubr.f32.mxu0 0.0
  %541 = vmatmul.mubr.f32.gmra.mrb[0].mxu0 %v371
  %v542 = vpop.f32.mrb[0].mxu0
  %v543 = vadd.f32 %v409, %v542
  %v544 = vpop.f32.mrb[0].mxu0
  %545 = vmatprep.mubr.f32.mxu0 0.0
  %546 = vmatmul.mubr.f32.gmra.mrb[0].mxu0 %v372
  %v547 = vpop.f32.mrb[0].mxu0
  %v548 = vadd.f32 %v409, %v547
  %v549 = vpop.f32.mrb[0].mxu0
  %550 = vmatprep.mubr.f32.mxu0 0.0
  %551 = vmatmul.mubr.f32.gmra.mrb[0].mxu0 %v373
  %v552 = vpop.f32.mrb[0].mxu0
  %v553 = vadd.f32 %v409, %v552
  %v554 = vpop.f32.mrb[0].mxu0
  %555 = vmatprep.mubr.f32.mxu0 0.0
  %556 = vmatmul.mubr.f32.gmra.mrb[0].mxu0 %v374
  %v557 = vpop.f32.mrb[0].mxu0
  %v558 = vadd.f32 %v409, %v557
  %v559 = vpop.f32.mrb[0].mxu0
  %560 = vmatprep.mubr.f32.mxu0 0.0
  %561 = vmatmul.mubr.f32.gmra.mrb[0].mxu0 %v375
  %v562 = vpop.f32.mrb[0].mxu0
  %v563 = vadd.f32 %v409, %v562
  %v564 = vpop.f32.mrb[0].mxu0
  %565 = vmatprep.mubr.f32.mxu0 0.0
  %566 = vmatmul.mubr.f32.gmra.mrb[0].mxu0 %v376
  %v567 = vpop.f32.mrb[0].mxu0
  %v568 = vadd.f32 %v409, %v567
  %v569 = vpop.f32.mrb[0].mxu0
  %570 = vmatprep.mubr.f32.mxu0 0.0
  %571 = vmatmul.mubr.f32.gmra.mrb[0].mxu0 %v377
  %v572 = vpop.f32.mrb[0].mxu0
  %v573 = vadd.f32 %v409, %v572
  %v574 = vpop.f32.mrb[0].mxu0
  %575 = vmatprep.mubr.f32.mxu0 0.0
  %576 = vmatmul.mubr.f32.gmra.mrb[0].mxu0 %v378
  %v577 = vpop.f32.mrb[0].mxu0
  %v578 = vadd.f32 %v409, %v577
  %v579 = vpop.f32.mrb[0].mxu0
  %580 = vmatprep.mubr.f32.mxu0 0.0
  %581 = vmatmul.mubr.f32.gmra.mrb[0].mxu0 %v379
  %v582 = vpop.f32.mrb[0].mxu0
  %v583 = vadd.f32 %v409, %v582
  %v584 = vpop.f32.mrb[0].mxu0
  %585 = vmatprep.mubr.f32.mxu0 0.0
  %586 = vmatmul.mubr.f32.gmra.mrb[0].mxu0 %v380
  %v587 = vpop.f32.mrb[0].mxu0
  %v588 = vadd.f32 %v409, %v587
  %v589 = vpop.f32.mrb[0].mxu0
  %590 = vmatprep.mubr.f32.mxu0 0.0
  %591 = vmatmul.mubr.f32.gmra.mrb[0].mxu0 %v381
  %v592 = vpop.f32.mrb[0].mxu0
  %v593 = vadd.f32 %v409, %v592
  %v594 = vpop.f32.mrb[0].mxu0
  %595 = vmatprep.mubr.f32.mxu0 0.0
  %596 = vmatmul.mubr.f32.gmra.mrb[0].mxu0 %v382
  %v597 = vpop.f32.mrb[0].mxu0
  %v598 = vadd.f32 %v409, %v597
  %v599 = vpop.f32.mrb[0].mxu0
  %600 = vmatprep.mubr.f32.mxu0 0.0
  %601 = vmatmul.mubr.f32.gmra.mrb[0].mxu0 %v383
  %v602 = vpop.f32.mrb[0].mxu0
  %v603 = vadd.f32 %v409, %v602
  %v604 = vpop.f32.mrb[0].mxu0
  %605 = vmatprep.mubr.f32.mxu0 0.0
  %606 = vmatmul.mubr.f32.gmra.mrb[0].mxu0 %v384
  %v607 = vpop.f32.mrb[0].mxu0
  %v608 = vadd.f32 %v409, %v607
  %v609 = vpop.f32.mrb[0].mxu0
  %610 = vmatprep.mubr.f32.mxu0 0.0
  %611 = vmatmul.mubr.f32.gmra.mrb[0].mxu0 %v385
  %v612 = vpop.f32.mrb[0].mxu0
  %v613 = vadd.f32 %v409, %v612
  %v614 = vpop.f32.mrb[0].mxu0
  %615 = vmatprep.mubr.f32.mxu0 0.0
  %616 = vmatmul.mubr.f32.gmra.mrb[0].mxu0 %v386
  %v617 = vpop.f32.mrb[0].mxu0
  %v618 = vadd.f32 %v409, %v617
  %v619 = vpop.f32.mrb[0].mxu0
  %620 = vmatprep.mubr.f32.mxu0 0.0
  %621 = vmatmul.mubr.f32.gmra.mrb[0].mxu0 %v387
  %v622 = vpop.f32.mrb[0].mxu0
  %v623 = vadd.f32 %v409, %v622
  %v624 = vpop.f32.mrb[0].mxu0
  %625 = vdwg.mxu0
  %626 = vst [vmem:[#allocation3] sm:$0xff] %v478
  %627 = vst [vmem:[#allocation3 + $0x8] sm:$0xff] %v483
  %628 = vst [vmem:[#allocation3 + $0x10] sm:$0xff] %v488
  %629 = vst [vmem:[#allocation3 + $0x18] sm:$0xff] %v493
  %630 = vst [vmem:[#allocation3 + $0x20] sm:$0xff] %v498
  %631 = vst [vmem:[#allocation3 + $0x28] sm:$0xff] %v503
  %632 = vst [vmem:[#allocation3 + $0x30] sm:$0xff] %v508
  %633 = vst [vmem:[#allocation3 + $0x38] sm:$0xff] %v513
  %634 = vst [vmem:[#allocation3 + $0x40] sm:$0xff] %v518
  %635 = vst [vmem:[#allocation3 + $0x48] sm:$0xff] %v523
  %636 = vst [vmem:[#allocation3 + $0x50] sm:$0xff] %v528
  %637 = vst [vmem:[#allocation3 + $0x58] sm:$0xff] %v533
  %638 = vst [vmem:[#allocation3 + $0x60] sm:$0xff] %v538
  %639 = vst [vmem:[#allocation3 + $0x68] sm:$0xff] %v543
  %640 = vst [vmem:[#allocation3 + $0x70] sm:$0xff] %v548
  %641 = vst [vmem:[#allocation3 + $0x78] sm:$0xff] %v553
  %642 = vst [vmem:[#allocation3 + $0x80] sm:$0xff] %v558
  %643 = vst [vmem:[#allocation3 + $0x88] sm:$0xff] %v563
  %644 = vst [vmem:[#allocation3 + $0x90] sm:$0xff] %v568
  %645 = vst [vmem:[#allocation3 + $0x98] sm:$0xff] %v573
  %646 = vst [vmem:[#allocation3 + $0xa0] sm:$0xff] %v578
  %647 = vst [vmem:[#allocation3 + $0xa8] sm:$0xff] %v583
  %648 = vst [vmem:[#allocation3 + $0xb0] sm:$0xff] %v588
  %649 = vst [vmem:[#allocation3 + $0xb8] sm:$0xff] %v593
  %650 = vst [vmem:[#allocation3 + $0xc0] sm:$0xff] %v598
  %651 = vst [vmem:[#allocation3 + $0xc8] sm:$0xff] %v603
  %652 = vst [vmem:[#allocation3 + $0xd0] sm:$0xff] %v608
  %653 = vst [vmem:[#allocation3 + $0xd8] sm:$0xff] %v613
  %654 = vst [vmem:[#allocation3 + $0xe0] sm:$0xff] %v618
  %655 = vst [vmem:[#allocation3 + $0xe8] sm:$0xff] %v623
  %v656 = vld [vmem:[#allocation3] sm:$0xff]
  %v657 = vadd.f32 %v656, 0.0
  %v658 = vsub.f32 %v657, %v118
  %v659 = vsub.f32 %v658, 1.0
  %vm660 = vcmp.gt.f32.partialorder %v659, 0.0
  %v661 = vsel %vm660, 1, 0
  %v662 = vcvt.s32.f32 %v661
  %663 = vst [vmem:[%s5] sm:$0xff] %v662
  %664 = vst [vmem:[%s6] sm:$0xff] %v658
  %v665 = vld [vmem:[#allocation3 + $0x8] sm:$0xff]
  %v666 = vmul.f32 %v658, 0.95
  %v667 = vadd.f32 %v666, %v665
  %v668 = vsub.f32 %v667, %v662
  %v669 = vsub.f32 %v668, 1.0
  %vm670 = vcmp.gt.f32.partialorder %v669, 0.0
  %v671 = vsel %vm670, 1, 0
  %v672 = vcvt.s32.f32 %v671
  %s673 = scalar_lea.vmem %s5, 8
  %674 = vst [vmem:[%s673] sm:$0xff] %v672
  %s675 = scalar_lea.vmem %s6, 8
  %676 = vst [vmem:[%s675] sm:$0xff] %v668
  %v677 = vld [vmem:[#allocation3 + $0x10] sm:$0xff]
  %v678 = vmul.f32 %v668, 0.95
  %v679 = vadd.f32 %v678, %v677
  %v680 = vsub.f32 %v679, %v672
  %v681 = vsub.f32 %v680, 1.0
  %vm682 = vcmp.gt.f32.partialorder %v681, 0.0
  %v683 = vsel %vm682, 1, 0
  %v684 = vcvt.s32.f32 %v683
  %s685 = scalar_lea.vmem %s5, 16
  %686 = vst [vmem:[%s685] sm:$0xff] %v684
  %s687 = scalar_lea.vmem %s6, 16
  %688 = vst [vmem:[%s687] sm:$0xff] %v680
  %v689 = vld [vmem:[#allocation3 + $0x18] sm:$0xff]
  %v690 = vmul.f32 %v680, 0.95
  %v691 = vadd.f32 %v690, %v689
  %v692 = vsub.f32 %v691, %v684
  %v693 = vsub.f32 %v692, 1.0
  %vm694 = vcmp.gt.f32.partialorder %v693, 0.0
  %v695 = vsel %vm694, 1, 0
  %v696 = vcvt.s32.f32 %v695
  %s697 = scalar_lea.vmem %s5, 24
  %698 = vst [vmem:[%s697] sm:$0xff] %v696
  %s699 = scalar_lea.vmem %s6, 24
  %700 = vst [vmem:[%s699] sm:$0xff] %v692
  %v701 = vld [vmem:[#allocation3 + $0x20] sm:$0xff]
  %v702 = vmul.f32 %v692, 0.95
  %v703 = vadd.f32 %v702, %v701
  %v704 = vsub.f32 %v703, %v696
  %v705 = vsub.f32 %v704, 1.0
  %vm706 = vcmp.gt.f32.partialorder %v705, 0.0
  %v707 = vsel %vm706, 1, 0
  %v708 = vcvt.s32.f32 %v707
  %s709 = scalar_lea.vmem %s5, 32
  %710 = vst [vmem:[%s709] sm:$0xff] %v708
  %s711 = scalar_lea.vmem %s6, 32
  %712 = vst [vmem:[%s711] sm:$0xff] %v704
  %v713 = vld [vmem:[#allocation3 + $0x28] sm:$0xff]
  %v714 = vmul.f32 %v704, 0.95
  %v715 = vadd.f32 %v714, %v713
  %v716 = vsub.f32 %v715, %v708
  %v717 = vsub.f32 %v716, 1.0
  %vm718 = vcmp.gt.f32.partialorder %v717, 0.0
  %v719 = vsel %vm718, 1, 0
  %v720 = vcvt.s32.f32 %v719
  %s721 = scalar_lea.vmem %s5, 40
  %722 = vst [vmem:[%s721] sm:$0xff] %v720
  %s723 = scalar_lea.vmem %s6, 40
  %724 = vst [vmem:[%s723] sm:$0xff] %v716
  %v725 = vld [vmem:[#allocation3 + $0x30] sm:$0xff]
  %v726 = vmul.f32 %v716, 0.95
  %v727 = vadd.f32 %v726, %v725
  %v728 = vsub.f32 %v727, %v720
  %v729 = vsub.f32 %v728, 1.0
  %vm730 = vcmp.gt.f32.partialorder %v729, 0.0
  %v731 = vsel %vm730, 1, 0
  %v732 = vcvt.s32.f32 %v731
  %s733 = scalar_lea.vmem %s5, 48
  %734 = vst [vmem:[%s733] sm:$0xff] %v732
  %s735 = scalar_lea.vmem %s6, 48
  %736 = vst [vmem:[%s735] sm:$0xff] %v728
  %v737 = vld [vmem:[#allocation3 + $0x38] sm:$0xff]
  %v738 = vmul.f32 %v728, 0.95
  %v739 = vadd.f32 %v738, %v737
  %v740 = vsub.f32 %v739, %v732
  %v741 = vsub.f32 %v740, 1.0
  %vm742 = vcmp.gt.f32.partialorder %v741, 0.0
  %v743 = vsel %vm742, 1, 0
  %v744 = vcvt.s32.f32 %v743
  %s745 = scalar_lea.vmem %s5, 56
  %746 = vst [vmem:[%s745] sm:$0xff] %v744
  %s747 = scalar_lea.vmem %s6, 56
  %748 = vst [vmem:[%s747] sm:$0xff] %v740
  %v749 = vld [vmem:[#allocation3 + $0x40] sm:$0xff]
  %v750 = vmul.f32 %v740, 0.95
  %v751 = vadd.f32 %v750, %v749
  %v752 = vsub.f32 %v751, %v744
  %v753 = vsub.f32 %v752, 1.0
  %vm754 = vcmp.gt.f32.partialorder %v753, 0.0
  %v755 = vsel %vm754, 1, 0
  %v756 = vcvt.s32.f32 %v755
  %s757 = scalar_lea.vmem %s5, 64
  %758 = vst [vmem:[%s757] sm:$0xff] %v756
  %s759 = scalar_lea.vmem %s6, 64
  %760 = vst [vmem:[%s759] sm:$0xff] %v752
  %v761 = vld [vmem:[#allocation3 + $0x48] sm:$0xff]
  %v762 = vmul.f32 %v752, 0.95
  %v763 = vadd.f32 %v762, %v761
  %v764 = vsub.f32 %v763, %v756
  %v765 = vsub.f32 %v764, 1.0
  %vm766 = vcmp.gt.f32.partialorder %v765, 0.0
  %v767 = vsel %vm766, 1, 0
  %v768 = vcvt.s32.f32 %v767
  %s769 = scalar_lea.vmem %s5, 72
  %770 = vst [vmem:[%s769] sm:$0xff] %v768
  %s771 = scalar_lea.vmem %s6, 72
  %772 = vst [vmem:[%s771] sm:$0xff] %v764
  %v773 = vld [vmem:[#allocation3 + $0x50] sm:$0xff]
  %v774 = vmul.f32 %v764, 0.95
  %v775 = vadd.f32 %v774, %v773
  %v776 = vsub.f32 %v775, %v768
  %v777 = vsub.f32 %v776, 1.0
  %vm778 = vcmp.gt.f32.partialorder %v777, 0.0
  %v779 = vsel %vm778, 1, 0
  %v780 = vcvt.s32.f32 %v779
  %s781 = scalar_lea.vmem %s5, 80
  %782 = vst [vmem:[%s781] sm:$0xff] %v780
  %s783 = scalar_lea.vmem %s6, 80
  %784 = vst [vmem:[%s783] sm:$0xff] %v776
  %v785 = vld [vmem:[#allocation3 + $0x58] sm:$0xff]
  %v786 = vmul.f32 %v776, 0.95
  %v787 = vadd.f32 %v786, %v785
  %v788 = vsub.f32 %v787, %v780
  %v789 = vsub.f32 %v788, 1.0
  %vm790 = vcmp.gt.f32.partialorder %v789, 0.0
  %v791 = vsel %vm790, 1, 0
  %v792 = vcvt.s32.f32 %v791
  %s793 = scalar_lea.vmem %s5, 88
  %794 = vst [vmem:[%s793] sm:$0xff] %v792
  %s795 = scalar_lea.vmem %s6, 88
  %796 = vst [vmem:[%s795] sm:$0xff] %v788
  %v797 = vld [vmem:[#allocation3 + $0x60] sm:$0xff]
  %v798 = vmul.f32 %v788, 0.95
  %v799 = vadd.f32 %v798, %v797
  %v800 = vsub.f32 %v799, %v792
  %v801 = vsub.f32 %v800, 1.0
  %vm802 = vcmp.gt.f32.partialorder %v801, 0.0
  %v803 = vsel %vm802, 1, 0
  %v804 = vcvt.s32.f32 %v803
  %s805 = scalar_lea.vmem %s5, 96
  %806 = vst [vmem:[%s805] sm:$0xff] %v804
  %s807 = scalar_lea.vmem %s6, 96
  %808 = vst [vmem:[%s807] sm:$0xff] %v800
  %v809 = vld [vmem:[#allocation3 + $0x68] sm:$0xff]
  %v810 = vmul.f32 %v800, 0.95
  %v811 = vadd.f32 %v810, %v809
  %v812 = vsub.f32 %v811, %v804
  %v813 = vsub.f32 %v812, 1.0
  %vm814 = vcmp.gt.f32.partialorder %v813, 0.0
  %v815 = vsel %vm814, 1, 0
  %v816 = vcvt.s32.f32 %v815
  %s817 = scalar_lea.vmem %s5, 104
  %818 = vst [vmem:[%s817] sm:$0xff] %v816
  %s819 = scalar_lea.vmem %s6, 104
  %820 = vst [vmem:[%s819] sm:$0xff] %v812
  %v821 = vld [vmem:[#allocation3 + $0x70] sm:$0xff]
  %v822 = vmul.f32 %v812, 0.95
  %v823 = vadd.f32 %v822, %v821
  %v824 = vsub.f32 %v823, %v816
  %v825 = vsub.f32 %v824, 1.0
  %vm826 = vcmp.gt.f32.partialorder %v825, 0.0
  %v827 = vsel %vm826, 1, 0
  %v828 = vcvt.s32.f32 %v827
  %s829 = scalar_lea.vmem %s5, 112
  %830 = vst [vmem:[%s829] sm:$0xff] %v828
  %s831 = scalar_lea.vmem %s6, 112
  %832 = vst [vmem:[%s831] sm:$0xff] %v824
  %v833 = vld [vmem:[#allocation3 + $0x78] sm:$0xff]
  %v834 = vmul.f32 %v824, 0.95
  %v835 = vadd.f32 %v834, %v833
  %v836 = vsub.f32 %v835, %v828
  %v837 = vsub.f32 %v836, 1.0
  %vm838 = vcmp.gt.f32.partialorder %v837, 0.0
  %v839 = vsel %vm838, 1, 0
  %v840 = vcvt.s32.f32 %v839
  %s841 = scalar_lea.vmem %s5, 120
  %842 = vst [vmem:[%s841] sm:$0xff] %v840
  %s843 = scalar_lea.vmem %s6, 120
  %844 = vst [vmem:[%s843] sm:$0xff] %v836
  %v845 = vld [vmem:[#allocation3 + $0x80] sm:$0xff]
  %v846 = vmul.f32 %v836, 0.95
  %v847 = vadd.f32 %v846, %v845
  %v848 = vsub.f32 %v847, %v840
  %v849 = vsub.f32 %v848, 1.0
  %vm850 = vcmp.gt.f32.partialorder %v849, 0.0
  %v851 = vsel %vm850, 1, 0
  %v852 = vcvt.s32.f32 %v851
  %s853 = scalar_lea.vmem %s5, 128
  %854 = vst [vmem:[%s853] sm:$0xff] %v852
  %s855 = scalar_lea.vmem %s6, 128
  %856 = vst [vmem:[%s855] sm:$0xff] %v848
  %v857 = vld [vmem:[#allocation3 + $0x88] sm:$0xff]
  %v858 = vmul.f32 %v848, 0.95
  %v859 = vadd.f32 %v858, %v857
  %v860 = vsub.f32 %v859, %v852
  %v861 = vsub.f32 %v860, 1.0
  %vm862 = vcmp.gt.f32.partialorder %v861, 0.0
  %v863 = vsel %vm862, 1, 0
  %v864 = vcvt.s32.f32 %v863
  %s865 = scalar_lea.vmem %s5, 136
  %866 = vst [vmem:[%s865] sm:$0xff] %v864
  %s867 = scalar_lea.vmem %s6, 136
  %868 = vst [vmem:[%s867] sm:$0xff] %v860
  %v869 = vld [vmem:[#allocation3 + $0x90] sm:$0xff]
  %v870 = vmul.f32 %v860, 0.95
  %v871 = vadd.f32 %v870, %v869
  %v872 = vsub.f32 %v871, %v864
  %v873 = vsub.f32 %v872, 1.0
  %vm874 = vcmp.gt.f32.partialorder %v873, 0.0
  %v875 = vsel %vm874, 1, 0
  %v876 = vcvt.s32.f32 %v875
  %s877 = scalar_lea.vmem %s5, 144
  %878 = vst [vmem:[%s877] sm:$0xff] %v876
  %s879 = scalar_lea.vmem %s6, 144
  %880 = vst [vmem:[%s879] sm:$0xff] %v872
  %v881 = vld [vmem:[#allocation3 + $0x98] sm:$0xff]
  %v882 = vmul.f32 %v872, 0.95
  %v883 = vadd.f32 %v882, %v881
  %v884 = vsub.f32 %v883, %v876
  %v885 = vsub.f32 %v884, 1.0
  %vm886 = vcmp.gt.f32.partialorder %v885, 0.0
  %v887 = vsel %vm886, 1, 0
  %v888 = vcvt.s32.f32 %v887
  %s889 = scalar_lea.vmem %s5, 152
  %890 = vst [vmem:[%s889] sm:$0xff] %v888
  %s891 = scalar_lea.vmem %s6, 152
  %892 = vst [vmem:[%s891] sm:$0xff] %v884
  %v893 = vld [vmem:[#allocation3 + $0xa0] sm:$0xff]
  %v894 = vmul.f32 %v884, 0.95
  %v895 = vadd.f32 %v894, %v893
  %v896 = vsub.f32 %v895, %v888
  %v897 = vsub.f32 %v896, 1.0
  %vm898 = vcmp.gt.f32.partialorder %v897, 0.0
  %v899 = vsel %vm898, 1, 0
  %v900 = vcvt.s32.f32 %v899
  %s901 = scalar_lea.vmem %s5, 160
  %902 = vst [vmem:[%s901] sm:$0xff] %v900
  %s903 = scalar_lea.vmem %s6, 160
  %904 = vst [vmem:[%s903] sm:$0xff] %v896
  %v905 = vld [vmem:[#allocation3 + $0xa8] sm:$0xff]
  %v906 = vmul.f32 %v896, 0.95
  %v907 = vadd.f32 %v906, %v905
  %v908 = vsub.f32 %v907, %v900
  %v909 = vsub.f32 %v908, 1.0
  %vm910 = vcmp.gt.f32.partialorder %v909, 0.0
  %v911 = vsel %vm910, 1, 0
  %v912 = vcvt.s32.f32 %v911
  %s913 = scalar_lea.vmem %s5, 168
  %914 = vst [vmem:[%s913] sm:$0xff] %v912
  %s915 = scalar_lea.vmem %s6, 168
  %916 = vst [vmem:[%s915] sm:$0xff] %v908
  %v917 = vld [vmem:[#allocation3 + $0xb0] sm:$0xff]
  %v918 = vmul.f32 %v908, 0.95
  %v919 = vadd.f32 %v918, %v917
  %v920 = vsub.f32 %v919, %v912
  %v921 = vsub.f32 %v920, 1.0
  %vm922 = vcmp.gt.f32.partialorder %v921, 0.0
  %v923 = vsel %vm922, 1, 0
  %v924 = vcvt.s32.f32 %v923
  %s925 = scalar_lea.vmem %s5, 176
  %926 = vst [vmem:[%s925] sm:$0xff] %v924
  %s927 = scalar_lea.vmem %s6, 176
  %928 = vst [vmem:[%s927] sm:$0xff] %v920
  %v929 = vld [vmem:[#allocation3 + $0xb8] sm:$0xff]
  %v930 = vmul.f32 %v920, 0.95
  %v931 = vadd.f32 %v930, %v929
  %v932 = vsub.f32 %v931, %v924
  %v933 = vsub.f32 %v932, 1.0
  %vm934 = vcmp.gt.f32.partialorder %v933, 0.0
  %v935 = vsel %vm934, 1, 0
  %v936 = vcvt.s32.f32 %v935
  %s937 = scalar_lea.vmem %s5, 184
  %938 = vst [vmem:[%s937] sm:$0xff] %v936
  %s939 = scalar_lea.vmem %s6, 184
  %940 = vst [vmem:[%s939] sm:$0xff] %v932
  %v941 = vld [vmem:[#allocation3 + $0xc0] sm:$0xff]
  %v942 = vmul.f32 %v932, 0.95
  %v943 = vadd.f32 %v942, %v941
  %v944 = vsub.f32 %v943, %v936
  %v945 = vsub.f32 %v944, 1.0
  %vm946 = vcmp.gt.f32.partialorder %v945, 0.0
  %v947 = vsel %vm946, 1, 0
  %v948 = vcvt.s32.f32 %v947
  %s949 = scalar_lea.vmem %s5, 192
  %950 = vst [vmem:[%s949] sm:$0xff] %v948
  %s951 = scalar_lea.vmem %s6, 192
  %952 = vst [vmem:[%s951] sm:$0xff] %v944
  %v953 = vld [vmem:[#allocation3 + $0xc8] sm:$0xff]
  %v954 = vmul.f32 %v944, 0.95
  %v955 = vadd.f32 %v954, %v953
  %v956 = vsub.f32 %v955, %v948
  %v957 = vsub.f32 %v956, 1.0
  %vm958 = vcmp.gt.f32.partialorder %v957, 0.0
  %v959 = vsel %vm958, 1, 0
  %v960 = vcvt.s32.f32 %v959
  %s961 = scalar_lea.vmem %s5, 200
  %962 = vst [vmem:[%s961] sm:$0xff] %v960
  %s963 = scalar_lea.vmem %s6, 200
  %964 = vst [vmem:[%s963] sm:$0xff] %v956
  %v965 = vld [vmem:[#allocation3 + $0xd0] sm:$0xff]
  %v966 = vmul.f32 %v956, 0.95
  %v967 = vadd.f32 %v966, %v965
  %v968 = vsub.f32 %v967, %v960
  %v969 = vsub.f32 %v968, 1.0
  %vm970 = vcmp.gt.f32.partialorder %v969, 0.0
  %v971 = vsel %vm970, 1, 0
  %v972 = vcvt.s32.f32 %v971
  %s973 = scalar_lea.vmem %s5, 208
  %974 = vst [vmem:[%s973] sm:$0xff] %v972
  %s975 = scalar_lea.vmem %s6, 208
  %976 = vst [vmem:[%s975] sm:$0xff] %v968
  %v977 = vld [vmem:[#allocation3 + $0xd8] sm:$0xff]
  %v978 = vmul.f32 %v968, 0.95
  %v979 = vadd.f32 %v978, %v977
  %v980 = vsub.f32 %v979, %v972
  %v981 = vsub.f32 %v980, 1.0
  %vm982 = vcmp.gt.f32.partialorder %v981, 0.0
  %v983 = vsel %vm982, 1, 0
  %v984 = vcvt.s32.f32 %v983
  %s985 = scalar_lea.vmem %s5, 216
  %986 = vst [vmem:[%s985] sm:$0xff] %v984
  %s987 = scalar_lea.vmem %s6, 216
  %988 = vst [vmem:[%s987] sm:$0xff] %v980
  %v989 = vld [vmem:[#allocation3 + $0xe0] sm:$0xff]
  %v990 = vmul.f32 %v980, 0.95
  %v991 = vadd.f32 %v990, %v989
  %v992 = vsub.f32 %v991, %v984
  %v993 = vsub.f32 %v992, 1.0
  %vm994 = vcmp.gt.f32.partialorder %v993, 0.0
  %v995 = vsel %vm994, 1, 0
  %v996 = vcvt.s32.f32 %v995
  %s997 = scalar_lea.vmem %s5, 224
  %998 = vst [vmem:[%s997] sm:$0xff] %v996
  %s999 = scalar_lea.vmem %s6, 224
  %1000 = vst [vmem:[%s999] sm:$0xff] %v992
  %v1001 = vld [vmem:[#allocation3 + $0xe8] sm:$0xff]
  %v1002 = vmul.f32 %v992, 0.95
  %v1003 = vadd.f32 %v1002, %v1001
  %v1004 = vsub.f32 %v1003, %v996
  %v1005 = vsub.f32 %v1004, 1.0
  %vm1006 = vcmp.gt.f32.partialorder %v1005, 0.0
  %v1007 = vsel %vm1006, 1, 0
  %v1008 = vcvt.s32.f32 %v1007
  %s1009 = scalar_lea.vmem %s5, 232
  %1010 = vst [vmem:[%s1009] sm:$0xff] %v1008
  %s1011 = scalar_lea.vmem %s6, 232
  %1012 = vst [vmem:[%s1011] sm:$0xff] %v1004
  // Predicated region
  $region22: #{net_forward.1} parent=0 // pred_check
    _
  $region23: #{net_forward.1} parent=0 // pred_check_branch
    %1014 = sbr.rel (0) target = $region25
  $region24: #{net_forward.1} parent=0 // pred_region
    _
  $region25: #{net_forward.1} parent=0 // pred_fallthru
    _
  // Predicated region
  $region26: #{net_forward.1} parent=0 // pred_check
    _
  $region27: #{net_forward.1} parent=0 // pred_check_branch
    %1016 = sbr.rel (0) target = $region29
  $region28: #{net_forward.1} parent=0 // pred_region
    _
  $region29: #{net_forward.1} parent=0 // pred_fallthru
    _
  // Predicated region
  $region30: #{net_forward.1} parent=0 // pred_check
    _
  $region31: #{net_forward.1} parent=0 // pred_check_branch
    %1018 = sbr.rel (0) target = $region33
  $region32: #{net_forward.1} parent=0 // pred_region
    _
  $region33: #{net_forward.1} parent=0 // pred_fallthru
    _
  // Predicated region
  $region34: #{net_forward.1} parent=0 // pred_check
    _
  $region35: #{net_forward.1} parent=0 // pred_check_branch
    %1020 = sbr.rel (0) target = $region37
  $region36: #{net_forward.1} parent=0 // pred_region
    _
  $region37: #{net_forward.1} parent=0 // pred_fallthru
    _

</llo_original>
